<compile_context>
chip_gen: v7x
topology: tpu7x:2x2x1
jax: 0.10.0
libtpu: 0.0.40
codegen_flags: <defaults>
</compile_context>

<pallas_src>
import math
import functools

import jax
import jax.numpy as jnp
from jax import lax
from jax.experimental import pallas as pl
from jax.experimental.pallas import tpu as pltpu  # noqa: F401  (kept for TPU backend)

EPS = 1e-5  # nn.LayerNorm default

_INV_SQRT2 = 0.7071067811865476

PARAM_ORDER = (
    "ln1_g", "ln1_b", "ln2_g", "ln2_b", "ln3_g", "ln3_b",
    "wqk1", "bqk1", "wv1", "bv1", "wo1", "bo1",
    "wq2", "bq2", "wk2", "bk2", "wv2", "bv2", "wo2", "bo2",
    "wf1", "bf1", "wf2", "bf2",
)


# ------------------------------ fused kernel -------------------------------- #

def _decoder_kernel(
    x_ref, enc_ref, pos_ref, qp_ref,
    ln1_g, ln1_b, ln2_g, ln2_b, ln3_g, ln3_b,
    wqk1, bqk1, wv1, bv1, wo1, bo1,
    wq2, bq2, wk2, bk2, wv2, bv2, wo2, bo2,
    wf1, bf1, wf2, bf2,
    o_ref,
    *, L, S, N, H, E,
):
    d = E // H
    scale = 1.0 / math.sqrt(d)

    x = x_ref[...]        # (N*L, E)   batch-major token slab
    qp = qp_ref[...]      # (N*L, E)
    mem = enc_ref[...]    # (N*S, E)
    posm = pos_ref[...]   # (N*S, E)

    def layernorm(t, g_ref, b_ref):
        mu = jnp.mean(t, axis=-1, keepdims=True)
        tc = t - mu
        var = jnp.mean(tc * tc, axis=-1, keepdims=True)
        return tc * lax.rsqrt(var + EPS) * g_ref[...] + b_ref[...]

    def mm(a, w_ref, b_ref):
        return (jnp.dot(a, w_ref[...], preferred_element_type=jnp.float32)
                + b_ref[...])

    def mha(q, k, v, q_len, kv_len, wo_ref, bo_ref):
        # q: (N*q_len, E) already scaled by 1/sqrt(d); k, v: (N*kv_len, E)
        wo = wo_ref[...]
        outs = []
        for n in range(N):                      # static unroll (tiny N)
            q_n = q[n * q_len:(n + 1) * q_len, :]
            k_n = k[n * kv_len:(n + 1) * kv_len, :]
            v_n = v[n * kv_len:(n + 1) * kv_len, :]
            acc = jnp.zeros((q_len, E), jnp.float32)
            for h in range(H):                  # static unroll (tiny H)
                q_nh = q_n[:, h * d:(h + 1) * d]
                k_nh = k_n[:, h * d:(h + 1) * d]
                v_nh = v_n[:, h * d:(h + 1) * d]
                # scores: contract last dims, no explicit transpose
                s = lax.dot_general(
                    q_nh, k_nh, (((1,), (1,)), ((), ())),
                    preferred_element_type=jnp.float32)
                m = jnp.max(s, axis=-1, keepdims=True)
                p = jnp.exp(s - m)
                denom = jnp.sum(p, axis=-1, keepdims=True)
                o_nh = jnp.dot(p, v_nh, preferred_element_type=jnp.float32) / denom
                # merge heads by folding head h's rows of the out-projection:
                # concat_h(o_h) @ Wo == sum_h o_h @ Wo[h*d:(h+1)*d, :]
                acc = acc + jnp.dot(o_nh, wo[h * d:(h + 1) * d, :],
                                    preferred_element_type=jnp.float32)
            outs.append(acc)
        return jnp.concatenate(outs, axis=0) + bo_ref[...]   # (N*q_len, E)

    # ---------------- block 1: self-attention ----------------
    xn = layernorm(x, ln1_g, ln1_b)
    qk_in = xn + qp
    qk = mm(qk_in, wqk1, bqk1)                  # fused Q/K projection (N*L, 2E)
    q1 = qk[:, :E] * scale
    k1 = qk[:, E:]
    v1 = mm(xn, wv1, bv1)
    x = x + mha(q1, k1, v1, L, L, wo1, bo1)

    # ---------------- block 2: cross-attention ----------------
    xn = layernorm(x, ln2_g, ln2_b)
    q2 = mm(xn + qp, wq2, bq2) * scale
    k2 = mm(mem + posm, wk2, bk2)
    v2 = mm(mem, wv2, bv2)
    x = x + mha(q2, k2, v2, L, S, wo2, bo2)

    # ---------------- block 3: MLP ----------------
    # TODO(synk): nn.Dropout() treated as identity (inference semantics).
    xn = layernorm(x, ln3_g, ln3_b)
    y = mm(xn, wf1, bf1)
    y = 0.5 * y * (1.0 + lax.erf(y * _INV_SQRT2))   # exact-erf GELU
    y = mm(y, wf2, bf2)
    o_ref[...] = x + y


# ------------------------------ wrapper -------------------------------------- #

@functools.partial(jax.jit, static_argnames=("num_heads",))
def decoder_forward(kparams, x, encoder_out, pos, query_pos, *, num_heads):
    L, N, E = x.shape
    S = encoder_out.shape[0]

    # batch-major token slabs so the kernel only needs aligned static row slices
    x2d = x.transpose(1, 0, 2).reshape(N * L, E)
    qp2d = query_pos.transpose(1, 0, 2).reshape(N * L, E)
    enc2d = encoder_out.transpose(1, 0, 2).reshape(N * S, E)
    pos2d = pos.transpose(1, 0, 2).reshape(N * S, E)

    kern = functools.partial(_decoder_kernel, L=L, S=S, N=N, H=num_heads, E=E)
    out2d = pl.pallas_call(
        kern,
        out_shape=jax.ShapeDtypeStruct((N * L, E), jnp.float32),
    )(x2d, enc2d, pos2d, qp2d, *[kparams[k] for k in PARAM_ORDER])

    return out2d.reshape(N, L, E).transpose(1, 0, 2)


# ------------------------------ parameters ----------------------------------- #

def init_params(key, E):
    """PyTorch-layout parameters (as nn.Module state_dict would provide)."""
    ks = jax.random.split(key, 12)

    def w(k, shape, scale=0.02):
        return scale * jax.random.normal(k, shape, dtype=jnp.float32)

    return {
        "ln1_g": jnp.ones((E,), jnp.float32), "ln1_b": jnp.zeros((E,), jnp.float32),
        "ln2_g": jnp.ones((E,), jnp.float32), "ln2_b": jnp.zeros((E,), jnp.float32),
        "ln3_g": jnp.ones((E,), jnp.float32), "ln3_b": jnp.zeros((E,), jnp.float32),
        "attn1": {"in_w": w(ks[0], (3 * E, E)), "in_b": w(ks[1], (3 * E,)),
                  "out_w": w(ks[2], (E, E)), "out_b": w(ks[3], (E,))},
        "attn2": {"in_w": w(ks[4], (3 * E, E)), "in_b": w(ks[5], (3 * E,)),
                  "out_w": w(ks[6], (E, E)), "out_b": w(ks[7], (E,))},
        "fc1_w": w(ks[8], (4 * E, E)), "fc1_b": w(ks[9], (4 * E,)),
        "fc2_w": w(ks[10], (E, 4 * E)), "fc2_b": w(ks[11], (E,)),
    }


def prepare_params(p, E):
    """Pre-transpose / pre-split PyTorch-layout weights ONCE into kernel layout."""
    a1, a2 = p["attn1"], p["attn2"]
    Wq1, Wk1, Wv1 = a1["in_w"][:E], a1["in_w"][E:2 * E], a1["in_w"][2 * E:]
    bq1, bk1, bv1 = a1["in_b"][:E], a1["in_b"][E:2 * E], a1["in_b"][2 * E:]
    Wq2, Wk2, Wv2 = a2["in_w"][:E], a2["in_w"][E:2 * E], a2["in_w"][2 * E:]
    bq2, bk2, bv2 = a2["in_b"][:E], a2["in_b"][E:2 * E], a2["in_b"][2 * E:]

    return {
        "ln1_g": p["ln1_g"].reshape(1, E), "ln1_b": p["ln1_b"].reshape(1, E),
        "ln2_g": p["ln2_g"].reshape(1, E), "ln2_b": p["ln2_b"].reshape(1, E),
        "ln3_g": p["ln3_g"].reshape(1, E), "ln3_b": p["ln3_b"].reshape(1, E),
        # self-attn: Q and K share their input -> fused (E, 2E) projection
        "wqk1": jnp.concatenate([Wq1.T, Wk1.T], axis=1),
        "bqk1": jnp.concatenate([bq1, bk1]).reshape(1, 2 * E),
        "wv1": Wv1.T, "bv1": bv1.reshape(1, E),
        "wo1": a1["out_w"].T, "bo1": a1["out_b"].reshape(1, E),
        # cross-attn
        "wq2": Wq2.T, "bq2": bq2.reshape(1, E),
        "wk2": Wk2.T, "bk2": bk2.reshape(1, E),
        "wv2": Wv2.T, "bv2": bv2.reshape(1, E),
        "wo2": a2["out_w"].T, "bo2": a2["out_b"].reshape(1, E),
        # MLP
        "wf1": p["fc1_w"].T, "bf1": p["fc1_b"].reshape(1, 4 * E),
        "wf2": p["fc2_w"].T, "bf2": p["fc2_b"].reshape(1, E),
    }


# ------------------------------ pure-JAX reference --------------------------- #

def reference_decoder(p, x, encoder_out, pos, query_pos, H):
    L, N, E = x.shape

    def ln(t, g, b):
        mu = t.mean(-1, keepdims=True)
        var = ((t - mu) ** 2).mean(-1, keepdims=True)
        return (t - mu) / jnp.sqrt(var + EPS) * g + b

    def mha(q, k, v, ap):
        Lq, Nq, Eq = q.shape
        Sk = k.shape[0]
        dh = Eq // H
        Wq, Wk, Wv = ap["in_w"][:Eq], ap["in_w"][Eq:2 * Eq], ap["in_w"][2 * Eq:]
        bq, bk, bv = ap["in_b"][:Eq], ap["in_b"][Eq:2 * Eq], ap["in_b"][2 * Eq:]
        qh = (q.reshape(Lq * Nq, Eq) @ Wq.T + bq).reshape(Lq, Nq, H, dh).transpose(1, 2, 0, 3)
        kh = (k.reshape(Sk * Nq, Eq) @ Wk.T + bk).reshape(Sk, Nq, H, dh).transpose(1, 2, 0, 3)
        vh = (v.reshape(Sk * Nq, Eq) @ Wv.T + bv).reshape(Sk, Nq, H, dh).transpose(1, 2, 0, 3)
        s = jnp.einsum("nhld,nhsd->nhls", qh, kh) / math.sqrt(dh)
        w = jax.nn.softmax(s, axis=-1)
        o = jnp.einsum("nhls,nhsd->nhld", w, vh)
        o = o.transpose(2, 0, 1, 3).reshape(Lq * Nq, Eq) @ ap["out_w"].T + ap["out_b"]
        return o.reshape(Lq, Nq, Eq)

    h = x
    xn = ln(x, p["ln1_g"], p["ln1_b"])
    x = h + mha(xn + query_pos, xn + query_pos, xn, p["attn1"])
    h = x
    xn = ln(x, p["ln2_g"], p["ln2_b"])
    x = h + mha(xn + query_pos, encoder_out + pos, encoder_out, p["attn2"])
    h = x
    xn = ln(x, p["ln3_g"], p["ln3_b"])
    y = xn.reshape(L * N, E) @ p["fc1_w"].T + p["fc1_b"]
    y = 0.5 * y * (1.0 + lax.erf(y * _INV_SQRT2))
    y = y @ p["fc2_w"].T + p["fc2_b"]
    return h + y.reshape(L, N, E)


# ------------------------------ main ------------------------------------------ #

if __name__ == "__main__":
    E, H = 32, 4          # embed_dim, num_heads
    L, S, N = 8, 16, 2    # target len, source len, batch

    key = jax.random.PRNGKey(0)
    kx, ke, kp, kq, kparam = jax.random.split(key, 5)

    x = jax.random.normal(kx, (L, N, E), dtype=jnp.float32)
    encoder_out = jax.random.normal(ke, (S, N, E), dtype=jnp.float32)
    pos = jax.random.normal(kp, (S, N, E), dtype=jnp.float32)
    query_pos = jax.random.normal(kq, (L, N, E), dtype=jnp.float32)

    pt_params = init_params(kparam, E)
    kparams = prepare_params(pt_params, E)

    out = decoder_forward(kparams, x, encoder_out, pos, query_pos, num_heads=H)
    out = jax.block_until_ready(out)
    assert out.shape == (L, N, E) and out.dtype == jnp.float32

    ref = reference_decoder(pt_params, x, encoder_out, pos, query_pos, H)
    max_err = float(jnp.max(jnp.abs(out - ref)))
    assert jnp.allclose(out, ref, atol=1e-3, rtol=1e-3), max_err

    print("KERNEL_OK")
</pallas_src>

<mosaic_0001>
module attributes {stable_mosaic.version = 11 : i64} {
  func.func @_decoder_kernel(%arg0: memref<16x32xf32, #tpu.memory_space<vmem>>, %arg1: memref<32x32xf32, #tpu.memory_space<vmem>>, %arg2: memref<32x32xf32, #tpu.memory_space<vmem>>, %arg3: memref<16x32xf32, #tpu.memory_space<vmem>>, %arg4: memref<1x32xf32, #tpu.memory_space<vmem>>, %arg5: memref<1x32xf32, #tpu.memory_space<vmem>>, %arg6: memref<1x32xf32, #tpu.memory_space<vmem>>, %arg7: memref<1x32xf32, #tpu.memory_space<vmem>>, %arg8: memref<1x32xf32, #tpu.memory_space<vmem>>, %arg9: memref<1x32xf32, #tpu.memory_space<vmem>>, %arg10: memref<32x64xf32, #tpu.memory_space<vmem>>, %arg11: memref<1x64xf32, #tpu.memory_space<vmem>>, %arg12: memref<32x32xf32, #tpu.memory_space<vmem>>, %arg13: memref<1x32xf32, #tpu.memory_space<vmem>>, %arg14: memref<32x32xf32, #tpu.memory_space<vmem>>, %arg15: memref<1x32xf32, #tpu.memory_space<vmem>>, %arg16: memref<32x32xf32, #tpu.memory_space<vmem>>, %arg17: memref<1x32xf32, #tpu.memory_space<vmem>>, %arg18: memref<32x32xf32, #tpu.memory_space<vmem>>, %arg19: memref<1x32xf32, #tpu.memory_space<vmem>>, %arg20: memref<32x32xf32, #tpu.memory_space<vmem>>, %arg21: memref<1x32xf32, #tpu.memory_space<vmem>>, %arg22: memref<32x32xf32, #tpu.memory_space<vmem>>, %arg23: memref<1x32xf32, #tpu.memory_space<vmem>>, %arg24: memref<32x128xf32, #tpu.memory_space<vmem>>, %arg25: memref<1x128xf32, #tpu.memory_space<vmem>>, %arg26: memref<128x32xf32, #tpu.memory_space<vmem>>, %arg27: memref<1x32xf32, #tpu.memory_space<vmem>>, %arg28: memref<16x32xf32, #tpu.memory_space<vmem>>) attributes {dimension_semantics = [], scalar_prefetch = 0 : i64, scratch_operands = 0 : i64, tpu.core_type = #tpu.core_type<tc>} {
    %c0 = arith.constant 0 : index
    %c0_0 = arith.constant 0 : index
    %0 = vector.load %arg0[%c0, %c0_0] : memref<16x32xf32, #tpu.memory_space<vmem>>, vector<16x32xf32>
    %c0_1 = arith.constant 0 : index
    %c0_2 = arith.constant 0 : index
    %1 = vector.load %arg3[%c0_1, %c0_2] : memref<16x32xf32, #tpu.memory_space<vmem>>, vector<16x32xf32>
    %c0_3 = arith.constant 0 : index
    %c0_4 = arith.constant 0 : index
    %2 = vector.load %arg1[%c0_3, %c0_4] : memref<32x32xf32, #tpu.memory_space<vmem>>, vector<32x32xf32>
    %c0_5 = arith.constant 0 : index
    %c0_6 = arith.constant 0 : index
    %3 = vector.load %arg2[%c0_5, %c0_6] : memref<32x32xf32, #tpu.memory_space<vmem>>, vector<32x32xf32>
    %cst = arith.constant dense<0.000000e+00> : vector<16xf32>
    %4 = vector.multi_reduction <add>, %0, %cst [1] : vector<16x32xf32> to vector<16xf32>
    %5 = vector.shape_cast %4 : vector<16xf32> to vector<16x1xf32>
    %cst_7 = arith.constant 3.200000e+01 : f32
    %6 = vector.broadcast %cst_7 : f32 to vector<16x1xf32>
    %7 = arith.divf %5, %6 : vector<16x1xf32>
    %8 = vector.broadcast %7 : vector<16x1xf32> to vector<16x32xf32>
    %9 = arith.subf %0, %8 : vector<16x32xf32>
    %10 = arith.mulf %9, %9 : vector<16x32xf32>
    %cst_8 = arith.constant dense<0.000000e+00> : vector<16xf32>
    %11 = vector.multi_reduction <add>, %10, %cst_8 [1] : vector<16x32xf32> to vector<16xf32>
    %12 = vector.shape_cast %11 : vector<16xf32> to vector<16x1xf32>
    %cst_9 = arith.constant 3.200000e+01 : f32
    %13 = vector.broadcast %cst_9 : f32 to vector<16x1xf32>
    %14 = arith.divf %12, %13 : vector<16x1xf32>
    %cst_10 = arith.constant 9.99999974E-6 : f32
    %15 = vector.broadcast %cst_10 : f32 to vector<16x1xf32>
    %16 = arith.addf %14, %15 : vector<16x1xf32>
    %17 = math.rsqrt %16 : vector<16x1xf32>
    %18 = vector.broadcast %17 : vector<16x1xf32> to vector<16x32xf32>
    %19 = arith.mulf %9, %18 : vector<16x32xf32>
    %c0_11 = arith.constant 0 : index
    %c0_12 = arith.constant 0 : index
    %20 = vector.load %arg4[%c0_11, %c0_12] : memref<1x32xf32, #tpu.memory_space<vmem>>, vector<1x32xf32>
    %21 = vector.broadcast %20 : vector<1x32xf32> to vector<16x32xf32>
    %22 = arith.mulf %19, %21 : vector<16x32xf32>
    %c0_13 = arith.constant 0 : index
    %c0_14 = arith.constant 0 : index
    %23 = vector.load %arg5[%c0_13, %c0_14] : memref<1x32xf32, #tpu.memory_space<vmem>>, vector<1x32xf32>
    %24 = vector.broadcast %23 : vector<1x32xf32> to vector<16x32xf32>
    %25 = arith.addf %22, %24 : vector<16x32xf32>
    %26 = arith.addf %25, %1 : vector<16x32xf32>
    %c0_15 = arith.constant 0 : index
    %c0_16 = arith.constant 0 : index
    %27 = vector.load %arg10[%c0_15, %c0_16] : memref<32x64xf32, #tpu.memory_space<vmem>>, vector<32x64xf32>
    %cst_17 = arith.constant dense<0.000000e+00> : vector<16x64xf32>
    %28 = tpu.matmul %26, %27, %cst_17 {dimension_numbers = #tpu.dot_dimension_numbers<[1], [0], [0], [1], [0, 0, 1, 1], [], []>} : vector<16x32xf32>, vector<32x64xf32>, vector<16x64xf32> -> vector<16x64xf32>
    %c0_18 = arith.constant 0 : index
    %c0_19 = arith.constant 0 : index
    %29 = vector.load %arg11[%c0_18, %c0_19] : memref<1x64xf32, #tpu.memory_space<vmem>>, vector<1x64xf32>
    %30 = vector.broadcast %29 : vector<1x64xf32> to vector<16x64xf32>
    %31 = arith.addf %28, %30 : vector<16x64xf32>
    %32 = vector.extract_strided_slice %31 {offsets = [0, 0], sizes = [16, 32], strides = [1, 1]} : vector<16x64xf32> to vector<16x32xf32>
    %cst_20 = arith.constant 0.353553385 : f32
    %33 = vector.broadcast %cst_20 : f32 to vector<16x32xf32>
    %34 = arith.mulf %32, %33 : vector<16x32xf32>
    %35 = vector.extract_strided_slice %31 {offsets = [0, 32], sizes = [16, 32], strides = [1, 1]} : vector<16x64xf32> to vector<16x32xf32>
    %c0_21 = arith.constant 0 : index
    %c0_22 = arith.constant 0 : index
    %36 = vector.load %arg12[%c0_21, %c0_22] : memref<32x32xf32, #tpu.memory_space<vmem>>, vector<32x32xf32>
    %cst_23 = arith.constant dense<0.000000e+00> : vector<16x32xf32>
    %37 = tpu.matmul %25, %36, %cst_23 {dimension_numbers = #tpu.dot_dimension_numbers<[1], [0], [0], [1], [0, 0, 1, 1], [], []>} : vector<16x32xf32>, vector<32x32xf32>, vector<16x32xf32> -> vector<16x32xf32>
    %c0_24 = arith.constant 0 : index
    %c0_25 = arith.constant 0 : index
    %38 = vector.load %arg13[%c0_24, %c0_25] : memref<1x32xf32, #tpu.memory_space<vmem>>, vector<1x32xf32>
    %39 = vector.broadcast %38 : vector<1x32xf32> to vector<16x32xf32>
    %40 = arith.addf %37, %39 : vector<16x32xf32>
    %c0_26 = arith.constant 0 : index
    %c0_27 = arith.constant 0 : index
    %41 = vector.load %arg14[%c0_26, %c0_27] : memref<32x32xf32, #tpu.memory_space<vmem>>, vector<32x32xf32>
    %42 = vector.extract_strided_slice %34 {offsets = [0, 0], sizes = [8, 32], strides = [1, 1]} : vector<16x32xf32> to vector<8x32xf32>
    %43 = vector.extract_strided_slice %35 {offsets = [0, 0], sizes = [8, 32], strides = [1, 1]} : vector<16x32xf32> to vector<8x32xf32>
    %44 = vector.extract_strided_slice %40 {offsets = [0, 0], sizes = [8, 32], strides = [1, 1]} : vector<16x32xf32> to vector<8x32xf32>
    %cst_28 = arith.constant 0.000000e+00 : f32
    %45 = vector.broadcast %cst_28 : f32 to vector<8x32xf32>
    %46 = vector.extract_strided_slice %42 {offsets = [0, 0], sizes = [8, 8], strides = [1, 1]} : vector<8x32xf32> to vector<8x8xf32>
    %47 = vector.extract_strided_slice %43 {offsets = [0, 0], sizes = [8, 8], strides = [1, 1]} : vector<8x32xf32> to vector<8x8xf32>
    %48 = vector.extract_strided_slice %44 {offsets = [0, 0], sizes = [8, 8], strides = [1, 1]} : vector<8x32xf32> to vector<8x8xf32>
    %cst_29 = arith.constant dense<0.000000e+00> : vector<8x8xf32>
    %49 = tpu.matmul %46, %47, %cst_29 {dimension_numbers = #tpu.dot_dimension_numbers<[1], [1], [0], [0], [0, 0, 1, 0], [], []>} : vector<8x8xf32>, vector<8x8xf32>, vector<8x8xf32> -> vector<8x8xf32>
    %cst_30 = arith.constant dense<0xFF800000> : vector<8xf32>
    %50 = vector.multi_reduction <maximumf>, %49, %cst_30 [1] : vector<8x8xf32> to vector<8xf32>
    %51 = vector.shape_cast %50 : vector<8xf32> to vector<8x1xf32>
    %52 = vector.broadcast %51 : vector<8x1xf32> to vector<8x8xf32>
    %53 = arith.subf %49, %52 : vector<8x8xf32>
    %54 = math.exp %53 : vector<8x8xf32>
    %cst_31 = arith.constant dense<0.000000e+00> : vector<8xf32>
    %55 = vector.multi_reduction <add>, %54, %cst_31 [1] : vector<8x8xf32> to vector<8xf32>
    %56 = vector.shape_cast %55 : vector<8xf32> to vector<8x1xf32>
    %cst_32 = arith.constant dense<0.000000e+00> : vector<8x8xf32>
    %57 = tpu.matmul %54, %48, %cst_32 {dimension_numbers = #tpu.dot_dimension_numbers<[1], [0], [0], [1], [0, 0, 1, 1], [], []>} : vector<8x8xf32>, vector<8x8xf32>, vector<8x8xf32> -> vector<8x8xf32>
    %58 = vector.broadcast %56 : vector<8x1xf32> to vector<8x8xf32>
    %59 = arith.divf %57, %58 : vector<8x8xf32>
    %60 = vector.extract_strided_slice %41 {offsets = [0, 0], sizes = [8, 32], strides = [1, 1]} : vector<32x32xf32> to vector<8x32xf32>
    %cst_33 = arith.constant dense<0.000000e+00> : vector<8x32xf32>
    %61 = tpu.matmul %59, %60, %cst_33 {dimension_numbers = #tpu.dot_dimension_numbers<[1], [0], [0], [1], [0, 0, 1, 1], [], []>} : vector<8x8xf32>, vector<8x32xf32>, vector<8x32xf32> -> vector<8x32xf32>
    %62 = arith.addf %45, %61 : vector<8x32xf32>
    %63 = vector.extract_strided_slice %42 {offsets = [0, 8], sizes = [8, 8], strides = [1, 1]} : vector<8x32xf32> to vector<8x8xf32>
    %64 = vector.extract_strided_slice %43 {offsets = [0, 8], sizes = [8, 8], strides = [1, 1]} : vector<8x32xf32> to vector<8x8xf32>
    %65 = vector.extract_strided_slice %44 {offsets = [0, 8], sizes = [8, 8], strides = [1, 1]} : vector<8x32xf32> to vector<8x8xf32>
    %cst_34 = arith.constant dense<0.000000e+00> : vector<8x8xf32>
    %66 = tpu.matmul %63, %64, %cst_34 {dimension_numbers = #tpu.dot_dimension_numbers<[1], [1], [0], [0], [0, 0, 1, 0], [], []>} : vector<8x8xf32>, vector<8x8xf32>, vector<8x8xf32> -> vector<8x8xf32>
    %cst_35 = arith.constant dense<0xFF800000> : vector<8xf32>
    %67 = vector.multi_reduction <maximumf>, %66, %cst_35 [1] : vector<8x8xf32> to vector<8xf32>
    %68 = vector.shape_cast %67 : vector<8xf32> to vector<8x1xf32>
    %69 = vector.broadcast %68 : vector<8x1xf32> to vector<8x8xf32>
    %70 = arith.subf %66, %69 : vector<8x8xf32>
    %71 = math.exp %70 : vector<8x8xf32>
    %cst_36 = arith.constant dense<0.000000e+00> : vector<8xf32>
    %72 = vector.multi_reduction <add>, %71, %cst_36 [1] : vector<8x8xf32> to vector<8xf32>
    %73 = vector.shape_cast %72 : vector<8xf32> to vector<8x1xf32>
    %cst_37 = arith.constant dense<0.000000e+00> : vector<8x8xf32>
    %74 = tpu.matmul %71, %65, %cst_37 {dimension_numbers = #tpu.dot_dimension_numbers<[1], [0], [0], [1], [0, 0, 1, 1], [], []>} : vector<8x8xf32>, vector<8x8xf32>, vector<8x8xf32> -> vector<8x8xf32>
    %75 = vector.broadcast %73 : vector<8x1xf32> to vector<8x8xf32>
    %76 = arith.divf %74, %75 : vector<8x8xf32>
    %77 = vector.extract_strided_slice %41 {offsets = [8, 0], sizes = [8, 32], strides = [1, 1]} : vector<32x32xf32> to vector<8x32xf32>
    %cst_38 = arith.constant dense<0.000000e+00> : vector<8x32xf32>
    %78 = tpu.matmul %76, %77, %cst_38 {dimension_numbers = #tpu.dot_dimension_numbers<[1], [0], [0], [1], [0, 0, 1, 1], [], []>} : vector<8x8xf32>, vector<8x32xf32>, vector<8x32xf32> -> vector<8x32xf32>
    %79 = arith.addf %62, %78 : vector<8x32xf32>
    %80 = vector.extract_strided_slice %42 {offsets = [0, 16], sizes = [8, 8], strides = [1, 1]} : vector<8x32xf32> to vector<8x8xf32>
    %81 = vector.extract_strided_slice %43 {offsets = [0, 16], sizes = [8, 8], strides = [1, 1]} : vector<8x32xf32> to vector<8x8xf32>
    %82 = vector.extract_strided_slice %44 {offsets = [0, 16], sizes = [8, 8], strides = [1, 1]} : vector<8x32xf32> to vector<8x8xf32>
    %cst_39 = arith.constant dense<0.000000e+00> : vector<8x8xf32>
    %83 = tpu.matmul %80, %81, %cst_39 {dimension_numbers = #tpu.dot_dimension_numbers<[1], [1], [0], [0], [0, 0, 1, 0], [], []>} : vector<8x8xf32>, vector<8x8xf32>, vector<8x8xf32> -> vector<8x8xf32>
    %cst_40 = arith.constant dense<0xFF800000> : vector<8xf32>
    %84 = vector.multi_reduction <maximumf>, %83, %cst_40 [1] : vector<8x8xf32> to vector<8xf32>
    %85 = vector.shape_cast %84 : vector<8xf32> to vector<8x1xf32>
    %86 = vector.broadcast %85 : vector<8x1xf32> to vector<8x8xf32>
    %87 = arith.subf %83, %86 : vector<8x8xf32>
    %88 = math.exp %87 : vector<8x8xf32>
    %cst_41 = arith.constant dense<0.000000e+00> : vector<8xf32>
    %89 = vector.multi_reduction <add>, %88, %cst_41 [1] : vector<8x8xf32> to vector<8xf32>
    %90 = vector.shape_cast %89 : vector<8xf32> to vector<8x1xf32>
    %cst_42 = arith.constant dense<0.000000e+00> : vector<8x8xf32>
    %91 = tpu.matmul %88, %82, %cst_42 {dimension_numbers = #tpu.dot_dimension_numbers<[1], [0], [0], [1], [0, 0, 1, 1], [], []>} : vector<8x8xf32>, vector<8x8xf32>, vector<8x8xf32> -> vector<8x8xf32>
    %92 = vector.broadcast %90 : vector<8x1xf32> to vector<8x8xf32>
    %93 = arith.divf %91, %92 : vector<8x8xf32>
    %94 = vector.extract_strided_slice %41 {offsets = [16, 0], sizes = [8, 32], strides = [1, 1]} : vector<32x32xf32> to vector<8x32xf32>
    %cst_43 = arith.constant dense<0.000000e+00> : vector<8x32xf32>
    %95 = tpu.matmul %93, %94, %cst_43 {dimension_numbers = #tpu.dot_dimension_numbers<[1], [0], [0], [1], [0, 0, 1, 1], [], []>} : vector<8x8xf32>, vector<8x32xf32>, vector<8x32xf32> -> vector<8x32xf32>
    %96 = arith.addf %79, %95 : vector<8x32xf32>
    %97 = vector.extract_strided_slice %42 {offsets = [0, 24], sizes = [8, 8], strides = [1, 1]} : vector<8x32xf32> to vector<8x8xf32>
    %98 = vector.extract_strided_slice %43 {offsets = [0, 24], sizes = [8, 8], strides = [1, 1]} : vector<8x32xf32> to vector<8x8xf32>
    %99 = vector.extract_strided_slice %44 {offsets = [0, 24], sizes = [8, 8], strides = [1, 1]} : vector<8x32xf32> to vector<8x8xf32>
    %cst_44 = arith.constant dense<0.000000e+00> : vector<8x8xf32>
    %100 = tpu.matmul %97, %98, %cst_44 {dimension_numbers = #tpu.dot_dimension_numbers<[1], [1], [0], [0], [0, 0, 1, 0], [], []>} : vector<8x8xf32>, vector<8x8xf32>, vector<8x8xf32> -> vector<8x8xf32>
    %cst_45 = arith.constant dense<0xFF800000> : vector<8xf32>
    %101 = vector.multi_reduction <maximumf>, %100, %cst_45 [1] : vector<8x8xf32> to vector<8xf32>
    %102 = vector.shape_cast %101 : vector<8xf32> to vector<8x1xf32>
    %103 = vector.broadcast %102 : vector<8x1xf32> to vector<8x8xf32>
    %104 = arith.subf %100, %103 : vector<8x8xf32>
    %105 = math.exp %104 : vector<8x8xf32>
    %cst_46 = arith.constant dense<0.000000e+00> : vector<8xf32>
    %106 = vector.multi_reduction <add>, %105, %cst_46 [1] : vector<8x8xf32> to vector<8xf32>
    %107 = vector.shape_cast %106 : vector<8xf32> to vector<8x1xf32>
    %cst_47 = arith.constant dense<0.000000e+00> : vector<8x8xf32>
    %108 = tpu.matmul %105, %99, %cst_47 {dimension_numbers = #tpu.dot_dimension_numbers<[1], [0], [0], [1], [0, 0, 1, 1], [], []>} : vector<8x8xf32>, vector<8x8xf32>, vector<8x8xf32> -> vector<8x8xf32>
    %109 = vector.broadcast %107 : vector<8x1xf32> to vector<8x8xf32>
    %110 = arith.divf %108, %109 : vector<8x8xf32>
    %111 = vector.extract_strided_slice %41 {offsets = [24, 0], sizes = [8, 32], strides = [1, 1]} : vector<32x32xf32> to vector<8x32xf32>
    %cst_48 = arith.constant dense<0.000000e+00> : vector<8x32xf32>
    %112 = tpu.matmul %110, %111, %cst_48 {dimension_numbers = #tpu.dot_dimension_numbers<[1], [0], [0], [1], [0, 0, 1, 1], [], []>} : vector<8x8xf32>, vector<8x32xf32>, vector<8x32xf32> -> vector<8x32xf32>
    %113 = arith.addf %96, %112 : vector<8x32xf32>
    %114 = vector.extract_strided_slice %34 {offsets = [8, 0], sizes = [8, 32], strides = [1, 1]} : vector<16x32xf32> to vector<8x32xf32>
    %115 = vector.extract_strided_slice %35 {offsets = [8, 0], sizes = [8, 32], strides = [1, 1]} : vector<16x32xf32> to vector<8x32xf32>
    %116 = vector.extract_strided_slice %40 {offsets = [8, 0], sizes = [8, 32], strides = [1, 1]} : vector<16x32xf32> to vector<8x32xf32>
    %cst_49 = arith.constant 0.000000e+00 : f32
    %117 = vector.broadcast %cst_49 : f32 to vector<8x32xf32>
    %118 = vector.extract_strided_slice %114 {offsets = [0, 0], sizes = [8, 8], strides = [1, 1]} : vector<8x32xf32> to vector<8x8xf32>
    %119 = vector.extract_strided_slice %115 {offsets = [0, 0], sizes = [8, 8], strides = [1, 1]} : vector<8x32xf32> to vector<8x8xf32>
    %120 = vector.extract_strided_slice %116 {offsets = [0, 0], sizes = [8, 8], strides = [1, 1]} : vector<8x32xf32> to vector<8x8xf32>
    %cst_50 = arith.constant dense<0.000000e+00> : vector<8x8xf32>
    %121 = tpu.matmul %118, %119, %cst_50 {dimension_numbers = #tpu.dot_dimension_numbers<[1], [1], [0], [0], [0, 0, 1, 0], [], []>} : vector<8x8xf32>, vector<8x8xf32>, vector<8x8xf32> -> vector<8x8xf32>
    %cst_51 = arith.constant dense<0xFF800000> : vector<8xf32>
    %122 = vector.multi_reduction <maximumf>, %121, %cst_51 [1] : vector<8x8xf32> to vector<8xf32>
    %123 = vector.shape_cast %122 : vector<8xf32> to vector<8x1xf32>
    %124 = vector.broadcast %123 : vector<8x1xf32> to vector<8x8xf32>
    %125 = arith.subf %121, %124 : vector<8x8xf32>
    %126 = math.exp %125 : vector<8x8xf32>
    %cst_52 = arith.constant dense<0.000000e+00> : vector<8xf32>
    %127 = vector.multi_reduction <add>, %126, %cst_52 [1] : vector<8x8xf32> to vector<8xf32>
    %128 = vector.shape_cast %127 : vector<8xf32> to vector<8x1xf32>
    %cst_53 = arith.constant dense<0.000000e+00> : vector<8x8xf32>
    %129 = tpu.matmul %126, %120, %cst_53 {dimension_numbers = #tpu.dot_dimension_numbers<[1], [0], [0], [1], [0, 0, 1, 1], [], []>} : vector<8x8xf32>, vector<8x8xf32>, vector<8x8xf32> -> vector<8x8xf32>
    %130 = vector.broadcast %128 : vector<8x1xf32> to vector<8x8xf32>
    %131 = arith.divf %129, %130 : vector<8x8xf32>
    %132 = vector.extract_strided_slice %41 {offsets = [0, 0], sizes = [8, 32], strides = [1, 1]} : vector<32x32xf32> to vector<8x32xf32>
    %cst_54 = arith.constant dense<0.000000e+00> : vector<8x32xf32>
    %133 = tpu.matmul %131, %132, %cst_54 {dimension_numbers = #tpu.dot_dimension_numbers<[1], [0], [0], [1], [0, 0, 1, 1], [], []>} : vector<8x8xf32>, vector<8x32xf32>, vector<8x32xf32> -> vector<8x32xf32>
    %134 = arith.addf %117, %133 : vector<8x32xf32>
    %135 = vector.extract_strided_slice %114 {offsets = [0, 8], sizes = [8, 8], strides = [1, 1]} : vector<8x32xf32> to vector<8x8xf32>
    %136 = vector.extract_strided_slice %115 {offsets = [0, 8], sizes = [8, 8], strides = [1, 1]} : vector<8x32xf32> to vector<8x8xf32>
    %137 = vector.extract_strided_slice %116 {offsets = [0, 8], sizes = [8, 8], strides = [1, 1]} : vector<8x32xf32> to vector<8x8xf32>
    %cst_55 = arith.constant dense<0.000000e+00> : vector<8x8xf32>
    %138 = tpu.matmul %135, %136, %cst_55 {dimension_numbers = #tpu.dot_dimension_numbers<[1], [1], [0], [0], [0, 0, 1, 0], [], []>} : vector<8x8xf32>, vector<8x8xf32>, vector<8x8xf32> -> vector<8x8xf32>
    %cst_56 = arith.constant dense<0xFF800000> : vector<8xf32>
    %139 = vector.multi_reduction <maximumf>, %138, %cst_56 [1] : vector<8x8xf32> to vector<8xf32>
    %140 = vector.shape_cast %139 : vector<8xf32> to vector<8x1xf32>
    %141 = vector.broadcast %140 : vector<8x1xf32> to vector<8x8xf32>
    %142 = arith.subf %138, %141 : vector<8x8xf32>
    %143 = math.exp %142 : vector<8x8xf32>
    %cst_57 = arith.constant dense<0.000000e+00> : vector<8xf32>
    %144 = vector.multi_reduction <add>, %143, %cst_57 [1] : vector<8x8xf32> to vector<8xf32>
    %145 = vector.shape_cast %144 : vector<8xf32> to vector<8x1xf32>
    %cst_58 = arith.constant dense<0.000000e+00> : vector<8x8xf32>
    %146 = tpu.matmul %143, %137, %cst_58 {dimension_numbers = #tpu.dot_dimension_numbers<[1], [0], [0], [1], [0, 0, 1, 1], [], []>} : vector<8x8xf32>, vector<8x8xf32>, vector<8x8xf32> -> vector<8x8xf32>
    %147 = vector.broadcast %145 : vector<8x1xf32> to vector<8x8xf32>
    %148 = arith.divf %146, %147 : vector<8x8xf32>
    %149 = vector.extract_strided_slice %41 {offsets = [8, 0], sizes = [8, 32], strides = [1, 1]} : vector<32x32xf32> to vector<8x32xf32>
    %cst_59 = arith.constant dense<0.000000e+00> : vector<8x32xf32>
    %150 = tpu.matmul %148, %149, %cst_59 {dimension_numbers = #tpu.dot_dimension_numbers<[1], [0], [0], [1], [0, 0, 1, 1], [], []>} : vector<8x8xf32>, vector<8x32xf32>, vector<8x32xf32> -> vector<8x32xf32>
    %151 = arith.addf %134, %150 : vector<8x32xf32>
    %152 = vector.extract_strided_slice %114 {offsets = [0, 16], sizes = [8, 8], strides = [1, 1]} : vector<8x32xf32> to vector<8x8xf32>
    %153 = vector.extract_strided_slice %115 {offsets = [0, 16], sizes = [8, 8], strides = [1, 1]} : vector<8x32xf32> to vector<8x8xf32>
    %154 = vector.extract_strided_slice %116 {offsets = [0, 16], sizes = [8, 8], strides = [1, 1]} : vector<8x32xf32> to vector<8x8xf32>
    %cst_60 = arith.constant dense<0.000000e+00> : vector<8x8xf32>
    %155 = tpu.matmul %152, %153, %cst_60 {dimension_numbers = #tpu.dot_dimension_numbers<[1], [1], [0], [0], [0, 0, 1, 0], [], []>} : vector<8x8xf32>, vector<8x8xf32>, vector<8x8xf32> -> vector<8x8xf32>
    %cst_61 = arith.constant dense<0xFF800000> : vector<8xf32>
    %156 = vector.multi_reduction <maximumf>, %155, %cst_61 [1] : vector<8x8xf32> to vector<8xf32>
    %157 = vector.shape_cast %156 : vector<8xf32> to vector<8x1xf32>
    %158 = vector.broadcast %157 : vector<8x1xf32> to vector<8x8xf32>
    %159 = arith.subf %155, %158 : vector<8x8xf32>
    %160 = math.exp %159 : vector<8x8xf32>
    %cst_62 = arith.constant dense<0.000000e+00> : vector<8xf32>
    %161 = vector.multi_reduction <add>, %160, %cst_62 [1] : vector<8x8xf32> to vector<8xf32>
    %162 = vector.shape_cast %161 : vector<8xf32> to vector<8x1xf32>
    %cst_63 = arith.constant dense<0.000000e+00> : vector<8x8xf32>
    %163 = tpu.matmul %160, %154, %cst_63 {dimension_numbers = #tpu.dot_dimension_numbers<[1], [0], [0], [1], [0, 0, 1, 1], [], []>} : vector<8x8xf32>, vector<8x8xf32>, vector<8x8xf32> -> vector<8x8xf32>
    %164 = vector.broadcast %162 : vector<8x1xf32> to vector<8x8xf32>
    %165 = arith.divf %163, %164 : vector<8x8xf32>
    %166 = vector.extract_strided_slice %41 {offsets = [16, 0], sizes = [8, 32], strides = [1, 1]} : vector<32x32xf32> to vector<8x32xf32>
    %cst_64 = arith.constant dense<0.000000e+00> : vector<8x32xf32>
    %167 = tpu.matmul %165, %166, %cst_64 {dimension_numbers = #tpu.dot_dimension_numbers<[1], [0], [0], [1], [0, 0, 1, 1], [], []>} : vector<8x8xf32>, vector<8x32xf32>, vector<8x32xf32> -> vector<8x32xf32>
    %168 = arith.addf %151, %167 : vector<8x32xf32>
    %169 = vector.extract_strided_slice %114 {offsets = [0, 24], sizes = [8, 8], strides = [1, 1]} : vector<8x32xf32> to vector<8x8xf32>
    %170 = vector.extract_strided_slice %115 {offsets = [0, 24], sizes = [8, 8], strides = [1, 1]} : vector<8x32xf32> to vector<8x8xf32>
    %171 = vector.extract_strided_slice %116 {offsets = [0, 24], sizes = [8, 8], strides = [1, 1]} : vector<8x32xf32> to vector<8x8xf32>
    %cst_65 = arith.constant dense<0.000000e+00> : vector<8x8xf32>
    %172 = tpu.matmul %169, %170, %cst_65 {dimension_numbers = #tpu.dot_dimension_numbers<[1], [1], [0], [0], [0, 0, 1, 0], [], []>} : vector<8x8xf32>, vector<8x8xf32>, vector<8x8xf32> -> vector<8x8xf32>
    %cst_66 = arith.constant dense<0xFF800000> : vector<8xf32>
    %173 = vector.multi_reduction <maximumf>, %172, %cst_66 [1] : vector<8x8xf32> to vector<8xf32>
    %174 = vector.shape_cast %173 : vector<8xf32> to vector<8x1xf32>
    %175 = vector.broadcast %174 : vector<8x1xf32> to vector<8x8xf32>
    %176 = arith.subf %172, %175 : vector<8x8xf32>
    %177 = math.exp %176 : vector<8x8xf32>
    %cst_67 = arith.constant dense<0.000000e+00> : vector<8xf32>
    %178 = vector.multi_reduction <add>, %177, %cst_67 [1] : vector<8x8xf32> to vector<8xf32>
    %179 = vector.shape_cast %178 : vector<8xf32> to vector<8x1xf32>
    %cst_68 = arith.constant dense<0.000000e+00> : vector<8x8xf32>
    %180 = tpu.matmul %177, %171, %cst_68 {dimension_numbers = #tpu.dot_dimension_numbers<[1], [0], [0], [1], [0, 0, 1, 1], [], []>} : vector<8x8xf32>, vector<8x8xf32>, vector<8x8xf32> -> vector<8x8xf32>
    %181 = vector.broadcast %179 : vector<8x1xf32> to vector<8x8xf32>
    %182 = arith.divf %180, %181 : vector<8x8xf32>
    %183 = vector.extract_strided_slice %41 {offsets = [24, 0], sizes = [8, 32], strides = [1, 1]} : vector<32x32xf32> to vector<8x32xf32>
    %cst_69 = arith.constant dense<0.000000e+00> : vector<8x32xf32>
    %184 = tpu.matmul %182, %183, %cst_69 {dimension_numbers = #tpu.dot_dimension_numbers<[1], [0], [0], [1], [0, 0, 1, 1], [], []>} : vector<8x8xf32>, vector<8x32xf32>, vector<8x32xf32> -> vector<8x32xf32>
    %185 = arith.addf %168, %184 : vector<8x32xf32>
    %186 = tpu.concatenate %113, %185 in 0 : vector<8x32xf32>, vector<8x32xf32> -> vector<16x32xf32>
    %c0_70 = arith.constant 0 : index
    %c0_71 = arith.constant 0 : index
    %187 = vector.load %arg15[%c0_70, %c0_71] : memref<1x32xf32, #tpu.memory_space<vmem>>, vector<1x32xf32>
    %188 = vector.broadcast %187 : vector<1x32xf32> to vector<16x32xf32>
    %189 = arith.addf %186, %188 : vector<16x32xf32>
    %190 = arith.addf %0, %189 : vector<16x32xf32>
    %cst_72 = arith.constant dense<0.000000e+00> : vector<16xf32>
    %191 = vector.multi_reduction <add>, %190, %cst_72 [1] : vector<16x32xf32> to vector<16xf32>
    %192 = vector.shape_cast %191 : vector<16xf32> to vector<16x1xf32>
    %cst_73 = arith.constant 3.200000e+01 : f32
    %193 = vector.broadcast %cst_73 : f32 to vector<16x1xf32>
    %194 = arith.divf %192, %193 : vector<16x1xf32>
    %195 = vector.broadcast %194 : vector<16x1xf32> to vector<16x32xf32>
    %196 = arith.subf %190, %195 : vector<16x32xf32>
    %197 = arith.mulf %196, %196 : vector<16x32xf32>
    %cst_74 = arith.constant dense<0.000000e+00> : vector<16xf32>
    %198 = vector.multi_reduction <add>, %197, %cst_74 [1] : vector<16x32xf32> to vector<16xf32>
    %199 = vector.shape_cast %198 : vector<16xf32> to vector<16x1xf32>
    %cst_75 = arith.constant 3.200000e+01 : f32
    %200 = vector.broadcast %cst_75 : f32 to vector<16x1xf32>
    %201 = arith.divf %199, %200 : vector<16x1xf32>
    %cst_76 = arith.constant 9.99999974E-6 : f32
    %202 = vector.broadcast %cst_76 : f32 to vector<16x1xf32>
    %203 = arith.addf %201, %202 : vector<16x1xf32>
    %204 = math.rsqrt %203 : vector<16x1xf32>
    %205 = vector.broadcast %204 : vector<16x1xf32> to vector<16x32xf32>
    %206 = arith.mulf %196, %205 : vector<16x32xf32>
    %c0_77 = arith.constant 0 : index
    %c0_78 = arith.constant 0 : index
    %207 = vector.load %arg6[%c0_77, %c0_78] : memref<1x32xf32, #tpu.memory_space<vmem>>, vector<1x32xf32>
    %208 = vector.broadcast %207 : vector<1x32xf32> to vector<16x32xf32>
    %209 = arith.mulf %206, %208 : vector<16x32xf32>
    %c0_79 = arith.constant 0 : index
    %c0_80 = arith.constant 0 : index
    %210 = vector.load %arg7[%c0_79, %c0_80] : memref<1x32xf32, #tpu.memory_space<vmem>>, vector<1x32xf32>
    %211 = vector.broadcast %210 : vector<1x32xf32> to vector<16x32xf32>
    %212 = arith.addf %209, %211 : vector<16x32xf32>
    %213 = arith.addf %212, %1 : vector<16x32xf32>
    %c0_81 = arith.constant 0 : index
    %c0_82 = arith.constant 0 : index
    %214 = vector.load %arg16[%c0_81, %c0_82] : memref<32x32xf32, #tpu.memory_space<vmem>>, vector<32x32xf32>
    %cst_83 = arith.constant dense<0.000000e+00> : vector<16x32xf32>
    %215 = tpu.matmul %213, %214, %cst_83 {dimension_numbers = #tpu.dot_dimension_numbers<[1], [0], [0], [1], [0, 0, 1, 1], [], []>} : vector<16x32xf32>, vector<32x32xf32>, vector<16x32xf32> -> vector<16x32xf32>
    %c0_84 = arith.constant 0 : index
    %c0_85 = arith.constant 0 : index
    %216 = vector.load %arg17[%c0_84, %c0_85] : memref<1x32xf32, #tpu.memory_space<vmem>>, vector<1x32xf32>
    %217 = vector.broadcast %216 : vector<1x32xf32> to vector<16x32xf32>
    %218 = arith.addf %215, %217 : vector<16x32xf32>
    %cst_86 = arith.constant 0.353553385 : f32
    %219 = vector.broadcast %cst_86 : f32 to vector<16x32xf32>
    %220 = arith.mulf %218, %219 : vector<16x32xf32>
    %221 = arith.addf %2, %3 : vector<32x32xf32>
    %c0_87 = arith.constant 0 : index
    %c0_88 = arith.constant 0 : index
    %222 = vector.load %arg18[%c0_87, %c0_88] : memref<32x32xf32, #tpu.memory_space<vmem>>, vector<32x32xf32>
    %cst_89 = arith.constant dense<0.000000e+00> : vector<32x32xf32>
    %223 = tpu.matmul %221, %222, %cst_89 {dimension_numbers = #tpu.dot_dimension_numbers<[1], [0], [0], [1], [0, 0, 1, 1], [], []>} : vector<32x32xf32>, vector<32x32xf32>, vector<32x32xf32> -> vector<32x32xf32>
    %c0_90 = arith.constant 0 : index
    %c0_91 = arith.constant 0 : index
    %224 = vector.load %arg19[%c0_90, %c0_91] : memref<1x32xf32, #tpu.memory_space<vmem>>, vector<1x32xf32>
    %225 = vector.broadcast %224 : vector<1x32xf32> to vector<32x32xf32>
    %226 = arith.addf %223, %225 : vector<32x32xf32>
    %c0_92 = arith.constant 0 : index
    %c0_93 = arith.constant 0 : index
    %227 = vector.load %arg20[%c0_92, %c0_93] : memref<32x32xf32, #tpu.memory_space<vmem>>, vector<32x32xf32>
    %cst_94 = arith.constant dense<0.000000e+00> : vector<32x32xf32>
    %228 = tpu.matmul %2, %227, %cst_94 {dimension_numbers = #tpu.dot_dimension_numbers<[1], [0], [0], [1], [0, 0, 1, 1], [], []>} : vector<32x32xf32>, vector<32x32xf32>, vector<32x32xf32> -> vector<32x32xf32>
    %c0_95 = arith.constant 0 : index
    %c0_96 = arith.constant 0 : index
    %229 = vector.load %arg21[%c0_95, %c0_96] : memref<1x32xf32, #tpu.memory_space<vmem>>, vector<1x32xf32>
    %230 = vector.broadcast %229 : vector<1x32xf32> to vector<32x32xf32>
    %231 = arith.addf %228, %230 : vector<32x32xf32>
    %c0_97 = arith.constant 0 : index
    %c0_98 = arith.constant 0 : index
    %232 = vector.load %arg22[%c0_97, %c0_98] : memref<32x32xf32, #tpu.memory_space<vmem>>, vector<32x32xf32>
    %233 = vector.extract_strided_slice %220 {offsets = [0, 0], sizes = [8, 32], strides = [1, 1]} : vector<16x32xf32> to vector<8x32xf32>
    %234 = vector.extract_strided_slice %226 {offsets = [0, 0], sizes = [16, 32], strides = [1, 1]} : vector<32x32xf32> to vector<16x32xf32>
    %235 = vector.extract_strided_slice %231 {offsets = [0, 0], sizes = [16, 32], strides = [1, 1]} : vector<32x32xf32> to vector<16x32xf32>
    %cst_99 = arith.constant 0.000000e+00 : f32
    %236 = vector.broadcast %cst_99 : f32 to vector<8x32xf32>
    %237 = vector.extract_strided_slice %233 {offsets = [0, 0], sizes = [8, 8], strides = [1, 1]} : vector<8x32xf32> to vector<8x8xf32>
    %238 = vector.extract_strided_slice %234 {offsets = [0, 0], sizes = [16, 8], strides = [1, 1]} : vector<16x32xf32> to vector<16x8xf32>
    %239 = vector.extract_strided_slice %235 {offsets = [0, 0], sizes = [16, 8], strides = [1, 1]} : vector<16x32xf32> to vector<16x8xf32>
    %cst_100 = arith.constant dense<0.000000e+00> : vector<8x16xf32>
    %240 = tpu.matmul %237, %238, %cst_100 {dimension_numbers = #tpu.dot_dimension_numbers<[1], [1], [0], [0], [0, 0, 1, 0], [], []>} : vector<8x8xf32>, vector<16x8xf32>, vector<8x16xf32> -> vector<8x16xf32>
    %cst_101 = arith.constant dense<0xFF800000> : vector<8xf32>
    %241 = vector.multi_reduction <maximumf>, %240, %cst_101 [1] : vector<8x16xf32> to vector<8xf32>
    %242 = vector.shape_cast %241 : vector<8xf32> to vector<8x1xf32>
    %243 = vector.broadcast %242 : vector<8x1xf32> to vector<8x16xf32>
    %244 = arith.subf %240, %243 : vector<8x16xf32>
    %245 = math.exp %244 : vector<8x16xf32>
    %cst_102 = arith.constant dense<0.000000e+00> : vector<8xf32>
    %246 = vector.multi_reduction <add>, %245, %cst_102 [1] : vector<8x16xf32> to vector<8xf32>
    %247 = vector.shape_cast %246 : vector<8xf32> to vector<8x1xf32>
    %cst_103 = arith.constant dense<0.000000e+00> : vector<8x8xf32>
    %248 = tpu.matmul %245, %239, %cst_103 {dimension_numbers = #tpu.dot_dimension_numbers<[1], [0], [0], [1], [0, 0, 1, 1], [], []>} : vector<8x16xf32>, vector<16x8xf32>, vector<8x8xf32> -> vector<8x8xf32>
    %249 = vector.broadcast %247 : vector<8x1xf32> to vector<8x8xf32>
    %250 = arith.divf %248, %249 : vector<8x8xf32>
    %251 = vector.extract_strided_slice %232 {offsets = [0, 0], sizes = [8, 32], strides = [1, 1]} : vector<32x32xf32> to vector<8x32xf32>
    %cst_104 = arith.constant dense<0.000000e+00> : vector<8x32xf32>
    %252 = tpu.matmul %250, %251, %cst_104 {dimension_numbers = #tpu.dot_dimension_numbers<[1], [0], [0], [1], [0, 0, 1, 1], [], []>} : vector<8x8xf32>, vector<8x32xf32>, vector<8x32xf32> -> vector<8x32xf32>
    %253 = arith.addf %236, %252 : vector<8x32xf32>
    %254 = vector.extract_strided_slice %233 {offsets = [0, 8], sizes = [8, 8], strides = [1, 1]} : vector<8x32xf32> to vector<8x8xf32>
    %255 = vector.extract_strided_slice %234 {offsets = [0, 8], sizes = [16, 8], strides = [1, 1]} : vector<16x32xf32> to vector<16x8xf32>
    %256 = vector.extract_strided_slice %235 {offsets = [0, 8], sizes = [16, 8], strides = [1, 1]} : vector<16x32xf32> to vector<16x8xf32>
    %cst_105 = arith.constant dense<0.000000e+00> : vector<8x16xf32>
    %257 = tpu.matmul %254, %255, %cst_105 {dimension_numbers = #tpu.dot_dimension_numbers<[1], [1], [0], [0], [0, 0, 1, 0], [], []>} : vector<8x8xf32>, vector<16x8xf32>, vector<8x16xf32> -> vector<8x16xf32>
    %cst_106 = arith.constant dense<0xFF800000> : vector<8xf32>
    %258 = vector.multi_reduction <maximumf>, %257, %cst_106 [1] : vector<8x16xf32> to vector<8xf32>
    %259 = vector.shape_cast %258 : vector<8xf32> to vector<8x1xf32>
    %260 = vector.broadcast %259 : vector<8x1xf32> to vector<8x16xf32>
    %261 = arith.subf %257, %260 : vector<8x16xf32>
    %262 = math.exp %261 : vector<8x16xf32>
    %cst_107 = arith.constant dense<0.000000e+00> : vector<8xf32>
    %263 = vector.multi_reduction <add>, %262, %cst_107 [1] : vector<8x16xf32> to vector<8xf32>
    %264 = vector.shape_cast %263 : vector<8xf32> to vector<8x1xf32>
    %cst_108 = arith.constant dense<0.000000e+00> : vector<8x8xf32>
    %265 = tpu.matmul %262, %256, %cst_108 {dimension_numbers = #tpu.dot_dimension_numbers<[1], [0], [0], [1], [0, 0, 1, 1], [], []>} : vector<8x16xf32>, vector<16x8xf32>, vector<8x8xf32> -> vector<8x8xf32>
    %266 = vector.broadcast %264 : vector<8x1xf32> to vector<8x8xf32>
    %267 = arith.divf %265, %266 : vector<8x8xf32>
    %268 = vector.extract_strided_slice %232 {offsets = [8, 0], sizes = [8, 32], strides = [1, 1]} : vector<32x32xf32> to vector<8x32xf32>
    %cst_109 = arith.constant dense<0.000000e+00> : vector<8x32xf32>
    %269 = tpu.matmul %267, %268, %cst_109 {dimension_numbers = #tpu.dot_dimension_numbers<[1], [0], [0], [1], [0, 0, 1, 1], [], []>} : vector<8x8xf32>, vector<8x32xf32>, vector<8x32xf32> -> vector<8x32xf32>
    %270 = arith.addf %253, %269 : vector<8x32xf32>
    %271 = vector.extract_strided_slice %233 {offsets = [0, 16], sizes = [8, 8], strides = [1, 1]} : vector<8x32xf32> to vector<8x8xf32>
    %272 = vector.extract_strided_slice %234 {offsets = [0, 16], sizes = [16, 8], strides = [1, 1]} : vector<16x32xf32> to vector<16x8xf32>
    %273 = vector.extract_strided_slice %235 {offsets = [0, 16], sizes = [16, 8], strides = [1, 1]} : vector<16x32xf32> to vector<16x8xf32>
    %cst_110 = arith.constant dense<0.000000e+00> : vector<8x16xf32>
    %274 = tpu.matmul %271, %272, %cst_110 {dimension_numbers = #tpu.dot_dimension_numbers<[1], [1], [0], [0], [0, 0, 1, 0], [], []>} : vector<8x8xf32>, vector<16x8xf32>, vector<8x16xf32> -> vector<8x16xf32>
    %cst_111 = arith.constant dense<0xFF800000> : vector<8xf32>
    %275 = vector.multi_reduction <maximumf>, %274, %cst_111 [1] : vector<8x16xf32> to vector<8xf32>
    %276 = vector.shape_cast %275 : vector<8xf32> to vector<8x1xf32>
    %277 = vector.broadcast %276 : vector<8x1xf32> to vector<8x16xf32>
    %278 = arith.subf %274, %277 : vector<8x16xf32>
    %279 = math.exp %278 : vector<8x16xf32>
    %cst_112 = arith.constant dense<0.000000e+00> : vector<8xf32>
    %280 = vector.multi_reduction <add>, %279, %cst_112 [1] : vector<8x16xf32> to vector<8xf32>
    %281 = vector.shape_cast %280 : vector<8xf32> to vector<8x1xf32>
    %cst_113 = arith.constant dense<0.000000e+00> : vector<8x8xf32>
    %282 = tpu.matmul %279, %273, %cst_113 {dimension_numbers = #tpu.dot_dimension_numbers<[1], [0], [0], [1], [0, 0, 1, 1], [], []>} : vector<8x16xf32>, vector<16x8xf32>, vector<8x8xf32> -> vector<8x8xf32>
    %283 = vector.broadcast %281 : vector<8x1xf32> to vector<8x8xf32>
    %284 = arith.divf %282, %283 : vector<8x8xf32>
    %285 = vector.extract_strided_slice %232 {offsets = [16, 0], sizes = [8, 32], strides = [1, 1]} : vector<32x32xf32> to vector<8x32xf32>
    %cst_114 = arith.constant dense<0.000000e+00> : vector<8x32xf32>
    %286 = tpu.matmul %284, %285, %cst_114 {dimension_numbers = #tpu.dot_dimension_numbers<[1], [0], [0], [1], [0, 0, 1, 1], [], []>} : vector<8x8xf32>, vector<8x32xf32>, vector<8x32xf32> -> vector<8x32xf32>
    %287 = arith.addf %270, %286 : vector<8x32xf32>
    %288 = vector.extract_strided_slice %233 {offsets = [0, 24], sizes = [8, 8], strides = [1, 1]} : vector<8x32xf32> to vector<8x8xf32>
    %289 = vector.extract_strided_slice %234 {offsets = [0, 24], sizes = [16, 8], strides = [1, 1]} : vector<16x32xf32> to vector<16x8xf32>
    %290 = vector.extract_strided_slice %235 {offsets = [0, 24], sizes = [16, 8], strides = [1, 1]} : vector<16x32xf32> to vector<16x8xf32>
    %cst_115 = arith.constant dense<0.000000e+00> : vector<8x16xf32>
    %291 = tpu.matmul %288, %289, %cst_115 {dimension_numbers = #tpu.dot_dimension_numbers<[1], [1], [0], [0], [0, 0, 1, 0], [], []>} : vector<8x8xf32>, vector<16x8xf32>, vector<8x16xf32> -> vector<8x16xf32>
    %cst_116 = arith.constant dense<0xFF800000> : vector<8xf32>
    %292 = vector.multi_reduction <maximumf>, %291, %cst_116 [1] : vector<8x16xf32> to vector<8xf32>
    %293 = vector.shape_cast %292 : vector<8xf32> to vector<8x1xf32>
    %294 = vector.broadcast %293 : vector<8x1xf32> to vector<8x16xf32>
    %295 = arith.subf %291, %294 : vector<8x16xf32>
    %296 = math.exp %295 : vector<8x16xf32>
    %cst_117 = arith.constant dense<0.000000e+00> : vector<8xf32>
    %297 = vector.multi_reduction <add>, %296, %cst_117 [1] : vector<8x16xf32> to vector<8xf32>
    %298 = vector.shape_cast %297 : vector<8xf32> to vector<8x1xf32>
    %cst_118 = arith.constant dense<0.000000e+00> : vector<8x8xf32>
    %299 = tpu.matmul %296, %290, %cst_118 {dimension_numbers = #tpu.dot_dimension_numbers<[1], [0], [0], [1], [0, 0, 1, 1], [], []>} : vector<8x16xf32>, vector<16x8xf32>, vector<8x8xf32> -> vector<8x8xf32>
    %300 = vector.broadcast %298 : vector<8x1xf32> to vector<8x8xf32>
    %301 = arith.divf %299, %300 : vector<8x8xf32>
    %302 = vector.extract_strided_slice %232 {offsets = [24, 0], sizes = [8, 32], strides = [1, 1]} : vector<32x32xf32> to vector<8x32xf32>
    %cst_119 = arith.constant dense<0.000000e+00> : vector<8x32xf32>
    %303 = tpu.matmul %301, %302, %cst_119 {dimension_numbers = #tpu.dot_dimension_numbers<[1], [0], [0], [1], [0, 0, 1, 1], [], []>} : vector<8x8xf32>, vector<8x32xf32>, vector<8x32xf32> -> vector<8x32xf32>
    %304 = arith.addf %287, %303 : vector<8x32xf32>
    %305 = vector.extract_strided_slice %220 {offsets = [8, 0], sizes = [8, 32], strides = [1, 1]} : vector<16x32xf32> to vector<8x32xf32>
    %306 = vector.extract_strided_slice %226 {offsets = [16, 0], sizes = [16, 32], strides = [1, 1]} : vector<32x32xf32> to vector<16x32xf32>
    %307 = vector.extract_strided_slice %231 {offsets = [16, 0], sizes = [16, 32], strides = [1, 1]} : vector<32x32xf32> to vector<16x32xf32>
    %cst_120 = arith.constant 0.000000e+00 : f32
    %308 = vector.broadcast %cst_120 : f32 to vector<8x32xf32>
    %309 = vector.extract_strided_slice %305 {offsets = [0, 0], sizes = [8, 8], strides = [1, 1]} : vector<8x32xf32> to vector<8x8xf32>
    %310 = vector.extract_strided_slice %306 {offsets = [0, 0], sizes = [16, 8], strides = [1, 1]} : vector<16x32xf32> to vector<16x8xf32>
    %311 = vector.extract_strided_slice %307 {offsets = [0, 0], sizes = [16, 8], strides = [1, 1]} : vector<16x32xf32> to vector<16x8xf32>
    %cst_121 = arith.constant dense<0.000000e+00> : vector<8x16xf32>
    %312 = tpu.matmul %309, %310, %cst_121 {dimension_numbers = #tpu.dot_dimension_numbers<[1], [1], [0], [0], [0, 0, 1, 0], [], []>} : vector<8x8xf32>, vector<16x8xf32>, vector<8x16xf32> -> vector<8x16xf32>
    %cst_122 = arith.constant dense<0xFF800000> : vector<8xf32>
    %313 = vector.multi_reduction <maximumf>, %312, %cst_122 [1] : vector<8x16xf32> to vector<8xf32>
    %314 = vector.shape_cast %313 : vector<8xf32> to vector<8x1xf32>
    %315 = vector.broadcast %314 : vector<8x1xf32> to vector<8x16xf32>
    %316 = arith.subf %312, %315 : vector<8x16xf32>
    %317 = math.exp %316 : vector<8x16xf32>
    %cst_123 = arith.constant dense<0.000000e+00> : vector<8xf32>
    %318 = vector.multi_reduction <add>, %317, %cst_123 [1] : vector<8x16xf32> to vector<8xf32>
    %319 = vector.shape_cast %318 : vector<8xf32> to vector<8x1xf32>
    %cst_124 = arith.constant dense<0.000000e+00> : vector<8x8xf32>
    %320 = tpu.matmul %317, %311, %cst_124 {dimension_numbers = #tpu.dot_dimension_numbers<[1], [0], [0], [1], [0, 0, 1, 1], [], []>} : vector<8x16xf32>, vector<16x8xf32>, vector<8x8xf32> -> vector<8x8xf32>
    %321 = vector.broadcast %319 : vector<8x1xf32> to vector<8x8xf32>
    %322 = arith.divf %320, %321 : vector<8x8xf32>
    %323 = vector.extract_strided_slice %232 {offsets = [0, 0], sizes = [8, 32], strides = [1, 1]} : vector<32x32xf32> to vector<8x32xf32>
    %cst_125 = arith.constant dense<0.000000e+00> : vector<8x32xf32>
    %324 = tpu.matmul %322, %323, %cst_125 {dimension_numbers = #tpu.dot_dimension_numbers<[1], [0], [0], [1], [0, 0, 1, 1], [], []>} : vector<8x8xf32>, vector<8x32xf32>, vector<8x32xf32> -> vector<8x32xf32>
    %325 = arith.addf %308, %324 : vector<8x32xf32>
    %326 = vector.extract_strided_slice %305 {offsets = [0, 8], sizes = [8, 8], strides = [1, 1]} : vector<8x32xf32> to vector<8x8xf32>
    %327 = vector.extract_strided_slice %306 {offsets = [0, 8], sizes = [16, 8], strides = [1, 1]} : vector<16x32xf32> to vector<16x8xf32>
    %328 = vector.extract_strided_slice %307 {offsets = [0, 8], sizes = [16, 8], strides = [1, 1]} : vector<16x32xf32> to vector<16x8xf32>
    %cst_126 = arith.constant dense<0.000000e+00> : vector<8x16xf32>
    %329 = tpu.matmul %326, %327, %cst_126 {dimension_numbers = #tpu.dot_dimension_numbers<[1], [1], [0], [0], [0, 0, 1, 0], [], []>} : vector<8x8xf32>, vector<16x8xf32>, vector<8x16xf32> -> vector<8x16xf32>
    %cst_127 = arith.constant dense<0xFF800000> : vector<8xf32>
    %330 = vector.multi_reduction <maximumf>, %329, %cst_127 [1] : vector<8x16xf32> to vector<8xf32>
    %331 = vector.shape_cast %330 : vector<8xf32> to vector<8x1xf32>
    %332 = vector.broadcast %331 : vector<8x1xf32> to vector<8x16xf32>
    %333 = arith.subf %329, %332 : vector<8x16xf32>
    %334 = math.exp %333 : vector<8x16xf32>
    %cst_128 = arith.constant dense<0.000000e+00> : vector<8xf32>
    %335 = vector.multi_reduction <add>, %334, %cst_128 [1] : vector<8x16xf32> to vector<8xf32>
    %336 = vector.shape_cast %335 : vector<8xf32> to vector<8x1xf32>
    %cst_129 = arith.constant dense<0.000000e+00> : vector<8x8xf32>
    %337 = tpu.matmul %334, %328, %cst_129 {dimension_numbers = #tpu.dot_dimension_numbers<[1], [0], [0], [1], [0, 0, 1, 1], [], []>} : vector<8x16xf32>, vector<16x8xf32>, vector<8x8xf32> -> vector<8x8xf32>
    %338 = vector.broadcast %336 : vector<8x1xf32> to vector<8x8xf32>
    %339 = arith.divf %337, %338 : vector<8x8xf32>
    %340 = vector.extract_strided_slice %232 {offsets = [8, 0], sizes = [8, 32], strides = [1, 1]} : vector<32x32xf32> to vector<8x32xf32>
    %cst_130 = arith.constant dense<0.000000e+00> : vector<8x32xf32>
    %341 = tpu.matmul %339, %340, %cst_130 {dimension_numbers = #tpu.dot_dimension_numbers<[1], [0], [0], [1], [0, 0, 1, 1], [], []>} : vector<8x8xf32>, vector<8x32xf32>, vector<8x32xf32> -> vector<8x32xf32>
    %342 = arith.addf %325, %341 : vector<8x32xf32>
    %343 = vector.extract_strided_slice %305 {offsets = [0, 16], sizes = [8, 8], strides = [1, 1]} : vector<8x32xf32> to vector<8x8xf32>
    %344 = vector.extract_strided_slice %306 {offsets = [0, 16], sizes = [16, 8], strides = [1, 1]} : vector<16x32xf32> to vector<16x8xf32>
    %345 = vector.extract_strided_slice %307 {offsets = [0, 16], sizes = [16, 8], strides = [1, 1]} : vector<16x32xf32> to vector<16x8xf32>
    %cst_131 = arith.constant dense<0.000000e+00> : vector<8x16xf32>
    %346 = tpu.matmul %343, %344, %cst_131 {dimension_numbers = #tpu.dot_dimension_numbers<[1], [1], [0], [0], [0, 0, 1, 0], [], []>} : vector<8x8xf32>, vector<16x8xf32>, vector<8x16xf32> -> vector<8x16xf32>
    %cst_132 = arith.constant dense<0xFF800000> : vector<8xf32>
    %347 = vector.multi_reduction <maximumf>, %346, %cst_132 [1] : vector<8x16xf32> to vector<8xf32>
    %348 = vector.shape_cast %347 : vector<8xf32> to vector<8x1xf32>
    %349 = vector.broadcast %348 : vector<8x1xf32> to vector<8x16xf32>
    %350 = arith.subf %346, %349 : vector<8x16xf32>
    %351 = math.exp %350 : vector<8x16xf32>
    %cst_133 = arith.constant dense<0.000000e+00> : vector<8xf32>
    %352 = vector.multi_reduction <add>, %351, %cst_133 [1] : vector<8x16xf32> to vector<8xf32>
    %353 = vector.shape_cast %352 : vector<8xf32> to vector<8x1xf32>
    %cst_134 = arith.constant dense<0.000000e+00> : vector<8x8xf32>
    %354 = tpu.matmul %351, %345, %cst_134 {dimension_numbers = #tpu.dot_dimension_numbers<[1], [0], [0], [1], [0, 0, 1, 1], [], []>} : vector<8x16xf32>, vector<16x8xf32>, vector<8x8xf32> -> vector<8x8xf32>
    %355 = vector.broadcast %353 : vector<8x1xf32> to vector<8x8xf32>
    %356 = arith.divf %354, %355 : vector<8x8xf32>
    %357 = vector.extract_strided_slice %232 {offsets = [16, 0], sizes = [8, 32], strides = [1, 1]} : vector<32x32xf32> to vector<8x32xf32>
    %cst_135 = arith.constant dense<0.000000e+00> : vector<8x32xf32>
    %358 = tpu.matmul %356, %357, %cst_135 {dimension_numbers = #tpu.dot_dimension_numbers<[1], [0], [0], [1], [0, 0, 1, 1], [], []>} : vector<8x8xf32>, vector<8x32xf32>, vector<8x32xf32> -> vector<8x32xf32>
    %359 = arith.addf %342, %358 : vector<8x32xf32>
    %360 = vector.extract_strided_slice %305 {offsets = [0, 24], sizes = [8, 8], strides = [1, 1]} : vector<8x32xf32> to vector<8x8xf32>
    %361 = vector.extract_strided_slice %306 {offsets = [0, 24], sizes = [16, 8], strides = [1, 1]} : vector<16x32xf32> to vector<16x8xf32>
    %362 = vector.extract_strided_slice %307 {offsets = [0, 24], sizes = [16, 8], strides = [1, 1]} : vector<16x32xf32> to vector<16x8xf32>
    %cst_136 = arith.constant dense<0.000000e+00> : vector<8x16xf32>
    %363 = tpu.matmul %360, %361, %cst_136 {dimension_numbers = #tpu.dot_dimension_numbers<[1], [1], [0], [0], [0, 0, 1, 0], [], []>} : vector<8x8xf32>, vector<16x8xf32>, vector<8x16xf32> -> vector<8x16xf32>
    %cst_137 = arith.constant dense<0xFF800000> : vector<8xf32>
    %364 = vector.multi_reduction <maximumf>, %363, %cst_137 [1] : vector<8x16xf32> to vector<8xf32>
    %365 = vector.shape_cast %364 : vector<8xf32> to vector<8x1xf32>
    %366 = vector.broadcast %365 : vector<8x1xf32> to vector<8x16xf32>
    %367 = arith.subf %363, %366 : vector<8x16xf32>
    %368 = math.exp %367 : vector<8x16xf32>
    %cst_138 = arith.constant dense<0.000000e+00> : vector<8xf32>
    %369 = vector.multi_reduction <add>, %368, %cst_138 [1] : vector<8x16xf32> to vector<8xf32>
    %370 = vector.shape_cast %369 : vector<8xf32> to vector<8x1xf32>
    %cst_139 = arith.constant dense<0.000000e+00> : vector<8x8xf32>
    %371 = tpu.matmul %368, %362, %cst_139 {dimension_numbers = #tpu.dot_dimension_numbers<[1], [0], [0], [1], [0, 0, 1, 1], [], []>} : vector<8x16xf32>, vector<16x8xf32>, vector<8x8xf32> -> vector<8x8xf32>
    %372 = vector.broadcast %370 : vector<8x1xf32> to vector<8x8xf32>
    %373 = arith.divf %371, %372 : vector<8x8xf32>
    %374 = vector.extract_strided_slice %232 {offsets = [24, 0], sizes = [8, 32], strides = [1, 1]} : vector<32x32xf32> to vector<8x32xf32>
    %cst_140 = arith.constant dense<0.000000e+00> : vector<8x32xf32>
    %375 = tpu.matmul %373, %374, %cst_140 {dimension_numbers = #tpu.dot_dimension_numbers<[1], [0], [0], [1], [0, 0, 1, 1], [], []>} : vector<8x8xf32>, vector<8x32xf32>, vector<8x32xf32> -> vector<8x32xf32>
    %376 = arith.addf %359, %375 : vector<8x32xf32>
    %377 = tpu.concatenate %304, %376 in 0 : vector<8x32xf32>, vector<8x32xf32> -> vector<16x32xf32>
    %c0_141 = arith.constant 0 : index
    %c0_142 = arith.constant 0 : index
    %378 = vector.load %arg23[%c0_141, %c0_142] : memref<1x32xf32, #tpu.memory_space<vmem>>, vector<1x32xf32>
    %379 = vector.broadcast %378 : vector<1x32xf32> to vector<16x32xf32>
    %380 = arith.addf %377, %379 : vector<16x32xf32>
    %381 = arith.addf %190, %380 : vector<16x32xf32>
    %cst_143 = arith.constant dense<0.000000e+00> : vector<16xf32>
    %382 = vector.multi_reduction <add>, %381, %cst_143 [1] : vector<16x32xf32> to vector<16xf32>
    %383 = vector.shape_cast %382 : vector<16xf32> to vector<16x1xf32>
    %cst_144 = arith.constant 3.200000e+01 : f32
    %384 = vector.broadcast %cst_144 : f32 to vector<16x1xf32>
    %385 = arith.divf %383, %384 : vector<16x1xf32>
    %386 = vector.broadcast %385 : vector<16x1xf32> to vector<16x32xf32>
    %387 = arith.subf %381, %386 : vector<16x32xf32>
    %388 = arith.mulf %387, %387 : vector<16x32xf32>
    %cst_145 = arith.constant dense<0.000000e+00> : vector<16xf32>
    %389 = vector.multi_reduction <add>, %388, %cst_145 [1] : vector<16x32xf32> to vector<16xf32>
    %390 = vector.shape_cast %389 : vector<16xf32> to vector<16x1xf32>
    %cst_146 = arith.constant 3.200000e+01 : f32
    %391 = vector.broadcast %cst_146 : f32 to vector<16x1xf32>
    %392 = arith.divf %390, %391 : vector<16x1xf32>
    %cst_147 = arith.constant 9.99999974E-6 : f32
    %393 = vector.broadcast %cst_147 : f32 to vector<16x1xf32>
    %394 = arith.addf %392, %393 : vector<16x1xf32>
    %395 = math.rsqrt %394 : vector<16x1xf32>
    %396 = vector.broadcast %395 : vector<16x1xf32> to vector<16x32xf32>
    %397 = arith.mulf %387, %396 : vector<16x32xf32>
    %c0_148 = arith.constant 0 : index
    %c0_149 = arith.constant 0 : index
    %398 = vector.load %arg8[%c0_148, %c0_149] : memref<1x32xf32, #tpu.memory_space<vmem>>, vector<1x32xf32>
    %399 = vector.broadcast %398 : vector<1x32xf32> to vector<16x32xf32>
    %400 = arith.mulf %397, %399 : vector<16x32xf32>
    %c0_150 = arith.constant 0 : index
    %c0_151 = arith.constant 0 : index
    %401 = vector.load %arg9[%c0_150, %c0_151] : memref<1x32xf32, #tpu.memory_space<vmem>>, vector<1x32xf32>
    %402 = vector.broadcast %401 : vector<1x32xf32> to vector<16x32xf32>
    %403 = arith.addf %400, %402 : vector<16x32xf32>
    %c0_152 = arith.constant 0 : index
    %c0_153 = arith.constant 0 : index
    %404 = vector.load %arg24[%c0_152, %c0_153] : memref<32x128xf32, #tpu.memory_space<vmem>>, vector<32x128xf32>
    %cst_154 = arith.constant dense<0.000000e+00> : vector<16x128xf32>
    %405 = tpu.matmul %403, %404, %cst_154 {dimension_numbers = #tpu.dot_dimension_numbers<[1], [0], [0], [1], [0, 0, 1, 1], [], []>} : vector<16x32xf32>, vector<32x128xf32>, vector<16x128xf32> -> vector<16x128xf32>
    %c0_155 = arith.constant 0 : index
    %c0_156 = arith.constant 0 : index
    %406 = vector.load %arg25[%c0_155, %c0_156] : memref<1x128xf32, #tpu.memory_space<vmem>>, vector<1x128xf32>
    %407 = vector.broadcast %406 : vector<1x128xf32> to vector<16x128xf32>
    %408 = arith.addf %405, %407 : vector<16x128xf32>
    %cst_157 = arith.constant 5.000000e-01 : f32
    %409 = vector.broadcast %cst_157 : f32 to vector<16x128xf32>
    %410 = arith.mulf %409, %408 : vector<16x128xf32>
    %cst_158 = arith.constant 0.707106769 : f32
    %411 = vector.broadcast %cst_158 : f32 to vector<16x128xf32>
    %412 = arith.mulf %408, %411 : vector<16x128xf32>
    %413 = math.erf %412 : vector<16x128xf32>
    %cst_159 = arith.constant 1.000000e+00 : f32
    %414 = vector.broadcast %cst_159 : f32 to vector<16x128xf32>
    %415 = arith.addf %414, %413 : vector<16x128xf32>
    %416 = arith.mulf %410, %415 : vector<16x128xf32>
    %c0_160 = arith.constant 0 : index
    %c0_161 = arith.constant 0 : index
    %417 = vector.load %arg26[%c0_160, %c0_161] : memref<128x32xf32, #tpu.memory_space<vmem>>, vector<128x32xf32>
    %cst_162 = arith.constant dense<0.000000e+00> : vector<16x32xf32>
    %418 = tpu.matmul %416, %417, %cst_162 {dimension_numbers = #tpu.dot_dimension_numbers<[1], [0], [0], [1], [0, 0, 1, 1], [], []>} : vector<16x128xf32>, vector<128x32xf32>, vector<16x32xf32> -> vector<16x32xf32>
    %c0_163 = arith.constant 0 : index
    %c0_164 = arith.constant 0 : index
    %419 = vector.load %arg27[%c0_163, %c0_164] : memref<1x32xf32, #tpu.memory_space<vmem>>, vector<1x32xf32>
    %420 = vector.broadcast %419 : vector<1x32xf32> to vector<16x32xf32>
    %421 = arith.addf %418, %420 : vector<16x32xf32>
    %422 = arith.addf %381, %421 : vector<16x32xf32>
    %c0_165 = arith.constant 0 : index
    %c0_166 = arith.constant 0 : index
    %423 = vector.load %arg28[%c0_165, %c0_166] : memref<16x32xf32, #tpu.memory_space<vmem>>, vector<16x32xf32>
    tpu.vector_store %arg28[%c0_165, %c0_166], %422 {strides = array<i32>} : memref<16x32xf32, #tpu.memory_space<vmem>>, vector<16x32xf32>,
    return
  }
}

</mosaic_0001>

<llo_original>
// kernel: decoder_forward.1
$region0: #{decoder_forward.1}
  #allocation0 [shape = 'u32[]', space=smem, size = 0x4, offset = 0x4, fixed_abs, tag = 'smem constant byte address 0x4 - core index']
  #allocation1 [shape = 'u32[144,128]{1,0:T(1,128)}', space=vmem, size = 0x12000, scoped, tag = 'internal scratch']
  %s0 = inlined_call_operand.vmem [shape: f32[16,32], index: 0, kind: input, shape index: {}]
  %s1 = inlined_call_operand.vmem [shape: f32[32,32], index: 1, kind: input, shape index: {}]
  %s2 = inlined_call_operand.vmem [shape: f32[32,32], index: 2, kind: input, shape index: {}]
  %s3 = inlined_call_operand.vmem [shape: f32[16,32], index: 3, kind: input, shape index: {}]
  %s4 = inlined_call_operand.vmem [shape: f32[1,32], index: 4, kind: input, shape index: {}]
  %s5 = inlined_call_operand.vmem [shape: f32[1,32], index: 5, kind: input, shape index: {}]
  %s6 = inlined_call_operand.vmem [shape: f32[1,32], index: 6, kind: input, shape index: {}]
  %s7 = inlined_call_operand.vmem [shape: f32[1,32], index: 7, kind: input, shape index: {}]
  %s8 = inlined_call_operand.vmem [shape: f32[1,32], index: 8, kind: input, shape index: {}]
  %s9 = inlined_call_operand.vmem [shape: f32[1,32], index: 9, kind: input, shape index: {}]
  %s10 = inlined_call_operand.vmem [shape: f32[32,64], index: 10, kind: input, shape index: {}]
  %s11 = inlined_call_operand.vmem [shape: f32[1,64], index: 11, kind: input, shape index: {}]
  %s12 = inlined_call_operand.vmem [shape: f32[32,32], index: 12, kind: input, shape index: {}]
  %s13 = inlined_call_operand.vmem [shape: f32[1,32], index: 13, kind: input, shape index: {}]
  %s14 = inlined_call_operand.vmem [shape: f32[32,32], index: 14, kind: input, shape index: {}]
  %s15 = inlined_call_operand.vmem [shape: f32[1,32], index: 15, kind: input, shape index: {}]
  %s16 = inlined_call_operand.vmem [shape: f32[32,32], index: 16, kind: input, shape index: {}]
  %s17 = inlined_call_operand.vmem [shape: f32[1,32], index: 17, kind: input, shape index: {}]
  %s18 = inlined_call_operand.vmem [shape: f32[32,32], index: 18, kind: input, shape index: {}]
  %s19 = inlined_call_operand.vmem [shape: f32[1,32], index: 19, kind: input, shape index: {}]
  %s20 = inlined_call_operand.vmem [shape: f32[32,32], index: 20, kind: input, shape index: {}]
  %s21 = inlined_call_operand.vmem [shape: f32[1,32], index: 21, kind: input, shape index: {}]
  %s22 = inlined_call_operand.vmem [shape: f32[32,32], index: 22, kind: input, shape index: {}]
  %s23 = inlined_call_operand.vmem [shape: f32[1,32], index: 23, kind: input, shape index: {}]
  %s24 = inlined_call_operand.vmem [shape: f32[32,128], index: 24, kind: input, shape index: {}]
  %s25 = inlined_call_operand.vmem [shape: f32[1,128], index: 25, kind: input, shape index: {}]
  %s26 = inlined_call_operand.vmem [shape: f32[128,32], index: 26, kind: input, shape index: {}]
  %s27 = inlined_call_operand.vmem [shape: f32[1,32], index: 27, kind: input, shape index: {}]
  %s28 = inlined_call_operand.vmem [shape: f32[16,32], index: 28, kind: output, shape index: {}]
  %s29 = sld [smem:[#allocation0]]
  $region122: #{decoder_forward.1} parent=0
    _
  %s31 = ssub.s32 1, %s29
  %s32 = scalar_select 0, %s31, %s29
  // Predicated region
  $region2: #{decoder_forward.1} parent=0 // pred_check
    _
  $region3: #{decoder_forward.1} parent=0 // pred_check_branch
    %34 = sbr.rel (0) target = $region5
  $region4: #{decoder_forward.1} parent=0 // pred_region
    _
  $region5: #{decoder_forward.1} parent=0 // pred_fallthru
    _
  // Predicated region
  $region6: #{decoder_forward.1} parent=0 // pred_check
    _
  $region7: #{decoder_forward.1} parent=0 // pred_check_branch
    %36 = sbr.rel (0) target = $region9
  $region8: #{decoder_forward.1} parent=0 // pred_region
    _
  $region9: #{decoder_forward.1} parent=0 // pred_fallthru
    _
  // Predicated region
  $region10: #{decoder_forward.1} parent=0 // pred_check
    _
  $region11: #{decoder_forward.1} parent=0 // pred_check_branch
    %38 = sbr.rel (0) target = $region13
  $region12: #{decoder_forward.1} parent=0 // pred_region
    _
  $region13: #{decoder_forward.1} parent=0 // pred_fallthru
    _
  // Predicated region
  $region14: #{decoder_forward.1} parent=0 // pred_check
    _
  $region15: #{decoder_forward.1} parent=0 // pred_check_branch
    %40 = sbr.rel (0) target = $region17
  $region16: #{decoder_forward.1} parent=0 // pred_region
    _
  $region17: #{decoder_forward.1} parent=0 // pred_fallthru
    _
  // Predicated region
  $region18: #{decoder_forward.1} parent=0 // pred_check
    _
  $region19: #{decoder_forward.1} parent=0 // pred_check_branch
    %42 = sbr.rel (0) target = $region21
  $region20: #{decoder_forward.1} parent=0 // pred_region
    _
  $region21: #{decoder_forward.1} parent=0 // pred_fallthru
    _
  // Predicated region
  $region22: #{decoder_forward.1} parent=0 // pred_check
    _
  $region23: #{decoder_forward.1} parent=0 // pred_check_branch
    %44 = sbr.rel (0) target = $region25
  $region24: #{decoder_forward.1} parent=0 // pred_region
    _
  $region25: #{decoder_forward.1} parent=0 // pred_fallthru
    _
  // Predicated region
  $region26: #{decoder_forward.1} parent=0 // pred_check
    _
  $region27: #{decoder_forward.1} parent=0 // pred_check_branch
    %46 = sbr.rel (0) target = $region29
  $region28: #{decoder_forward.1} parent=0 // pred_region
    _
  $region29: #{decoder_forward.1} parent=0 // pred_fallthru
    _
  // Predicated region
  $region30: #{decoder_forward.1} parent=0 // pred_check
    _
  $region31: #{decoder_forward.1} parent=0 // pred_check_branch
    %48 = sbr.rel (0) target = $region33
  $region32: #{decoder_forward.1} parent=0 // pred_region
    _
  $region33: #{decoder_forward.1} parent=0 // pred_fallthru
    _
  // Predicated region
  $region34: #{decoder_forward.1} parent=0 // pred_check
    _
  $region35: #{decoder_forward.1} parent=0 // pred_check_branch
    %50 = sbr.rel (0) target = $region37
  $region36: #{decoder_forward.1} parent=0 // pred_region
    _
  $region37: #{decoder_forward.1} parent=0 // pred_fallthru
    _
  // Predicated region
  $region38: #{decoder_forward.1} parent=0 // pred_check
    _
  $region39: #{decoder_forward.1} parent=0 // pred_check_branch
    %52 = sbr.rel (0) target = $region41
  $region40: #{decoder_forward.1} parent=0 // pred_region
    _
  $region41: #{decoder_forward.1} parent=0 // pred_fallthru
    _
  // Predicated region
  $region42: #{decoder_forward.1} parent=0 // pred_check
    _
  $region43: #{decoder_forward.1} parent=0 // pred_check_branch
    %54 = sbr.rel (0) target = $region45
  $region44: #{decoder_forward.1} parent=0 // pred_region
    _
  $region45: #{decoder_forward.1} parent=0 // pred_fallthru
    _
  // Predicated region
  $region46: #{decoder_forward.1} parent=0 // pred_check
    _
  $region47: #{decoder_forward.1} parent=0 // pred_check_branch
    %56 = sbr.rel (0) target = $region49
  $region48: #{decoder_forward.1} parent=0 // pred_region
    _
  $region49: #{decoder_forward.1} parent=0 // pred_fallthru
    _
  // Predicated region
  $region50: #{decoder_forward.1} parent=0 // pred_check
    _
  $region51: #{decoder_forward.1} parent=0 // pred_check_branch
    %58 = sbr.rel (0) target = $region53
  $region52: #{decoder_forward.1} parent=0 // pred_region
    _
  $region53: #{decoder_forward.1} parent=0 // pred_fallthru
    _
  // Predicated region
  $region54: #{decoder_forward.1} parent=0 // pred_check
    _
  $region55: #{decoder_forward.1} parent=0 // pred_check_branch
    %60 = sbr.rel (0) target = $region57
  $region56: #{decoder_forward.1} parent=0 // pred_region
    _
  $region57: #{decoder_forward.1} parent=0 // pred_fallthru
    _
  // Predicated region
  $region58: #{decoder_forward.1} parent=0 // pred_check
    _
  $region59: #{decoder_forward.1} parent=0 // pred_check_branch
    %62 = sbr.rel (0) target = $region61
  $region60: #{decoder_forward.1} parent=0 // pred_region
    _
  $region61: #{decoder_forward.1} parent=0 // pred_fallthru
    _
  // Predicated region
  $region62: #{decoder_forward.1} parent=0 // pred_check
    _
  $region63: #{decoder_forward.1} parent=0 // pred_check_branch
    %64 = sbr.rel (0) target = $region65
  $region64: #{decoder_forward.1} parent=0 // pred_region
    _
  $region65: #{decoder_forward.1} parent=0 // pred_fallthru
    _
  // Predicated region
  $region66: #{decoder_forward.1} parent=0 // pred_check
    _
  $region67: #{decoder_forward.1} parent=0 // pred_check_branch
    %66 = sbr.rel (0) target = $region69
  $region68: #{decoder_forward.1} parent=0 // pred_region
    _
  $region69: #{decoder_forward.1} parent=0 // pred_fallthru
    _
  // Predicated region
  $region70: #{decoder_forward.1} parent=0 // pred_check
    _
  $region71: #{decoder_forward.1} parent=0 // pred_check_branch
    %68 = sbr.rel (0) target = $region73
  $region72: #{decoder_forward.1} parent=0 // pred_region
    _
  $region73: #{decoder_forward.1} parent=0 // pred_fallthru
    _
  // Predicated region
  $region74: #{decoder_forward.1} parent=0 // pred_check
    _
  $region75: #{decoder_forward.1} parent=0 // pred_check_branch
    %70 = sbr.rel (0) target = $region77
  $region76: #{decoder_forward.1} parent=0 // pred_region
    _
  $region77: #{decoder_forward.1} parent=0 // pred_fallthru
    _
  // Predicated region
  $region78: #{decoder_forward.1} parent=0 // pred_check
    _
  $region79: #{decoder_forward.1} parent=0 // pred_check_branch
    %72 = sbr.rel (0) target = $region81
  $region80: #{decoder_forward.1} parent=0 // pred_region
    _
  $region81: #{decoder_forward.1} parent=0 // pred_fallthru
    _
  // Predicated region
  $region82: #{decoder_forward.1} parent=0 // pred_check
    _
  $region83: #{decoder_forward.1} parent=0 // pred_check_branch
    %74 = sbr.rel (0) target = $region85
  $region84: #{decoder_forward.1} parent=0 // pred_region
    _
  $region85: #{decoder_forward.1} parent=0 // pred_fallthru
    _
  // Predicated region
  $region86: #{decoder_forward.1} parent=0 // pred_check
    _
  $region87: #{decoder_forward.1} parent=0 // pred_check_branch
    %76 = sbr.rel (0) target = $region89
  $region88: #{decoder_forward.1} parent=0 // pred_region
    _
  $region89: #{decoder_forward.1} parent=0 // pred_fallthru
    _
  // Predicated region
  $region90: #{decoder_forward.1} parent=0 // pred_check
    _
  $region91: #{decoder_forward.1} parent=0 // pred_check_branch
    %78 = sbr.rel (0) target = $region93
  $region92: #{decoder_forward.1} parent=0 // pred_region
    _
  $region93: #{decoder_forward.1} parent=0 // pred_fallthru
    _
  // Predicated region
  $region94: #{decoder_forward.1} parent=0 // pred_check
    _
  $region95: #{decoder_forward.1} parent=0 // pred_check_branch
    %80 = sbr.rel (0) target = $region97
  $region96: #{decoder_forward.1} parent=0 // pred_region
    _
  $region97: #{decoder_forward.1} parent=0 // pred_fallthru
    _
  // Predicated region
  $region98: #{decoder_forward.1} parent=0 // pred_check
    _
  $region99: #{decoder_forward.1} parent=0 // pred_check_branch
    %82 = sbr.rel (0) target = $region101
  $region100: #{decoder_forward.1} parent=0 // pred_region
    _
  $region101: #{decoder_forward.1} parent=0 // pred_fallthru
    _
  // Predicated region
  $region102: #{decoder_forward.1} parent=0 // pred_check
    _
  $region103: #{decoder_forward.1} parent=0 // pred_check_branch
    %84 = sbr.rel (0) target = $region105
  $region104: #{decoder_forward.1} parent=0 // pred_region
    _
  $region105: #{decoder_forward.1} parent=0 // pred_fallthru
    _
  // Predicated region
  $region106: #{decoder_forward.1} parent=0 // pred_check
    _
  $region107: #{decoder_forward.1} parent=0 // pred_check_branch
    %86 = sbr.rel (0) target = $region109
  $region108: #{decoder_forward.1} parent=0 // pred_region
    _
  $region109: #{decoder_forward.1} parent=0 // pred_fallthru
    _
  // Predicated region
  $region110: #{decoder_forward.1} parent=0 // pred_check
    _
  $region111: #{decoder_forward.1} parent=0 // pred_check_branch
    %88 = sbr.rel (0) target = $region113
  $region112: #{decoder_forward.1} parent=0 // pred_region
    _
  $region113: #{decoder_forward.1} parent=0 // pred_fallthru
    _
  %v89 = vld [vmem:[%s0] sm:$0xff]
  %v90 = vld [vmem:[%s0 + $0x8] sm:$0xff]
  %v91 = vld [vmem:[%s3] sm:$0xff]
  %v92 = vld [vmem:[%s3 + $0x8] sm:$0xff]
  %v93 = vld [vmem:[%s1] sm:$0xff]
  %v94 = vld [vmem:[%s1 + $0x8] sm:$0xff]
  %v95 = vld [vmem:[%s1 + $0x10] sm:$0xff]
  %v96 = vld [vmem:[%s1 + $0x18] sm:$0xff]
  %v97 = vld [vmem:[%s2] sm:$0xff]
  %v98 = vld [vmem:[%s2 + $0x8] sm:$0xff]
  %v99 = vld [vmem:[%s2 + $0x10] sm:$0xff]
  %v100 = vld [vmem:[%s2 + $0x18] sm:$0xff]
  %vm101 = vcmask 261120
  %v102 = vsel %vm101, %v89, 0.0
  %103 = vadd.xlane.f32.xlu0 %v102
  %v104 = vpop.xlane.xlu0 %103
  %v105 = vsel %vm101, %v90, 0.0
  %106 = vadd.xlane.f32.xlu0 %v105
  %v107 = vpop.xlane.xlu0 %106
  %v108 = vrcp.pop 32.0
  %v109 = vmul.f32 %v104, %v108
  %v110 = vmul.f32 %v107, %v108
  %v111 = vsub.f32 %v89, %v109
  %v112 = vsub.f32 %v90, %v110
  %v113 = vmul.f32 %v111, %v111
  %v114 = vmul.f32 %v112, %v112
  %v115 = vsel %vm101, %v113, 0.0
  %116 = vadd.xlane.f32.xlu0 %v115
  %v117 = vpop.xlane.xlu0 %116
  %v118 = vsel %vm101, %v114, 0.0
  %119 = vadd.xlane.f32.xlu0 %v118
  %v120 = vpop.xlane.xlu0 %119
  %v121 = vmul.f32 %v117, %v108
  %v122 = vmul.f32 %v120, %v108
  %v123 = vadd.f32 %v121, 1e-05
  %v124 = vadd.f32 %v122, 1e-05
  %v125 = vrsqrt.pop %v123
  %v126 = vrsqrt.pop %v124
  %v127 = vmul.f32 %v111, %v125
  %v128 = vmul.f32 %v112, %v126
  %v129 = vld [vmem:[%s4] sm:$0x1]
  %v131 = vlaneseq
  %v132 = vshrl.u32 %v131, 7
  %v133 = vsub.s32 0, %v132
  %v134 = vrot.slane %v129, %v133
  %v136 = vmul.f32 %v127, %v134
  %v137 = vmul.f32 %v128, %v134
  %v138 = vld [vmem:[%s5] sm:$0x1]
  %v140 = vlaneseq
  %v141 = vshrl.u32 %v140, 7
  %v142 = vsub.s32 0, %v141
  %v143 = vrot.slane %v138, %v142
  %v145 = vadd.f32 %v136, %v143
  %v146 = vadd.f32 %v137, %v143
  %v147 = vadd.f32 %v145, %v91
  %v148 = vadd.f32 %v146, %v92
  %v149 = vld [vmem:[%s10] sm:$0xff]
  %v150 = vld [vmem:[%s10 + $0x8] sm:$0xff]
  %v151 = vld [vmem:[%s10 + $0x10] sm:$0xff]
  %v152 = vld [vmem:[%s10 + $0x18] sm:$0xff]
  %v153 = vld [vmem:[%s11] sm:$0x1]
  %v155 = vlaneseq
  %v156 = vshrl.u32 %v155, 7
  %v157 = vsub.s32 0, %v156
  %v158 = vrot.slane %v153, %v157
  %v161 = vsel %vm101, %v147, 0
  %v164 = vsel %vm101, %v148, 0
  %166 = vmatprep.subr.mxu0 0.0
  %167 = vmatpush1.msra.mxu0 %v149
  %168 = vmatprep.subr.mxu0 0.0
  %169 = vmatpush1.msra.mxu0 %v150
  %170 = vmatprep.subr.mxu0 0.0
  %171 = vmatpush1.msra.mxu0 %v151
  %172 = vmatprep.subr.mxu0 0.0
  %173 = vmatpush1.msra.mxu0 %v152
  %174 = vmatprep.subr.mxu0 0.0
  %175 = vmatpush1.msra.mxu0 0.0
  %176 = vmatprep.subr.mxu0 0.0
  %177 = vmatpush1.msra.mxu0 0.0
  %178 = vmatprep.subr.mxu0 0.0
  %179 = vmatpush1.msra.mxu0 0.0
  %180 = vmatprep.subr.mxu0 0.0
  %181 = vmatpush1.msra.mxu0 0.0
  %182 = vmatprep.subr.mxu0 0.0
  %183 = vmatpush1.msra.mxu0 0.0
  %184 = vmatprep.subr.mxu0 0.0
  %185 = vmatpush1.msra.mxu0 0.0
  %186 = vmatprep.subr.mxu0 0.0
  %187 = vmatpush1.msra.mxu0 0.0
  %188 = vmatprep.subr.mxu0 0.0
  %189 = vmatpush1.msra.mxu0 0.0
  %190 = vmatprep.subr.mxu0 0.0
  %191 = vmatpush1.msra.mxu0 0.0
  %192 = vmatprep.subr.mxu0 0.0
  %193 = vmatpush1.msra.mxu0 0.0
  %194 = vmatprep.subr.mxu0 0.0
  %195 = vmatpush1.msra.mxu0 0.0
  %196 = vmatprep.subr.mxu0 0.0
  %197 = vmatpush1.msra.mxu0 0.0
  %198 = vmatprep.subr.mxu0 0.0
  %199 = vmatpush1.msra.mxu0 0.0
  %200 = vmatprep.subr.mxu0 0.0
  %201 = vmatpush1.msra.mxu0 0.0
  %202 = vmatprep.subr.mxu0 0.0
  %203 = vmatpush1.msra.mxu0 0.0
  %204 = vmatprep.subr.mxu0 0.0
  %205 = vmatpush1.msra.mxu0 0.0
  %206 = vmatprep.subr.mxu0 0.0
  %207 = vmatpush1.msra.mxu0 0.0
  %208 = vmatprep.subr.mxu0 0.0
  %209 = vmatpush1.msra.mxu0 0.0
  %210 = vmatprep.subr.mxu0 0.0
  %211 = vmatpush1.msra.mxu0 0.0
  %212 = vmatprep.subr.mxu0 0.0
  %213 = vmatpush1.msra.mxu0 0.0
  %214 = vmatprep.subr.mxu0 0.0
  %215 = vmatpush1.msra.mxu0 0.0
  %216 = vmatprep.subr.mxu0 0.0
  %217 = vmatpush1.msra.mxu0 0.0
  %218 = vmatprep.subr.mxu0 0.0
  %219 = vmatpush1.msra.mxu0 0.0
  %220 = vmatprep.subr.mxu0 0.0
  %221 = vmatpush1.msra.mxu0 0.0
  %222 = vmatprep.subr.mxu0 0.0
  %223 = vmatpush1.msra.mxu0 0.0
  %224 = vmatprep.subr.mxu0 0.0
  %225 = vmatpush1.msra.mxu0 0.0
  %226 = vmatprep.subr.mxu0 0.0
  %227 = vmatpush1.msra.mxu0 0.0
  %228 = vmatprep.subr.mxu0 0.0
  %229 = vmatpush1.msra.mxu0 0.0
  %230 = vmatprep.mubr.f32.mxu0 0.0
  %231 = vmatmul.mubr.f32.gmra.mrb[0].mxu0 %v161
  %v232 = vpop.f32.mrb[0].mxu0
  %v233 = vadd.f32 %v158, %v232
  %v234 = vpop.f32.mrb[0].mxu0
  %235 = vmatprep.mubr.f32.mxu0 0.0
  %236 = vmatmul.mubr.f32.gmra.mrb[0].mxu0 %v164
  %v237 = vpop.f32.mrb[0].mxu0
  %v238 = vadd.f32 %v158, %v237
  %v239 = vpop.f32.mrb[0].mxu0
  %240 = vdwg.mxu0
  %v241 = vmul.f32 %v233, 0.35355338
  %v242 = vmul.f32 %v238, 0.35355338
  %v243 = vld [vmem:[%s12] sm:$0xff]
  %v244 = vld [vmem:[%s12 + $0x8] sm:$0xff]
  %v245 = vld [vmem:[%s12 + $0x10] sm:$0xff]
  %v246 = vld [vmem:[%s12 + $0x18] sm:$0xff]
  %v247 = vld [vmem:[%s13] sm:$0x1]
  %v249 = vlaneseq
  %v250 = vshrl.u32 %v249, 7
  %v251 = vsub.s32 0, %v250
  %v252 = vrot.slane %v247, %v251
  %v255 = vsel %vm101, %v145, 0
  %v258 = vsel %vm101, %v146, 0
  %260 = vmatprep.subr.mxu0 0.0
  %261 = vmatpush1.msra.mxu0 %v243
  %262 = vmatprep.subr.mxu0 0.0
  %263 = vmatpush1.msra.mxu0 %v244
  %264 = vmatprep.subr.mxu0 0.0
  %265 = vmatpush1.msra.mxu0 %v245
  %266 = vmatprep.subr.mxu0 0.0
  %267 = vmatpush1.msra.mxu0 %v246
  %268 = vmatprep.subr.mxu0 0.0
  %269 = vmatpush1.msra.mxu0 0.0
  %270 = vmatprep.subr.mxu0 0.0
  %271 = vmatpush1.msra.mxu0 0.0
  %272 = vmatprep.subr.mxu0 0.0
  %273 = vmatpush1.msra.mxu0 0.0
  %274 = vmatprep.subr.mxu0 0.0
  %275 = vmatpush1.msra.mxu0 0.0
  %276 = vmatprep.subr.mxu0 0.0
  %277 = vmatpush1.msra.mxu0 0.0
  %278 = vmatprep.subr.mxu0 0.0
  %279 = vmatpush1.msra.mxu0 0.0
  %280 = vmatprep.subr.mxu0 0.0
  %281 = vmatpush1.msra.mxu0 0.0
  %282 = vmatprep.subr.mxu0 0.0
  %283 = vmatpush1.msra.mxu0 0.0
  %284 = vmatprep.subr.mxu0 0.0
  %285 = vmatpush1.msra.mxu0 0.0
  %286 = vmatprep.subr.mxu0 0.0
  %287 = vmatpush1.msra.mxu0 0.0
  %288 = vmatprep.subr.mxu0 0.0
  %289 = vmatpush1.msra.mxu0 0.0
  %290 = vmatprep.subr.mxu0 0.0
  %291 = vmatpush1.msra.mxu0 0.0
  %292 = vmatprep.subr.mxu0 0.0
  %293 = vmatpush1.msra.mxu0 0.0
  %294 = vmatprep.subr.mxu0 0.0
  %295 = vmatpush1.msra.mxu0 0.0
  %296 = vmatprep.subr.mxu0 0.0
  %297 = vmatpush1.msra.mxu0 0.0
  %298 = vmatprep.subr.mxu0 0.0
  %299 = vmatpush1.msra.mxu0 0.0
  %300 = vmatprep.subr.mxu0 0.0
  %301 = vmatpush1.msra.mxu0 0.0
  %302 = vmatprep.subr.mxu0 0.0
  %303 = vmatpush1.msra.mxu0 0.0
  %304 = vmatprep.subr.mxu0 0.0
  %305 = vmatpush1.msra.mxu0 0.0
  %306 = vmatprep.subr.mxu0 0.0
  %307 = vmatpush1.msra.mxu0 0.0
  %308 = vmatprep.subr.mxu0 0.0
  %309 = vmatpush1.msra.mxu0 0.0
  %310 = vmatprep.subr.mxu0 0.0
  %311 = vmatpush1.msra.mxu0 0.0
  %312 = vmatprep.subr.mxu0 0.0
  %313 = vmatpush1.msra.mxu0 0.0
  %314 = vmatprep.subr.mxu0 0.0
  %315 = vmatpush1.msra.mxu0 0.0
  %316 = vmatprep.subr.mxu0 0.0
  %317 = vmatpush1.msra.mxu0 0.0
  %318 = vmatprep.subr.mxu0 0.0
  %319 = vmatpush1.msra.mxu0 0.0
  %320 = vmatprep.subr.mxu0 0.0
  %321 = vmatpush1.msra.mxu0 0.0
  %322 = vmatprep.subr.mxu0 0.0
  %323 = vmatpush1.msra.mxu0 0.0
  %324 = vmatprep.mubr.f32.mxu0 0.0
  %325 = vmatmul.mubr.f32.gmra.mrb[0].mxu0 %v255
  %v326 = vpop.f32.mrb[0].mxu0
  %v327 = vadd.f32 %v252, %v326
  %v328 = vpop.f32.mrb[0].mxu0
  %329 = vmatprep.mubr.f32.mxu0 0.0
  %330 = vmatmul.mubr.f32.gmra.mrb[0].mxu0 %v258
  %v331 = vpop.f32.mrb[0].mxu0
  %v332 = vadd.f32 %v252, %v331
  %v333 = vpop.f32.mrb[0].mxu0
  %334 = vdwg.mxu0
  %v335 = vld [vmem:[%s14] sm:$0xff]
  %v336 = vld [vmem:[%s14 + $0x8] sm:$0xff]
  %v337 = vld [vmem:[%s14 + $0x10] sm:$0xff]
  %v338 = vld [vmem:[%s14 + $0x18] sm:$0xff]
  %340 = vrot.lane.b32.xlu0 %v233, 96
  %v341 = vpop.permute.xlu0 %340
  %vm342 = vcmask 64512
  %v344 = vsel %vm342, %v241, 0
  %v346 = vsel %vm342, %v341, 0
  %348 = vmatprep.subr.mxu0 0.0
  %349 = vmatpush1.xpose.msra.mxu0 %v346
  %350 = vmatprep.subr.mxu0 0.0
  %351 = vmatpush1.xpose.msra.mxu0 0.0
  %352 = vmatprep.subr.mxu0 0.0
  %353 = vmatpush1.xpose.msra.mxu0 0.0
  %354 = vmatprep.subr.mxu0 0.0
  %355 = vmatpush1.xpose.msra.mxu0 0.0
  %356 = vmatprep.subr.mxu0 0.0
  %357 = vmatpush1.xpose.msra.mxu0 0.0
  %358 = vmatprep.subr.mxu0 0.0
  %359 = vmatpush1.xpose.msra.mxu0 0.0
  %360 = vmatprep.subr.mxu0 0.0
  %361 = vmatpush1.xpose.msra.mxu0 0.0
  %362 = vmatprep.subr.mxu0 0.0
  %363 = vmatpush1.xpose.msra.mxu0 0.0
  %364 = vmatprep.subr.mxu0 0.0
  %365 = vmatpush1.xpose.msra.mxu0 0.0
  %366 = vmatprep.subr.mxu0 0.0
  %367 = vmatpush1.xpose.msra.mxu0 0.0
  %368 = vmatprep.subr.mxu0 0.0
  %369 = vmatpush1.xpose.msra.mxu0 0.0
  %370 = vmatprep.subr.mxu0 0.0
  %371 = vmatpush1.xpose.msra.mxu0 0.0
  %372 = vmatprep.subr.mxu0 0.0
  %373 = vmatpush1.xpose.msra.mxu0 0.0
  %374 = vmatprep.subr.mxu0 0.0
  %375 = vmatpush1.xpose.msra.mxu0 0.0
  %376 = vmatprep.subr.mxu0 0.0
  %377 = vmatpush1.xpose.msra.mxu0 0.0
  %378 = vmatprep.subr.mxu0 0.0
  %379 = vmatpush1.xpose.msra.mxu0 0.0
  %380 = vmatprep.subr.mxu0 0.0
  %381 = vmatpush1.xpose.msra.mxu0 0.0
  %382 = vmatprep.subr.mxu0 0.0
  %383 = vmatpush1.xpose.msra.mxu0 0.0
  %384 = vmatprep.subr.mxu0 0.0
  %385 = vmatpush1.xpose.msra.mxu0 0.0
  %386 = vmatprep.subr.mxu0 0.0
  %387 = vmatpush1.xpose.msra.mxu0 0.0
  %388 = vmatprep.subr.mxu0 0.0
  %389 = vmatpush1.xpose.msra.mxu0 0.0
  %390 = vmatprep.subr.mxu0 0.0
  %391 = vmatpush1.xpose.msra.mxu0 0.0
  %392 = vmatprep.subr.mxu0 0.0
  %393 = vmatpush1.xpose.msra.mxu0 0.0
  %394 = vmatprep.subr.mxu0 0.0
  %395 = vmatpush1.xpose.msra.mxu0 0.0
  %396 = vmatprep.subr.mxu0 0.0
  %397 = vmatpush1.xpose.msra.mxu0 0.0
  %398 = vmatprep.subr.mxu0 0.0
  %399 = vmatpush1.xpose.msra.mxu0 0.0
  %400 = vmatprep.subr.mxu0 0.0
  %401 = vmatpush1.xpose.msra.mxu0 0.0
  %402 = vmatprep.subr.mxu0 0.0
  %403 = vmatpush1.xpose.msra.mxu0 0.0
  %404 = vmatprep.subr.mxu0 0.0
  %405 = vmatpush1.xpose.msra.mxu0 0.0
  %406 = vmatprep.subr.mxu0 0.0
  %407 = vmatpush1.xpose.msra.mxu0 0.0
  %408 = vmatprep.subr.mxu0 0.0
  %409 = vmatpush1.xpose.msra.mxu0 0.0
  %410 = vmatprep.subr.mxu0 0.0
  %411 = vmatpush1.xpose.msra.mxu0 0.0
  %412 = vmatprep.mubr.f32.mxu0 0.0
  %413 = vmatmul.mubr.f32.gmra.mrb[0].mxu0 %v344
  %v414 = vpop.f32.mrb[0].mxu0
  %v415 = vadd.f32 0.0, %v414
  %v416 = vpop.f32.mrb[0].mxu0
  %417 = vdwg.mxu0
  %v418 = vsel %vm342, %v415, -inf
  %419 = vmax.xlane.f32.xlu0 %v418
  %v420 = vpop.xlane.xlu0 %419
  %v421 = vsub.f32 %v415, %v420
  %v422 = vmul.f32 %v421, 1.442695
  %v423 = vpow.pop %v422
  %v424 = vsel %vm342, %v423, 0.0
  %425 = vadd.xlane.f32.xlu0 %v424
  %v426 = vpop.xlane.xlu0 %425
  %v428 = vsel %vm342, %v423, 0
  %430 = vmatprep.subr.mxu0 0.0
  %431 = vmatpush1.msra.mxu0 %v327
  %432 = vmatprep.subr.mxu0 0.0
  %433 = vmatpush1.msra.mxu0 0.0
  %434 = vmatprep.subr.mxu0 0.0
  %435 = vmatpush1.msra.mxu0 0.0
  %436 = vmatprep.subr.mxu0 0.0
  %437 = vmatpush1.msra.mxu0 0.0
  %438 = vmatprep.subr.mxu0 0.0
  %439 = vmatpush1.msra.mxu0 0.0
  %440 = vmatprep.subr.mxu0 0.0
  %441 = vmatpush1.msra.mxu0 0.0
  %442 = vmatprep.subr.mxu0 0.0
  %443 = vmatpush1.msra.mxu0 0.0
  %444 = vmatprep.subr.mxu0 0.0
  %445 = vmatpush1.msra.mxu0 0.0
  %446 = vmatprep.subr.mxu0 0.0
  %447 = vmatpush1.msra.mxu0 0.0
  %448 = vmatprep.subr.mxu0 0.0
  %449 = vmatpush1.msra.mxu0 0.0
  %450 = vmatprep.subr.mxu0 0.0
  %451 = vmatpush1.msra.mxu0 0.0
  %452 = vmatprep.subr.mxu0 0.0
  %453 = vmatpush1.msra.mxu0 0.0
  %454 = vmatprep.subr.mxu0 0.0
  %455 = vmatpush1.msra.mxu0 0.0
  %456 = vmatprep.subr.mxu0 0.0
  %457 = vmatpush1.msra.mxu0 0.0
  %458 = vmatprep.subr.mxu0 0.0
  %459 = vmatpush1.msra.mxu0 0.0
  %460 = vmatprep.subr.mxu0 0.0
  %461 = vmatpush1.msra.mxu0 0.0
  %462 = vmatprep.subr.mxu0 0.0
  %463 = vmatpush1.msra.mxu0 0.0
  %464 = vmatprep.subr.mxu0 0.0
  %465 = vmatpush1.msra.mxu0 0.0
  %466 = vmatprep.subr.mxu0 0.0
  %467 = vmatpush1.msra.mxu0 0.0
  %468 = vmatprep.subr.mxu0 0.0
  %469 = vmatpush1.msra.mxu0 0.0
  %470 = vmatprep.subr.mxu0 0.0
  %471 = vmatpush1.msra.mxu0 0.0
  %472 = vmatprep.subr.mxu0 0.0
  %473 = vmatpush1.msra.mxu0 0.0
  %474 = vmatprep.subr.mxu0 0.0
  %475 = vmatpush1.msra.mxu0 0.0
  %476 = vmatprep.subr.mxu0 0.0
  %477 = vmatpush1.msra.mxu0 0.0
  %478 = vmatprep.subr.mxu0 0.0
  %479 = vmatpush1.msra.mxu0 0.0
  %480 = vmatprep.subr.mxu0 0.0
  %481 = vmatpush1.msra.mxu0 0.0
  %482 = vmatprep.subr.mxu0 0.0
  %483 = vmatpush1.msra.mxu0 0.0
  %484 = vmatprep.subr.mxu0 0.0
  %485 = vmatpush1.msra.mxu0 0.0
  %486 = vmatprep.subr.mxu0 0.0
  %487 = vmatpush1.msra.mxu0 0.0
  %488 = vmatprep.subr.mxu0 0.0
  %489 = vmatpush1.msra.mxu0 0.0
  %490 = vmatprep.subr.mxu0 0.0
  %491 = vmatpush1.msra.mxu0 0.0
  %492 = vmatprep.subr.mxu0 0.0
  %493 = vmatpush1.msra.mxu0 0.0
  %494 = vmatprep.mubr.f32.mxu0 0.0
  %495 = vmatmul.mubr.f32.gmra.mrb[0].mxu0 %v428
  %v496 = vpop.f32.mrb[0].mxu0
  %v497 = vadd.f32 0.0, %v496
  %v498 = vpop.f32.mrb[0].mxu0
  %499 = vdwg.mxu0
  %v500 = vrcp.pop %v426
  %v501 = vmul.f32 %v497, %v500
  %502 = vrot.lane.b32.xlu0 %v241, 120
  %v503 = vpop.permute.xlu0 %502
  %504 = vrot.lane.b32.xlu0 %v233, 88
  %v505 = vpop.permute.xlu0 %504
  %v506 = vsel %vm342, %v503, 0
  %v508 = vsel %vm342, %v505, 0
  %510 = vmatprep.subr.mxu0 0.0
  %511 = vmatpush1.xpose.msra.mxu0 %v508
  %512 = vmatprep.subr.mxu0 0.0
  %513 = vmatpush1.xpose.msra.mxu0 0.0
  %514 = vmatprep.subr.mxu0 0.0
  %515 = vmatpush1.xpose.msra.mxu0 0.0
  %516 = vmatprep.subr.mxu0 0.0
  %517 = vmatpush1.xpose.msra.mxu0 0.0
  %518 = vmatprep.subr.mxu0 0.0
  %519 = vmatpush1.xpose.msra.mxu0 0.0
  %520 = vmatprep.subr.mxu0 0.0
  %521 = vmatpush1.xpose.msra.mxu0 0.0
  %522 = vmatprep.subr.mxu0 0.0
  %523 = vmatpush1.xpose.msra.mxu0 0.0
  %524 = vmatprep.subr.mxu0 0.0
  %525 = vmatpush1.xpose.msra.mxu0 0.0
  %526 = vmatprep.subr.mxu0 0.0
  %527 = vmatpush1.xpose.msra.mxu0 0.0
  %528 = vmatprep.subr.mxu0 0.0
  %529 = vmatpush1.xpose.msra.mxu0 0.0
  %530 = vmatprep.subr.mxu0 0.0
  %531 = vmatpush1.xpose.msra.mxu0 0.0
  %532 = vmatprep.subr.mxu0 0.0
  %533 = vmatpush1.xpose.msra.mxu0 0.0
  %534 = vmatprep.subr.mxu0 0.0
  %535 = vmatpush1.xpose.msra.mxu0 0.0
  %536 = vmatprep.subr.mxu0 0.0
  %537 = vmatpush1.xpose.msra.mxu0 0.0
  %538 = vmatprep.subr.mxu0 0.0
  %539 = vmatpush1.xpose.msra.mxu0 0.0
  %540 = vmatprep.subr.mxu0 0.0
  %541 = vmatpush1.xpose.msra.mxu0 0.0
  %542 = vmatprep.subr.mxu0 0.0
  %543 = vmatpush1.xpose.msra.mxu0 0.0
  %544 = vmatprep.subr.mxu0 0.0
  %545 = vmatpush1.xpose.msra.mxu0 0.0
  %546 = vmatprep.subr.mxu0 0.0
  %547 = vmatpush1.xpose.msra.mxu0 0.0
  %548 = vmatprep.subr.mxu0 0.0
  %549 = vmatpush1.xpose.msra.mxu0 0.0
  %550 = vmatprep.subr.mxu0 0.0
  %551 = vmatpush1.xpose.msra.mxu0 0.0
  %552 = vmatprep.subr.mxu0 0.0
  %553 = vmatpush1.xpose.msra.mxu0 0.0
  %554 = vmatprep.subr.mxu0 0.0
  %555 = vmatpush1.xpose.msra.mxu0 0.0
  %556 = vmatprep.subr.mxu0 0.0
  %557 = vmatpush1.xpose.msra.mxu0 0.0
  %558 = vmatprep.subr.mxu0 0.0
  %559 = vmatpush1.xpose.msra.mxu0 0.0
  %560 = vmatprep.subr.mxu0 0.0
  %561 = vmatpush1.xpose.msra.mxu0 0.0
  %562 = vmatprep.subr.mxu0 0.0
  %563 = vmatpush1.xpose.msra.mxu0 0.0
  %564 = vmatprep.subr.mxu0 0.0
  %565 = vmatpush1.xpose.msra.mxu0 0.0
  %566 = vmatprep.subr.mxu0 0.0
  %567 = vmatpush1.xpose.msra.mxu0 0.0
  %568 = vmatprep.subr.mxu0 0.0
  %569 = vmatpush1.xpose.msra.mxu0 0.0
  %570 = vmatprep.subr.mxu0 0.0
  %571 = vmatpush1.xpose.msra.mxu0 0.0
  %572 = vmatprep.subr.mxu0 0.0
  %573 = vmatpush1.xpose.msra.mxu0 0.0
  %574 = vmatprep.mubr.f32.mxu0 0.0
  %575 = vmatmul.mubr.f32.gmra.mrb[0].mxu0 %v506
  %v576 = vpop.f32.mrb[0].mxu0
  %v577 = vadd.f32 0.0, %v576
  %v578 = vpop.f32.mrb[0].mxu0
  %579 = vdwg.mxu0
  %v580 = vsel %vm342, %v577, -inf
  %581 = vmax.xlane.f32.xlu0 %v580
  %v582 = vpop.xlane.xlu0 %581
  %v583 = vsub.f32 %v577, %v582
  %v584 = vmul.f32 %v583, 1.442695
  %v585 = vpow.pop %v584
  %v586 = vsel %vm342, %v585, 0.0
  %587 = vadd.xlane.f32.xlu0 %v586
  %v588 = vpop.xlane.xlu0 %587
  %590 = vrot.lane.b32.xlu0 %v327, 120
  %v591 = vpop.permute.xlu0 %590
  %v594 = vsel %vm342, %v585, 0
  %596 = vmatprep.subr.mxu0 0.0
  %597 = vmatpush1.msra.mxu0 %v591
  %598 = vmatprep.subr.mxu0 0.0
  %599 = vmatpush1.msra.mxu0 0.0
  %600 = vmatprep.subr.mxu0 0.0
  %601 = vmatpush1.msra.mxu0 0.0
  %602 = vmatprep.subr.mxu0 0.0
  %603 = vmatpush1.msra.mxu0 0.0
  %604 = vmatprep.subr.mxu0 0.0
  %605 = vmatpush1.msra.mxu0 0.0
  %606 = vmatprep.subr.mxu0 0.0
  %607 = vmatpush1.msra.mxu0 0.0
  %608 = vmatprep.subr.mxu0 0.0
  %609 = vmatpush1.msra.mxu0 0.0
  %610 = vmatprep.subr.mxu0 0.0
  %611 = vmatpush1.msra.mxu0 0.0
  %612 = vmatprep.subr.mxu0 0.0
  %613 = vmatpush1.msra.mxu0 0.0
  %614 = vmatprep.subr.mxu0 0.0
  %615 = vmatpush1.msra.mxu0 0.0
  %616 = vmatprep.subr.mxu0 0.0
  %617 = vmatpush1.msra.mxu0 0.0
  %618 = vmatprep.subr.mxu0 0.0
  %619 = vmatpush1.msra.mxu0 0.0
  %620 = vmatprep.subr.mxu0 0.0
  %621 = vmatpush1.msra.mxu0 0.0
  %622 = vmatprep.subr.mxu0 0.0
  %623 = vmatpush1.msra.mxu0 0.0
  %624 = vmatprep.subr.mxu0 0.0
  %625 = vmatpush1.msra.mxu0 0.0
  %626 = vmatprep.subr.mxu0 0.0
  %627 = vmatpush1.msra.mxu0 0.0
  %628 = vmatprep.subr.mxu0 0.0
  %629 = vmatpush1.msra.mxu0 0.0
  %630 = vmatprep.subr.mxu0 0.0
  %631 = vmatpush1.msra.mxu0 0.0
  %632 = vmatprep.subr.mxu0 0.0
  %633 = vmatpush1.msra.mxu0 0.0
  %634 = vmatprep.subr.mxu0 0.0
  %635 = vmatpush1.msra.mxu0 0.0
  %636 = vmatprep.subr.mxu0 0.0
  %637 = vmatpush1.msra.mxu0 0.0
  %638 = vmatprep.subr.mxu0 0.0
  %639 = vmatpush1.msra.mxu0 0.0
  %640 = vmatprep.subr.mxu0 0.0
  %641 = vmatpush1.msra.mxu0 0.0
  %642 = vmatprep.subr.mxu0 0.0
  %643 = vmatpush1.msra.mxu0 0.0
  %644 = vmatprep.subr.mxu0 0.0
  %645 = vmatpush1.msra.mxu0 0.0
  %646 = vmatprep.subr.mxu0 0.0
  %647 = vmatpush1.msra.mxu0 0.0
  %648 = vmatprep.subr.mxu0 0.0
  %649 = vmatpush1.msra.mxu0 0.0
  %650 = vmatprep.subr.mxu0 0.0
  %651 = vmatpush1.msra.mxu0 0.0
  %652 = vmatprep.subr.mxu0 0.0
  %653 = vmatpush1.msra.mxu0 0.0
  %654 = vmatprep.subr.mxu0 0.0
  %655 = vmatpush1.msra.mxu0 0.0
  %656 = vmatprep.subr.mxu0 0.0
  %657 = vmatpush1.msra.mxu0 0.0
  %658 = vmatprep.subr.mxu0 0.0
  %659 = vmatpush1.msra.mxu0 0.0
  %660 = vmatprep.mubr.f32.mxu0 0.0
  %661 = vmatmul.mubr.f32.gmra.mrb[0].mxu0 %v594
  %v662 = vpop.f32.mrb[0].mxu0
  %v663 = vadd.f32 0.0, %v662
  %v664 = vpop.f32.mrb[0].mxu0
  %665 = vdwg.mxu0
  %v666 = vrcp.pop %v588
  %v667 = vmul.f32 %v663, %v666
  %v669 = vsel %vm342, %v667, 0
  %671 = vmatprep.subr.mxu0 0.0
  %672 = vmatpush1.msra.mxu0 %v336
  %673 = vmatprep.subr.mxu0 0.0
  %674 = vmatpush1.msra.mxu0 0.0
  %675 = vmatprep.subr.mxu0 0.0
  %676 = vmatpush1.msra.mxu0 0.0
  %677 = vmatprep.subr.mxu0 0.0
  %678 = vmatpush1.msra.mxu0 0.0
  %679 = vmatprep.subr.mxu0 0.0
  %680 = vmatpush1.msra.mxu0 0.0
  %681 = vmatprep.subr.mxu0 0.0
  %682 = vmatpush1.msra.mxu0 0.0
  %683 = vmatprep.subr.mxu0 0.0
  %684 = vmatpush1.msra.mxu0 0.0
  %685 = vmatprep.subr.mxu0 0.0
  %686 = vmatpush1.msra.mxu0 0.0
  %687 = vmatprep.subr.mxu0 0.0
  %688 = vmatpush1.msra.mxu0 0.0
  %689 = vmatprep.subr.mxu0 0.0
  %690 = vmatpush1.msra.mxu0 0.0
  %691 = vmatprep.subr.mxu0 0.0
  %692 = vmatpush1.msra.mxu0 0.0
  %693 = vmatprep.subr.mxu0 0.0
  %694 = vmatpush1.msra.mxu0 0.0
  %695 = vmatprep.subr.mxu0 0.0
  %696 = vmatpush1.msra.mxu0 0.0
  %697 = vmatprep.subr.mxu0 0.0
  %698 = vmatpush1.msra.mxu0 0.0
  %699 = vmatprep.subr.mxu0 0.0
  %700 = vmatpush1.msra.mxu0 0.0
  %701 = vmatprep.subr.mxu0 0.0
  %702 = vmatpush1.msra.mxu0 0.0
  %703 = vmatprep.subr.mxu0 0.0
  %704 = vmatpush1.msra.mxu0 0.0
  %705 = vmatprep.subr.mxu0 0.0
  %706 = vmatpush1.msra.mxu0 0.0
  %707 = vmatprep.subr.mxu0 0.0
  %708 = vmatpush1.msra.mxu0 0.0
  %709 = vmatprep.subr.mxu0 0.0
  %710 = vmatpush1.msra.mxu0 0.0
  %711 = vmatprep.subr.mxu0 0.0
  %712 = vmatpush1.msra.mxu0 0.0
  %713 = vmatprep.subr.mxu0 0.0
  %714 = vmatpush1.msra.mxu0 0.0
  %715 = vmatprep.subr.mxu0 0.0
  %716 = vmatpush1.msra.mxu0 0.0
  %717 = vmatprep.subr.mxu0 0.0
  %718 = vmatpush1.msra.mxu0 0.0
  %719 = vmatprep.subr.mxu0 0.0
  %720 = vmatpush1.msra.mxu0 0.0
  %721 = vmatprep.subr.mxu0 0.0
  %722 = vmatpush1.msra.mxu0 0.0
  %723 = vmatprep.subr.mxu0 0.0
  %724 = vmatpush1.msra.mxu0 0.0
  %725 = vmatprep.subr.mxu0 0.0
  %726 = vmatpush1.msra.mxu0 0.0
  %727 = vmatprep.subr.mxu0 0.0
  %728 = vmatpush1.msra.mxu0 0.0
  %729 = vmatprep.subr.mxu0 0.0
  %730 = vmatpush1.msra.mxu0 0.0
  %731 = vmatprep.subr.mxu0 0.0
  %732 = vmatpush1.msra.mxu0 0.0
  %733 = vmatprep.subr.mxu0 0.0
  %734 = vmatpush1.msra.mxu0 0.0
  %735 = vmatprep.mubr.f32.mxu0 0.0
  %736 = vmatmul.mubr.f32.gmra.mrb[0].mxu0 %v669
  %v737 = vpop.f32.mrb[0].mxu0
  %v738 = vadd.f32 0.0, %v737
  %v739 = vpop.f32.mrb[0].mxu0
  %740 = vdwg.mxu0
  %v742 = vsel %vm342, %v501, 0
  %744 = vmatprep.subr.mxu0 0.0
  %745 = vmatpush1.msra.mxu0 %v335
  %746 = vmatprep.subr.mxu0 0.0
  %747 = vmatpush1.msra.mxu0 0.0
  %748 = vmatprep.subr.mxu0 0.0
  %749 = vmatpush1.msra.mxu0 0.0
  %750 = vmatprep.subr.mxu0 0.0
  %751 = vmatpush1.msra.mxu0 0.0
  %752 = vmatprep.subr.mxu0 0.0
  %753 = vmatpush1.msra.mxu0 0.0
  %754 = vmatprep.subr.mxu0 0.0
  %755 = vmatpush1.msra.mxu0 0.0
  %756 = vmatprep.subr.mxu0 0.0
  %757 = vmatpush1.msra.mxu0 0.0
  %758 = vmatprep.subr.mxu0 0.0
  %759 = vmatpush1.msra.mxu0 0.0
  %760 = vmatprep.subr.mxu0 0.0
  %761 = vmatpush1.msra.mxu0 0.0
  %762 = vmatprep.subr.mxu0 0.0
  %763 = vmatpush1.msra.mxu0 0.0
  %764 = vmatprep.subr.mxu0 0.0
  %765 = vmatpush1.msra.mxu0 0.0
  %766 = vmatprep.subr.mxu0 0.0
  %767 = vmatpush1.msra.mxu0 0.0
  %768 = vmatprep.subr.mxu0 0.0
  %769 = vmatpush1.msra.mxu0 0.0
  %770 = vmatprep.subr.mxu0 0.0
  %771 = vmatpush1.msra.mxu0 0.0
  %772 = vmatprep.subr.mxu0 0.0
  %773 = vmatpush1.msra.mxu0 0.0
  %774 = vmatprep.subr.mxu0 0.0
  %775 = vmatpush1.msra.mxu0 0.0
  %776 = vmatprep.subr.mxu0 0.0
  %777 = vmatpush1.msra.mxu0 0.0
  %778 = vmatprep.subr.mxu0 0.0
  %779 = vmatpush1.msra.mxu0 0.0
  %780 = vmatprep.subr.mxu0 0.0
  %781 = vmatpush1.msra.mxu0 0.0
  %782 = vmatprep.subr.mxu0 0.0
  %783 = vmatpush1.msra.mxu0 0.0
  %784 = vmatprep.subr.mxu0 0.0
  %785 = vmatpush1.msra.mxu0 0.0
  %786 = vmatprep.subr.mxu0 0.0
  %787 = vmatpush1.msra.mxu0 0.0
  %788 = vmatprep.subr.mxu0 0.0
  %789 = vmatpush1.msra.mxu0 0.0
  %790 = vmatprep.subr.mxu0 0.0
  %791 = vmatpush1.msra.mxu0 0.0
  %792 = vmatprep.subr.mxu0 0.0
  %793 = vmatpush1.msra.mxu0 0.0
  %794 = vmatprep.subr.mxu0 0.0
  %795 = vmatpush1.msra.mxu0 0.0
  %796 = vmatprep.subr.mxu0 0.0
  %797 = vmatpush1.msra.mxu0 0.0
  %798 = vmatprep.subr.mxu0 0.0
  %799 = vmatpush1.msra.mxu0 0.0
  %800 = vmatprep.subr.mxu0 0.0
  %801 = vmatpush1.msra.mxu0 0.0
  %802 = vmatprep.subr.mxu0 0.0
  %803 = vmatpush1.msra.mxu0 0.0
  %804 = vmatprep.subr.mxu0 0.0
  %805 = vmatpush1.msra.mxu0 0.0
  %806 = vmatprep.subr.mxu0 0.0
  %807 = vmatpush1.msra.mxu0 0.0
  %808 = vmatprep.mubr.f32.mxu0 0.0
  %809 = vmatmul.mubr.f32.gmra.mrb[0].mxu0 %v742
  %v810 = vpop.f32.mrb[0].mxu0
  %v811 = vadd.f32 %v738, %v810
  %v812 = vpop.f32.mrb[0].mxu0
  %813 = vdwg.mxu0
  %814 = vrot.lane.b32.xlu0 %v241, 112
  %v815 = vpop.permute.xlu0 %814
  %816 = vrot.lane.b32.xlu0 %v233, 80
  %v817 = vpop.permute.xlu0 %816
  %v818 = vsel %vm342, %v815, 0
  %v820 = vsel %vm342, %v817, 0
  %822 = vmatprep.subr.mxu0 0.0
  %823 = vmatpush1.xpose.msra.mxu0 %v820
  %824 = vmatprep.subr.mxu0 0.0
  %825 = vmatpush1.xpose.msra.mxu0 0.0
  %826 = vmatprep.subr.mxu0 0.0
  %827 = vmatpush1.xpose.msra.mxu0 0.0
  %828 = vmatprep.subr.mxu0 0.0
  %829 = vmatpush1.xpose.msra.mxu0 0.0
  %830 = vmatprep.subr.mxu0 0.0
  %831 = vmatpush1.xpose.msra.mxu0 0.0
  %832 = vmatprep.subr.mxu0 0.0
  %833 = vmatpush1.xpose.msra.mxu0 0.0
  %834 = vmatprep.subr.mxu0 0.0
  %835 = vmatpush1.xpose.msra.mxu0 0.0
  %836 = vmatprep.subr.mxu0 0.0
  %837 = vmatpush1.xpose.msra.mxu0 0.0
  %838 = vmatprep.subr.mxu0 0.0
  %839 = vmatpush1.xpose.msra.mxu0 0.0
  %840 = vmatprep.subr.mxu0 0.0
  %841 = vmatpush1.xpose.msra.mxu0 0.0
  %842 = vmatprep.subr.mxu0 0.0
  %843 = vmatpush1.xpose.msra.mxu0 0.0
  %844 = vmatprep.subr.mxu0 0.0
  %845 = vmatpush1.xpose.msra.mxu0 0.0
  %846 = vmatprep.subr.mxu0 0.0
  %847 = vmatpush1.xpose.msra.mxu0 0.0
  %848 = vmatprep.subr.mxu0 0.0
  %849 = vmatpush1.xpose.msra.mxu0 0.0
  %850 = vmatprep.subr.mxu0 0.0
  %851 = vmatpush1.xpose.msra.mxu0 0.0
  %852 = vmatprep.subr.mxu0 0.0
  %853 = vmatpush1.xpose.msra.mxu0 0.0
  %854 = vmatprep.subr.mxu0 0.0
  %855 = vmatpush1.xpose.msra.mxu0 0.0
  %856 = vmatprep.subr.mxu0 0.0
  %857 = vmatpush1.xpose.msra.mxu0 0.0
  %858 = vmatprep.subr.mxu0 0.0
  %859 = vmatpush1.xpose.msra.mxu0 0.0
  %860 = vmatprep.subr.mxu0 0.0
  %861 = vmatpush1.xpose.msra.mxu0 0.0
  %862 = vmatprep.subr.mxu0 0.0
  %863 = vmatpush1.xpose.msra.mxu0 0.0
  %864 = vmatprep.subr.mxu0 0.0
  %865 = vmatpush1.xpose.msra.mxu0 0.0
  %866 = vmatprep.subr.mxu0 0.0
  %867 = vmatpush1.xpose.msra.mxu0 0.0
  %868 = vmatprep.subr.mxu0 0.0
  %869 = vmatpush1.xpose.msra.mxu0 0.0
  %870 = vmatprep.subr.mxu0 0.0
  %871 = vmatpush1.xpose.msra.mxu0 0.0
  %872 = vmatprep.subr.mxu0 0.0
  %873 = vmatpush1.xpose.msra.mxu0 0.0
  %874 = vmatprep.subr.mxu0 0.0
  %875 = vmatpush1.xpose.msra.mxu0 0.0
  %876 = vmatprep.subr.mxu0 0.0
  %877 = vmatpush1.xpose.msra.mxu0 0.0
  %878 = vmatprep.subr.mxu0 0.0
  %879 = vmatpush1.xpose.msra.mxu0 0.0
  %880 = vmatprep.subr.mxu0 0.0
  %881 = vmatpush1.xpose.msra.mxu0 0.0
  %882 = vmatprep.subr.mxu0 0.0
  %883 = vmatpush1.xpose.msra.mxu0 0.0
  %884 = vmatprep.subr.mxu0 0.0
  %885 = vmatpush1.xpose.msra.mxu0 0.0
  %886 = vmatprep.mubr.f32.mxu0 0.0
  %887 = vmatmul.mubr.f32.gmra.mrb[0].mxu0 %v818
  %v888 = vpop.f32.mrb[0].mxu0
  %v889 = vadd.f32 0.0, %v888
  %v890 = vpop.f32.mrb[0].mxu0
  %891 = vdwg.mxu0
  %v892 = vsel %vm342, %v889, -inf
  %893 = vmax.xlane.f32.xlu0 %v892
  %v894 = vpop.xlane.xlu0 %893
  %v895 = vsub.f32 %v889, %v894
  %v896 = vmul.f32 %v895, 1.442695
  %v897 = vpow.pop %v896
  %v898 = vsel %vm342, %v897, 0.0
  %899 = vadd.xlane.f32.xlu0 %v898
  %v900 = vpop.xlane.xlu0 %899
  %901 = vrot.lane.b32.xlu0 %v327, 112
  %v902 = vpop.permute.xlu0 %901
  %v905 = vsel %vm342, %v897, 0
  %907 = vmatprep.subr.mxu0 0.0
  %908 = vmatpush1.msra.mxu0 %v902
  %909 = vmatprep.subr.mxu0 0.0
  %910 = vmatpush1.msra.mxu0 0.0
  %911 = vmatprep.subr.mxu0 0.0
  %912 = vmatpush1.msra.mxu0 0.0
  %913 = vmatprep.subr.mxu0 0.0
  %914 = vmatpush1.msra.mxu0 0.0
  %915 = vmatprep.subr.mxu0 0.0
  %916 = vmatpush1.msra.mxu0 0.0
  %917 = vmatprep.subr.mxu0 0.0
  %918 = vmatpush1.msra.mxu0 0.0
  %919 = vmatprep.subr.mxu0 0.0
  %920 = vmatpush1.msra.mxu0 0.0
  %921 = vmatprep.subr.mxu0 0.0
  %922 = vmatpush1.msra.mxu0 0.0
  %923 = vmatprep.subr.mxu0 0.0
  %924 = vmatpush1.msra.mxu0 0.0
  %925 = vmatprep.subr.mxu0 0.0
  %926 = vmatpush1.msra.mxu0 0.0
  %927 = vmatprep.subr.mxu0 0.0
  %928 = vmatpush1.msra.mxu0 0.0
  %929 = vmatprep.subr.mxu0 0.0
  %930 = vmatpush1.msra.mxu0 0.0
  %931 = vmatprep.subr.mxu0 0.0
  %932 = vmatpush1.msra.mxu0 0.0
  %933 = vmatprep.subr.mxu0 0.0
  %934 = vmatpush1.msra.mxu0 0.0
  %935 = vmatprep.subr.mxu0 0.0
  %936 = vmatpush1.msra.mxu0 0.0
  %937 = vmatprep.subr.mxu0 0.0
  %938 = vmatpush1.msra.mxu0 0.0
  %939 = vmatprep.subr.mxu0 0.0
  %940 = vmatpush1.msra.mxu0 0.0
  %941 = vmatprep.subr.mxu0 0.0
  %942 = vmatpush1.msra.mxu0 0.0
  %943 = vmatprep.subr.mxu0 0.0
  %944 = vmatpush1.msra.mxu0 0.0
  %945 = vmatprep.subr.mxu0 0.0
  %946 = vmatpush1.msra.mxu0 0.0
  %947 = vmatprep.subr.mxu0 0.0
  %948 = vmatpush1.msra.mxu0 0.0
  %949 = vmatprep.subr.mxu0 0.0
  %950 = vmatpush1.msra.mxu0 0.0
  %951 = vmatprep.subr.mxu0 0.0
  %952 = vmatpush1.msra.mxu0 0.0
  %953 = vmatprep.subr.mxu0 0.0
  %954 = vmatpush1.msra.mxu0 0.0
  %955 = vmatprep.subr.mxu0 0.0
  %956 = vmatpush1.msra.mxu0 0.0
  %957 = vmatprep.subr.mxu0 0.0
  %958 = vmatpush1.msra.mxu0 0.0
  %959 = vmatprep.subr.mxu0 0.0
  %960 = vmatpush1.msra.mxu0 0.0
  %961 = vmatprep.subr.mxu0 0.0
  %962 = vmatpush1.msra.mxu0 0.0
  %963 = vmatprep.subr.mxu0 0.0
  %964 = vmatpush1.msra.mxu0 0.0
  %965 = vmatprep.subr.mxu0 0.0
  %966 = vmatpush1.msra.mxu0 0.0
  %967 = vmatprep.subr.mxu0 0.0
  %968 = vmatpush1.msra.mxu0 0.0
  %969 = vmatprep.subr.mxu0 0.0
  %970 = vmatpush1.msra.mxu0 0.0
  %971 = vmatprep.mubr.f32.mxu0 0.0
  %972 = vmatmul.mubr.f32.gmra.mrb[0].mxu0 %v905
  %v973 = vpop.f32.mrb[0].mxu0
  %v974 = vadd.f32 0.0, %v973
  %v975 = vpop.f32.mrb[0].mxu0
  %976 = vdwg.mxu0
  %v977 = vrcp.pop %v900
  %v978 = vmul.f32 %v974, %v977
  %v980 = vsel %vm342, %v978, 0
  %982 = vmatprep.subr.mxu0 0.0
  %983 = vmatpush1.msra.mxu0 %v337
  %984 = vmatprep.subr.mxu0 0.0
  %985 = vmatpush1.msra.mxu0 0.0
  %986 = vmatprep.subr.mxu0 0.0
  %987 = vmatpush1.msra.mxu0 0.0
  %988 = vmatprep.subr.mxu0 0.0
  %989 = vmatpush1.msra.mxu0 0.0
  %990 = vmatprep.subr.mxu0 0.0
  %991 = vmatpush1.msra.mxu0 0.0
  %992 = vmatprep.subr.mxu0 0.0
  %993 = vmatpush1.msra.mxu0 0.0
  %994 = vmatprep.subr.mxu0 0.0
  %995 = vmatpush1.msra.mxu0 0.0
  %996 = vmatprep.subr.mxu0 0.0
  %997 = vmatpush1.msra.mxu0 0.0
  %998 = vmatprep.subr.mxu0 0.0
  %999 = vmatpush1.msra.mxu0 0.0
  %1000 = vmatprep.subr.mxu0 0.0
  %1001 = vmatpush1.msra.mxu0 0.0
  %1002 = vmatprep.subr.mxu0 0.0
  %1003 = vmatpush1.msra.mxu0 0.0
  %1004 = vmatprep.subr.mxu0 0.0
  %1005 = vmatpush1.msra.mxu0 0.0
  %1006 = vmatprep.subr.mxu0 0.0
  %1007 = vmatpush1.msra.mxu0 0.0
  %1008 = vmatprep.subr.mxu0 0.0
  %1009 = vmatpush1.msra.mxu0 0.0
  %1010 = vmatprep.subr.mxu0 0.0
  %1011 = vmatpush1.msra.mxu0 0.0
  %1012 = vmatprep.subr.mxu0 0.0
  %1013 = vmatpush1.msra.mxu0 0.0
  %1014 = vmatprep.subr.mxu0 0.0
  %1015 = vmatpush1.msra.mxu0 0.0
  %1016 = vmatprep.subr.mxu0 0.0
  %1017 = vmatpush1.msra.mxu0 0.0
  %1018 = vmatprep.subr.mxu0 0.0
  %1019 = vmatpush1.msra.mxu0 0.0
  %1020 = vmatprep.subr.mxu0 0.0
  %1021 = vmatpush1.msra.mxu0 0.0
  %1022 = vmatprep.subr.mxu0 0.0
  %1023 = vmatpush1.msra.mxu0 0.0
  %1024 = vmatprep.subr.mxu0 0.0
  %1025 = vmatpush1.msra.mxu0 0.0
  %1026 = vmatprep.subr.mxu0 0.0
  %1027 = vmatpush1.msra.mxu0 0.0
  %1028 = vmatprep.subr.mxu0 0.0
  %1029 = vmatpush1.msra.mxu0 0.0
  %1030 = vmatprep.subr.mxu0 0.0
  %1031 = vmatpush1.msra.mxu0 0.0
  %1032 = vmatprep.subr.mxu0 0.0
  %1033 = vmatpush1.msra.mxu0 0.0
  %1034 = vmatprep.subr.mxu0 0.0
  %1035 = vmatpush1.msra.mxu0 0.0
  %1036 = vmatprep.subr.mxu0 0.0
  %1037 = vmatpush1.msra.mxu0 0.0
  %1038 = vmatprep.subr.mxu0 0.0
  %1039 = vmatpush1.msra.mxu0 0.0
  %1040 = vmatprep.subr.mxu0 0.0
  %1041 = vmatpush1.msra.mxu0 0.0
  %1042 = vmatprep.subr.mxu0 0.0
  %1043 = vmatpush1.msra.mxu0 0.0
  %1044 = vmatprep.subr.mxu0 0.0
  %1045 = vmatpush1.msra.mxu0 0.0
  %1046 = vmatprep.mubr.f32.mxu0 0.0
  %1047 = vmatmul.mubr.f32.gmra.mrb[0].mxu0 %v980
  %v1048 = vpop.f32.mrb[0].mxu0
  %v1049 = vadd.f32 0.0, %v1048
  %v1050 = vpop.f32.mrb[0].mxu0
  %1051 = vdwg.mxu0
  %v1052 = vadd.f32 %v811, %v1049
  %1053 = vrot.lane.b32.xlu0 %v241, 104
  %v1054 = vpop.permute.xlu0 %1053
  %1055 = vrot.lane.b32.xlu0 %v233, 72
  %v1056 = vpop.permute.xlu0 %1055
  %v1057 = vsel %vm342, %v1054, 0
  %v1059 = vsel %vm342, %v1056, 0
  %1061 = vmatprep.subr.mxu0 0.0
  %1062 = vmatpush1.xpose.msra.mxu0 %v1059
  %1063 = vmatprep.subr.mxu0 0.0
  %1064 = vmatpush1.xpose.msra.mxu0 0.0
  %1065 = vmatprep.subr.mxu0 0.0
  %1066 = vmatpush1.xpose.msra.mxu0 0.0
  %1067 = vmatprep.subr.mxu0 0.0
  %1068 = vmatpush1.xpose.msra.mxu0 0.0
  %1069 = vmatprep.subr.mxu0 0.0
  %1070 = vmatpush1.xpose.msra.mxu0 0.0
  %1071 = vmatprep.subr.mxu0 0.0
  %1072 = vmatpush1.xpose.msra.mxu0 0.0
  %1073 = vmatprep.subr.mxu0 0.0
  %1074 = vmatpush1.xpose.msra.mxu0 0.0
  %1075 = vmatprep.subr.mxu0 0.0
  %1076 = vmatpush1.xpose.msra.mxu0 0.0
  %1077 = vmatprep.subr.mxu0 0.0
  %1078 = vmatpush1.xpose.msra.mxu0 0.0
  %1079 = vmatprep.subr.mxu0 0.0
  %1080 = vmatpush1.xpose.msra.mxu0 0.0
  %1081 = vmatprep.subr.mxu0 0.0
  %1082 = vmatpush1.xpose.msra.mxu0 0.0
  %1083 = vmatprep.subr.mxu0 0.0
  %1084 = vmatpush1.xpose.msra.mxu0 0.0
  %1085 = vmatprep.subr.mxu0 0.0
  %1086 = vmatpush1.xpose.msra.mxu0 0.0
  %1087 = vmatprep.subr.mxu0 0.0
  %1088 = vmatpush1.xpose.msra.mxu0 0.0
  %1089 = vmatprep.subr.mxu0 0.0
  %1090 = vmatpush1.xpose.msra.mxu0 0.0
  %1091 = vmatprep.subr.mxu0 0.0
  %1092 = vmatpush1.xpose.msra.mxu0 0.0
  %1093 = vmatprep.subr.mxu0 0.0
  %1094 = vmatpush1.xpose.msra.mxu0 0.0
  %1095 = vmatprep.subr.mxu0 0.0
  %1096 = vmatpush1.xpose.msra.mxu0 0.0
  %1097 = vmatprep.subr.mxu0 0.0
  %1098 = vmatpush1.xpose.msra.mxu0 0.0
  %1099 = vmatprep.subr.mxu0 0.0
  %1100 = vmatpush1.xpose.msra.mxu0 0.0
  %1101 = vmatprep.subr.mxu0 0.0
  %1102 = vmatpush1.xpose.msra.mxu0 0.0
  %1103 = vmatprep.subr.mxu0 0.0
  %1104 = vmatpush1.xpose.msra.mxu0 0.0
  %1105 = vmatprep.subr.mxu0 0.0
  %1106 = vmatpush1.xpose.msra.mxu0 0.0
  %1107 = vmatprep.subr.mxu0 0.0
  %1108 = vmatpush1.xpose.msra.mxu0 0.0
  %1109 = vmatprep.subr.mxu0 0.0
  %1110 = vmatpush1.xpose.msra.mxu0 0.0
  %1111 = vmatprep.subr.mxu0 0.0
  %1112 = vmatpush1.xpose.msra.mxu0 0.0
  %1113 = vmatprep.subr.mxu0 0.0
  %1114 = vmatpush1.xpose.msra.mxu0 0.0
  %1115 = vmatprep.subr.mxu0 0.0
  %1116 = vmatpush1.xpose.msra.mxu0 0.0
  %1117 = vmatprep.subr.mxu0 0.0
  %1118 = vmatpush1.xpose.msra.mxu0 0.0
  %1119 = vmatprep.subr.mxu0 0.0
  %1120 = vmatpush1.xpose.msra.mxu0 0.0
  %1121 = vmatprep.subr.mxu0 0.0
  %1122 = vmatpush1.xpose.msra.mxu0 0.0
  %1123 = vmatprep.subr.mxu0 0.0
  %1124 = vmatpush1.xpose.msra.mxu0 0.0
  %1125 = vmatprep.mubr.f32.mxu0 0.0
  %1126 = vmatmul.mubr.f32.gmra.mrb[0].mxu0 %v1057
  %v1127 = vpop.f32.mrb[0].mxu0
  %v1128 = vadd.f32 0.0, %v1127
  %v1129 = vpop.f32.mrb[0].mxu0
  %1130 = vdwg.mxu0
  %v1131 = vsel %vm342, %v1128, -inf
  %1132 = vmax.xlane.f32.xlu0 %v1131
  %v1133 = vpop.xlane.xlu0 %1132
  %v1134 = vsub.f32 %v1128, %v1133
  %v1135 = vmul.f32 %v1134, 1.442695
  %v1136 = vpow.pop %v1135
  %v1137 = vsel %vm342, %v1136, 0.0
  %1138 = vadd.xlane.f32.xlu0 %v1137
  %v1139 = vpop.xlane.xlu0 %1138
  %1140 = vrot.lane.b32.xlu0 %v327, 104
  %v1141 = vpop.permute.xlu0 %1140
  %v1144 = vsel %vm342, %v1136, 0
  %1146 = vmatprep.subr.mxu0 0.0
  %1147 = vmatpush1.msra.mxu0 %v1141
  %1148 = vmatprep.subr.mxu0 0.0
  %1149 = vmatpush1.msra.mxu0 0.0
  %1150 = vmatprep.subr.mxu0 0.0
  %1151 = vmatpush1.msra.mxu0 0.0
  %1152 = vmatprep.subr.mxu0 0.0
  %1153 = vmatpush1.msra.mxu0 0.0
  %1154 = vmatprep.subr.mxu0 0.0
  %1155 = vmatpush1.msra.mxu0 0.0
  %1156 = vmatprep.subr.mxu0 0.0
  %1157 = vmatpush1.msra.mxu0 0.0
  %1158 = vmatprep.subr.mxu0 0.0
  %1159 = vmatpush1.msra.mxu0 0.0
  %1160 = vmatprep.subr.mxu0 0.0
  %1161 = vmatpush1.msra.mxu0 0.0
  %1162 = vmatprep.subr.mxu0 0.0
  %1163 = vmatpush1.msra.mxu0 0.0
  %1164 = vmatprep.subr.mxu0 0.0
  %1165 = vmatpush1.msra.mxu0 0.0
  %1166 = vmatprep.subr.mxu0 0.0
  %1167 = vmatpush1.msra.mxu0 0.0
  %1168 = vmatprep.subr.mxu0 0.0
  %1169 = vmatpush1.msra.mxu0 0.0
  %1170 = vmatprep.subr.mxu0 0.0
  %1171 = vmatpush1.msra.mxu0 0.0
  %1172 = vmatprep.subr.mxu0 0.0
  %1173 = vmatpush1.msra.mxu0 0.0
  %1174 = vmatprep.subr.mxu0 0.0
  %1175 = vmatpush1.msra.mxu0 0.0
  %1176 = vmatprep.subr.mxu0 0.0
  %1177 = vmatpush1.msra.mxu0 0.0
  %1178 = vmatprep.subr.mxu0 0.0
  %1179 = vmatpush1.msra.mxu0 0.0
  %1180 = vmatprep.subr.mxu0 0.0
  %1181 = vmatpush1.msra.mxu0 0.0
  %1182 = vmatprep.subr.mxu0 0.0
  %1183 = vmatpush1.msra.mxu0 0.0
  %1184 = vmatprep.subr.mxu0 0.0
  %1185 = vmatpush1.msra.mxu0 0.0
  %1186 = vmatprep.subr.mxu0 0.0
  %1187 = vmatpush1.msra.mxu0 0.0
  %1188 = vmatprep.subr.mxu0 0.0
  %1189 = vmatpush1.msra.mxu0 0.0
  %1190 = vmatprep.subr.mxu0 0.0
  %1191 = vmatpush1.msra.mxu0 0.0
  %1192 = vmatprep.subr.mxu0 0.0
  %1193 = vmatpush1.msra.mxu0 0.0
  %1194 = vmatprep.subr.mxu0 0.0
  %1195 = vmatpush1.msra.mxu0 0.0
  %1196 = vmatprep.subr.mxu0 0.0
  %1197 = vmatpush1.msra.mxu0 0.0
  %1198 = vmatprep.subr.mxu0 0.0
  %1199 = vmatpush1.msra.mxu0 0.0
  %1200 = vmatprep.subr.mxu0 0.0
  %1201 = vmatpush1.msra.mxu0 0.0
  %1202 = vmatprep.subr.mxu0 0.0
  %1203 = vmatpush1.msra.mxu0 0.0
  %1204 = vmatprep.subr.mxu0 0.0
  %1205 = vmatpush1.msra.mxu0 0.0
  %1206 = vmatprep.subr.mxu0 0.0
  %1207 = vmatpush1.msra.mxu0 0.0
  %1208 = vmatprep.subr.mxu0 0.0
  %1209 = vmatpush1.msra.mxu0 0.0
  %1210 = vmatprep.mubr.f32.mxu0 0.0
  %1211 = vmatmul.mubr.f32.gmra.mrb[0].mxu0 %v1144
  %v1212 = vpop.f32.mrb[0].mxu0
  %v1213 = vadd.f32 0.0, %v1212
  %v1214 = vpop.f32.mrb[0].mxu0
  %1215 = vdwg.mxu0
  %v1216 = vrcp.pop %v1139
  %v1217 = vmul.f32 %v1213, %v1216
  %v1219 = vsel %vm342, %v1217, 0
  %1221 = vmatprep.subr.mxu0 0.0
  %1222 = vmatpush1.msra.mxu0 %v338
  %1223 = vmatprep.subr.mxu0 0.0
  %1224 = vmatpush1.msra.mxu0 0.0
  %1225 = vmatprep.subr.mxu0 0.0
  %1226 = vmatpush1.msra.mxu0 0.0
  %1227 = vmatprep.subr.mxu0 0.0
  %1228 = vmatpush1.msra.mxu0 0.0
  %1229 = vmatprep.subr.mxu0 0.0
  %1230 = vmatpush1.msra.mxu0 0.0
  %1231 = vmatprep.subr.mxu0 0.0
  %1232 = vmatpush1.msra.mxu0 0.0
  %1233 = vmatprep.subr.mxu0 0.0
  %1234 = vmatpush1.msra.mxu0 0.0
  %1235 = vmatprep.subr.mxu0 0.0
  %1236 = vmatpush1.msra.mxu0 0.0
  %1237 = vmatprep.subr.mxu0 0.0
  %1238 = vmatpush1.msra.mxu0 0.0
  %1239 = vmatprep.subr.mxu0 0.0
  %1240 = vmatpush1.msra.mxu0 0.0
  %1241 = vmatprep.subr.mxu0 0.0
  %1242 = vmatpush1.msra.mxu0 0.0
  %1243 = vmatprep.subr.mxu0 0.0
  %1244 = vmatpush1.msra.mxu0 0.0
  %1245 = vmatprep.subr.mxu0 0.0
  %1246 = vmatpush1.msra.mxu0 0.0
  %1247 = vmatprep.subr.mxu0 0.0
  %1248 = vmatpush1.msra.mxu0 0.0
  %1249 = vmatprep.subr.mxu0 0.0
  %1250 = vmatpush1.msra.mxu0 0.0
  %1251 = vmatprep.subr.mxu0 0.0
  %1252 = vmatpush1.msra.mxu0 0.0
  %1253 = vmatprep.subr.mxu0 0.0
  %1254 = vmatpush1.msra.mxu0 0.0
  %1255 = vmatprep.subr.mxu0 0.0
  %1256 = vmatpush1.msra.mxu0 0.0
  %1257 = vmatprep.subr.mxu0 0.0
  %1258 = vmatpush1.msra.mxu0 0.0
  %1259 = vmatprep.subr.mxu0 0.0
  %1260 = vmatpush1.msra.mxu0 0.0
  %1261 = vmatprep.subr.mxu0 0.0
  %1262 = vmatpush1.msra.mxu0 0.0
  %1263 = vmatprep.subr.mxu0 0.0
  %1264 = vmatpush1.msra.mxu0 0.0
  %1265 = vmatprep.subr.mxu0 0.0
  %1266 = vmatpush1.msra.mxu0 0.0
  %1267 = vmatprep.subr.mxu0 0.0
  %1268 = vmatpush1.msra.mxu0 0.0
  %1269 = vmatprep.subr.mxu0 0.0
  %1270 = vmatpush1.msra.mxu0 0.0
  %1271 = vmatprep.subr.mxu0 0.0
  %1272 = vmatpush1.msra.mxu0 0.0
  %1273 = vmatprep.subr.mxu0 0.0
  %1274 = vmatpush1.msra.mxu0 0.0
  %1275 = vmatprep.subr.mxu0 0.0
  %1276 = vmatpush1.msra.mxu0 0.0
  %1277 = vmatprep.subr.mxu0 0.0
  %1278 = vmatpush1.msra.mxu0 0.0
  %1279 = vmatprep.subr.mxu0 0.0
  %1280 = vmatpush1.msra.mxu0 0.0
  %1281 = vmatprep.subr.mxu0 0.0
  %1282 = vmatpush1.msra.mxu0 0.0
  %1283 = vmatprep.subr.mxu0 0.0
  %1284 = vmatpush1.msra.mxu0 0.0
  %1285 = vmatprep.mubr.f32.mxu0 0.0
  %1286 = vmatmul.mubr.f32.gmra.mrb[0].mxu0 %v1219
  %v1287 = vpop.f32.mrb[0].mxu0
  %v1288 = vadd.f32 0.0, %v1287
  %v1289 = vpop.f32.mrb[0].mxu0
  %1290 = vdwg.mxu0
  %v1291 = vadd.f32 %v1052, %v1288
  %1293 = vrot.lane.b32.xlu0 %v238, 96
  %v1294 = vpop.permute.xlu0 %1293
  %v1296 = vsel %vm342, %v242, 0
  %v1298 = vsel %vm342, %v1294, 0
  %1300 = vmatprep.subr.mxu0 0.0
  %1301 = vmatpush1.xpose.msra.mxu0 %v1298
  %1302 = vmatprep.subr.mxu0 0.0
  %1303 = vmatpush1.xpose.msra.mxu0 0.0
  %1304 = vmatprep.subr.mxu0 0.0
  %1305 = vmatpush1.xpose.msra.mxu0 0.0
  %1306 = vmatprep.subr.mxu0 0.0
  %1307 = vmatpush1.xpose.msra.mxu0 0.0
  %1308 = vmatprep.subr.mxu0 0.0
  %1309 = vmatpush1.xpose.msra.mxu0 0.0
  %1310 = vmatprep.subr.mxu0 0.0
  %1311 = vmatpush1.xpose.msra.mxu0 0.0
  %1312 = vmatprep.subr.mxu0 0.0
  %1313 = vmatpush1.xpose.msra.mxu0 0.0
  %1314 = vmatprep.subr.mxu0 0.0
  %1315 = vmatpush1.xpose.msra.mxu0 0.0
  %1316 = vmatprep.subr.mxu0 0.0
  %1317 = vmatpush1.xpose.msra.mxu0 0.0
  %1318 = vmatprep.subr.mxu0 0.0
  %1319 = vmatpush1.xpose.msra.mxu0 0.0
  %1320 = vmatprep.subr.mxu0 0.0
  %1321 = vmatpush1.xpose.msra.mxu0 0.0
  %1322 = vmatprep.subr.mxu0 0.0
  %1323 = vmatpush1.xpose.msra.mxu0 0.0
  %1324 = vmatprep.subr.mxu0 0.0
  %1325 = vmatpush1.xpose.msra.mxu0 0.0
  %1326 = vmatprep.subr.mxu0 0.0
  %1327 = vmatpush1.xpose.msra.mxu0 0.0
  %1328 = vmatprep.subr.mxu0 0.0
  %1329 = vmatpush1.xpose.msra.mxu0 0.0
  %1330 = vmatprep.subr.mxu0 0.0
  %1331 = vmatpush1.xpose.msra.mxu0 0.0
  %1332 = vmatprep.subr.mxu0 0.0
  %1333 = vmatpush1.xpose.msra.mxu0 0.0
  %1334 = vmatprep.subr.mxu0 0.0
  %1335 = vmatpush1.xpose.msra.mxu0 0.0
  %1336 = vmatprep.subr.mxu0 0.0
  %1337 = vmatpush1.xpose.msra.mxu0 0.0
  %1338 = vmatprep.subr.mxu0 0.0
  %1339 = vmatpush1.xpose.msra.mxu0 0.0
  %1340 = vmatprep.subr.mxu0 0.0
  %1341 = vmatpush1.xpose.msra.mxu0 0.0
  %1342 = vmatprep.subr.mxu0 0.0
  %1343 = vmatpush1.xpose.msra.mxu0 0.0
  %1344 = vmatprep.subr.mxu0 0.0
  %1345 = vmatpush1.xpose.msra.mxu0 0.0
  %1346 = vmatprep.subr.mxu0 0.0
  %1347 = vmatpush1.xpose.msra.mxu0 0.0
  %1348 = vmatprep.subr.mxu0 0.0
  %1349 = vmatpush1.xpose.msra.mxu0 0.0
  %1350 = vmatprep.subr.mxu0 0.0
  %1351 = vmatpush1.xpose.msra.mxu0 0.0
  %1352 = vmatprep.subr.mxu0 0.0
  %1353 = vmatpush1.xpose.msra.mxu0 0.0
  %1354 = vmatprep.subr.mxu0 0.0
  %1355 = vmatpush1.xpose.msra.mxu0 0.0
  %1356 = vmatprep.subr.mxu0 0.0
  %1357 = vmatpush1.xpose.msra.mxu0 0.0
  %1358 = vmatprep.subr.mxu0 0.0
  %1359 = vmatpush1.xpose.msra.mxu0 0.0
  %1360 = vmatprep.subr.mxu0 0.0
  %1361 = vmatpush1.xpose.msra.mxu0 0.0
  %1362 = vmatprep.subr.mxu0 0.0
  %1363 = vmatpush1.xpose.msra.mxu0 0.0
  %1364 = vmatprep.mubr.f32.mxu0 0.0
  %1365 = vmatmul.mubr.f32.gmra.mrb[0].mxu0 %v1296
  %v1366 = vpop.f32.mrb[0].mxu0
  %v1367 = vadd.f32 0.0, %v1366
  %v1368 = vpop.f32.mrb[0].mxu0
  %1369 = vdwg.mxu0
  %v1370 = vsel %vm342, %v1367, -inf
  %1371 = vmax.xlane.f32.xlu0 %v1370
  %v1372 = vpop.xlane.xlu0 %1371
  %v1373 = vsub.f32 %v1367, %v1372
  %v1374 = vmul.f32 %v1373, 1.442695
  %v1375 = vpow.pop %v1374
  %v1376 = vsel %vm342, %v1375, 0.0
  %1377 = vadd.xlane.f32.xlu0 %v1376
  %v1378 = vpop.xlane.xlu0 %1377
  %v1380 = vsel %vm342, %v1375, 0
  %1382 = vmatprep.subr.mxu0 0.0
  %1383 = vmatpush1.msra.mxu0 %v332
  %1384 = vmatprep.subr.mxu0 0.0
  %1385 = vmatpush1.msra.mxu0 0.0
  %1386 = vmatprep.subr.mxu0 0.0
  %1387 = vmatpush1.msra.mxu0 0.0
  %1388 = vmatprep.subr.mxu0 0.0
  %1389 = vmatpush1.msra.mxu0 0.0
  %1390 = vmatprep.subr.mxu0 0.0
  %1391 = vmatpush1.msra.mxu0 0.0
  %1392 = vmatprep.subr.mxu0 0.0
  %1393 = vmatpush1.msra.mxu0 0.0
  %1394 = vmatprep.subr.mxu0 0.0
  %1395 = vmatpush1.msra.mxu0 0.0
  %1396 = vmatprep.subr.mxu0 0.0
  %1397 = vmatpush1.msra.mxu0 0.0
  %1398 = vmatprep.subr.mxu0 0.0
  %1399 = vmatpush1.msra.mxu0 0.0
  %1400 = vmatprep.subr.mxu0 0.0
  %1401 = vmatpush1.msra.mxu0 0.0
  %1402 = vmatprep.subr.mxu0 0.0
  %1403 = vmatpush1.msra.mxu0 0.0
  %1404 = vmatprep.subr.mxu0 0.0
  %1405 = vmatpush1.msra.mxu0 0.0
  %1406 = vmatprep.subr.mxu0 0.0
  %1407 = vmatpush1.msra.mxu0 0.0
  %1408 = vmatprep.subr.mxu0 0.0
  %1409 = vmatpush1.msra.mxu0 0.0
  %1410 = vmatprep.subr.mxu0 0.0
  %1411 = vmatpush1.msra.mxu0 0.0
  %1412 = vmatprep.subr.mxu0 0.0
  %1413 = vmatpush1.msra.mxu0 0.0
  %1414 = vmatprep.subr.mxu0 0.0
  %1415 = vmatpush1.msra.mxu0 0.0
  %1416 = vmatprep.subr.mxu0 0.0
  %1417 = vmatpush1.msra.mxu0 0.0
  %1418 = vmatprep.subr.mxu0 0.0
  %1419 = vmatpush1.msra.mxu0 0.0
  %1420 = vmatprep.subr.mxu0 0.0
  %1421 = vmatpush1.msra.mxu0 0.0
  %1422 = vmatprep.subr.mxu0 0.0
  %1423 = vmatpush1.msra.mxu0 0.0
  %1424 = vmatprep.subr.mxu0 0.0
  %1425 = vmatpush1.msra.mxu0 0.0
  %1426 = vmatprep.subr.mxu0 0.0
  %1427 = vmatpush1.msra.mxu0 0.0
  %1428 = vmatprep.subr.mxu0 0.0
  %1429 = vmatpush1.msra.mxu0 0.0
  %1430 = vmatprep.subr.mxu0 0.0
  %1431 = vmatpush1.msra.mxu0 0.0
  %1432 = vmatprep.subr.mxu0 0.0
  %1433 = vmatpush1.msra.mxu0 0.0
  %1434 = vmatprep.subr.mxu0 0.0
  %1435 = vmatpush1.msra.mxu0 0.0
  %1436 = vmatprep.subr.mxu0 0.0
  %1437 = vmatpush1.msra.mxu0 0.0
  %1438 = vmatprep.subr.mxu0 0.0
  %1439 = vmatpush1.msra.mxu0 0.0
  %1440 = vmatprep.subr.mxu0 0.0
  %1441 = vmatpush1.msra.mxu0 0.0
  %1442 = vmatprep.subr.mxu0 0.0
  %1443 = vmatpush1.msra.mxu0 0.0
  %1444 = vmatprep.subr.mxu0 0.0
  %1445 = vmatpush1.msra.mxu0 0.0
  %1446 = vmatprep.mubr.f32.mxu0 0.0
  %1447 = vmatmul.mubr.f32.gmra.mrb[0].mxu0 %v1380
  %v1448 = vpop.f32.mrb[0].mxu0
  %v1449 = vadd.f32 0.0, %v1448
  %v1450 = vpop.f32.mrb[0].mxu0
  %1451 = vdwg.mxu0
  %v1452 = vrcp.pop %v1378
  %v1453 = vmul.f32 %v1449, %v1452
  %1454 = vrot.lane.b32.xlu0 %v242, 120
  %v1455 = vpop.permute.xlu0 %1454
  %1456 = vrot.lane.b32.xlu0 %v238, 88
  %v1457 = vpop.permute.xlu0 %1456
  %v1458 = vsel %vm342, %v1455, 0
  %v1460 = vsel %vm342, %v1457, 0
  %1462 = vmatprep.subr.mxu0 0.0
  %1463 = vmatpush1.xpose.msra.mxu0 %v1460
  %1464 = vmatprep.subr.mxu0 0.0
  %1465 = vmatpush1.xpose.msra.mxu0 0.0
  %1466 = vmatprep.subr.mxu0 0.0
  %1467 = vmatpush1.xpose.msra.mxu0 0.0
  %1468 = vmatprep.subr.mxu0 0.0
  %1469 = vmatpush1.xpose.msra.mxu0 0.0
  %1470 = vmatprep.subr.mxu0 0.0
  %1471 = vmatpush1.xpose.msra.mxu0 0.0
  %1472 = vmatprep.subr.mxu0 0.0
  %1473 = vmatpush1.xpose.msra.mxu0 0.0
  %1474 = vmatprep.subr.mxu0 0.0
  %1475 = vmatpush1.xpose.msra.mxu0 0.0
  %1476 = vmatprep.subr.mxu0 0.0
  %1477 = vmatpush1.xpose.msra.mxu0 0.0
  %1478 = vmatprep.subr.mxu0 0.0
  %1479 = vmatpush1.xpose.msra.mxu0 0.0
  %1480 = vmatprep.subr.mxu0 0.0
  %1481 = vmatpush1.xpose.msra.mxu0 0.0
  %1482 = vmatprep.subr.mxu0 0.0
  %1483 = vmatpush1.xpose.msra.mxu0 0.0
  %1484 = vmatprep.subr.mxu0 0.0
  %1485 = vmatpush1.xpose.msra.mxu0 0.0
  %1486 = vmatprep.subr.mxu0 0.0
  %1487 = vmatpush1.xpose.msra.mxu0 0.0
  %1488 = vmatprep.subr.mxu0 0.0
  %1489 = vmatpush1.xpose.msra.mxu0 0.0
  %1490 = vmatprep.subr.mxu0 0.0
  %1491 = vmatpush1.xpose.msra.mxu0 0.0
  %1492 = vmatprep.subr.mxu0 0.0
  %1493 = vmatpush1.xpose.msra.mxu0 0.0
  %1494 = vmatprep.subr.mxu0 0.0
  %1495 = vmatpush1.xpose.msra.mxu0 0.0
  %1496 = vmatprep.subr.mxu0 0.0
  %1497 = vmatpush1.xpose.msra.mxu0 0.0
  %1498 = vmatprep.subr.mxu0 0.0
  %1499 = vmatpush1.xpose.msra.mxu0 0.0
  %1500 = vmatprep.subr.mxu0 0.0
  %1501 = vmatpush1.xpose.msra.mxu0 0.0
  %1502 = vmatprep.subr.mxu0 0.0
  %1503 = vmatpush1.xpose.msra.mxu0 0.0
  %1504 = vmatprep.subr.mxu0 0.0
  %1505 = vmatpush1.xpose.msra.mxu0 0.0
  %1506 = vmatprep.subr.mxu0 0.0
  %1507 = vmatpush1.xpose.msra.mxu0 0.0
  %1508 = vmatprep.subr.mxu0 0.0
  %1509 = vmatpush1.xpose.msra.mxu0 0.0
  %1510 = vmatprep.subr.mxu0 0.0
  %1511 = vmatpush1.xpose.msra.mxu0 0.0
  %1512 = vmatprep.subr.mxu0 0.0
  %1513 = vmatpush1.xpose.msra.mxu0 0.0
  %1514 = vmatprep.subr.mxu0 0.0
  %1515 = vmatpush1.xpose.msra.mxu0 0.0
  %1516 = vmatprep.subr.mxu0 0.0
  %1517 = vmatpush1.xpose.msra.mxu0 0.0
  %1518 = vmatprep.subr.mxu0 0.0
  %1519 = vmatpush1.xpose.msra.mxu0 0.0
  %1520 = vmatprep.subr.mxu0 0.0
  %1521 = vmatpush1.xpose.msra.mxu0 0.0
  %1522 = vmatprep.subr.mxu0 0.0
  %1523 = vmatpush1.xpose.msra.mxu0 0.0
  %1524 = vmatprep.subr.mxu0 0.0
  %1525 = vmatpush1.xpose.msra.mxu0 0.0
  %1526 = vmatprep.mubr.f32.mxu0 0.0
  %1527 = vmatmul.mubr.f32.gmra.mrb[0].mxu0 %v1458
  %v1528 = vpop.f32.mrb[0].mxu0
  %v1529 = vadd.f32 0.0, %v1528
  %v1530 = vpop.f32.mrb[0].mxu0
  %1531 = vdwg.mxu0
  %v1532 = vsel %vm342, %v1529, -inf
  %1533 = vmax.xlane.f32.xlu0 %v1532
  %v1534 = vpop.xlane.xlu0 %1533
  %v1535 = vsub.f32 %v1529, %v1534
  %v1536 = vmul.f32 %v1535, 1.442695
  %v1537 = vpow.pop %v1536
  %v1538 = vsel %vm342, %v1537, 0.0
  %1539 = vadd.xlane.f32.xlu0 %v1538
  %v1540 = vpop.xlane.xlu0 %1539
  %1542 = vrot.lane.b32.xlu0 %v332, 120
  %v1543 = vpop.permute.xlu0 %1542
  %v1546 = vsel %vm342, %v1537, 0
  %1548 = vmatprep.subr.mxu0 0.0
  %1549 = vmatpush1.msra.mxu0 %v1543
  %1550 = vmatprep.subr.mxu0 0.0
  %1551 = vmatpush1.msra.mxu0 0.0
  %1552 = vmatprep.subr.mxu0 0.0
  %1553 = vmatpush1.msra.mxu0 0.0
  %1554 = vmatprep.subr.mxu0 0.0
  %1555 = vmatpush1.msra.mxu0 0.0
  %1556 = vmatprep.subr.mxu0 0.0
  %1557 = vmatpush1.msra.mxu0 0.0
  %1558 = vmatprep.subr.mxu0 0.0
  %1559 = vmatpush1.msra.mxu0 0.0
  %1560 = vmatprep.subr.mxu0 0.0
  %1561 = vmatpush1.msra.mxu0 0.0
  %1562 = vmatprep.subr.mxu0 0.0
  %1563 = vmatpush1.msra.mxu0 0.0
  %1564 = vmatprep.subr.mxu0 0.0
  %1565 = vmatpush1.msra.mxu0 0.0
  %1566 = vmatprep.subr.mxu0 0.0
  %1567 = vmatpush1.msra.mxu0 0.0
  %1568 = vmatprep.subr.mxu0 0.0
  %1569 = vmatpush1.msra.mxu0 0.0
  %1570 = vmatprep.subr.mxu0 0.0
  %1571 = vmatpush1.msra.mxu0 0.0
  %1572 = vmatprep.subr.mxu0 0.0
  %1573 = vmatpush1.msra.mxu0 0.0
  %1574 = vmatprep.subr.mxu0 0.0
  %1575 = vmatpush1.msra.mxu0 0.0
  %1576 = vmatprep.subr.mxu0 0.0
  %1577 = vmatpush1.msra.mxu0 0.0
  %1578 = vmatprep.subr.mxu0 0.0
  %1579 = vmatpush1.msra.mxu0 0.0
  %1580 = vmatprep.subr.mxu0 0.0
  %1581 = vmatpush1.msra.mxu0 0.0
  %1582 = vmatprep.subr.mxu0 0.0
  %1583 = vmatpush1.msra.mxu0 0.0
  %1584 = vmatprep.subr.mxu0 0.0
  %1585 = vmatpush1.msra.mxu0 0.0
  %1586 = vmatprep.subr.mxu0 0.0
  %1587 = vmatpush1.msra.mxu0 0.0
  %1588 = vmatprep.subr.mxu0 0.0
  %1589 = vmatpush1.msra.mxu0 0.0
  %1590 = vmatprep.subr.mxu0 0.0
  %1591 = vmatpush1.msra.mxu0 0.0
  %1592 = vmatprep.subr.mxu0 0.0
  %1593 = vmatpush1.msra.mxu0 0.0
  %1594 = vmatprep.subr.mxu0 0.0
  %1595 = vmatpush1.msra.mxu0 0.0
  %1596 = vmatprep.subr.mxu0 0.0
  %1597 = vmatpush1.msra.mxu0 0.0
  %1598 = vmatprep.subr.mxu0 0.0
  %1599 = vmatpush1.msra.mxu0 0.0
  %1600 = vmatprep.subr.mxu0 0.0
  %1601 = vmatpush1.msra.mxu0 0.0
  %1602 = vmatprep.subr.mxu0 0.0
  %1603 = vmatpush1.msra.mxu0 0.0
  %1604 = vmatprep.subr.mxu0 0.0
  %1605 = vmatpush1.msra.mxu0 0.0
  %1606 = vmatprep.subr.mxu0 0.0
  %1607 = vmatpush1.msra.mxu0 0.0
  %1608 = vmatprep.subr.mxu0 0.0
  %1609 = vmatpush1.msra.mxu0 0.0
  %1610 = vmatprep.subr.mxu0 0.0
  %1611 = vmatpush1.msra.mxu0 0.0
  %1612 = vmatprep.mubr.f32.mxu0 0.0
  %1613 = vmatmul.mubr.f32.gmra.mrb[0].mxu0 %v1546
  %v1614 = vpop.f32.mrb[0].mxu0
  %v1615 = vadd.f32 0.0, %v1614
  %v1616 = vpop.f32.mrb[0].mxu0
  %1617 = vdwg.mxu0
  %v1618 = vrcp.pop %v1540
  %v1619 = vmul.f32 %v1615, %v1618
  %v1621 = vsel %vm342, %v1619, 0
  %1623 = vmatprep.subr.mxu0 0.0
  %1624 = vmatpush1.msra.mxu0 %v336
  %1625 = vmatprep.subr.mxu0 0.0
  %1626 = vmatpush1.msra.mxu0 0.0
  %1627 = vmatprep.subr.mxu0 0.0
  %1628 = vmatpush1.msra.mxu0 0.0
  %1629 = vmatprep.subr.mxu0 0.0
  %1630 = vmatpush1.msra.mxu0 0.0
  %1631 = vmatprep.subr.mxu0 0.0
  %1632 = vmatpush1.msra.mxu0 0.0
  %1633 = vmatprep.subr.mxu0 0.0
  %1634 = vmatpush1.msra.mxu0 0.0
  %1635 = vmatprep.subr.mxu0 0.0
  %1636 = vmatpush1.msra.mxu0 0.0
  %1637 = vmatprep.subr.mxu0 0.0
  %1638 = vmatpush1.msra.mxu0 0.0
  %1639 = vmatprep.subr.mxu0 0.0
  %1640 = vmatpush1.msra.mxu0 0.0
  %1641 = vmatprep.subr.mxu0 0.0
  %1642 = vmatpush1.msra.mxu0 0.0
  %1643 = vmatprep.subr.mxu0 0.0
  %1644 = vmatpush1.msra.mxu0 0.0
  %1645 = vmatprep.subr.mxu0 0.0
  %1646 = vmatpush1.msra.mxu0 0.0
  %1647 = vmatprep.subr.mxu0 0.0
  %1648 = vmatpush1.msra.mxu0 0.0
  %1649 = vmatprep.subr.mxu0 0.0
  %1650 = vmatpush1.msra.mxu0 0.0
  %1651 = vmatprep.subr.mxu0 0.0
  %1652 = vmatpush1.msra.mxu0 0.0
  %1653 = vmatprep.subr.mxu0 0.0
  %1654 = vmatpush1.msra.mxu0 0.0
  %1655 = vmatprep.subr.mxu0 0.0
  %1656 = vmatpush1.msra.mxu0 0.0
  %1657 = vmatprep.subr.mxu0 0.0
  %1658 = vmatpush1.msra.mxu0 0.0
  %1659 = vmatprep.subr.mxu0 0.0
  %1660 = vmatpush1.msra.mxu0 0.0
  %1661 = vmatprep.subr.mxu0 0.0
  %1662 = vmatpush1.msra.mxu0 0.0
  %1663 = vmatprep.subr.mxu0 0.0
  %1664 = vmatpush1.msra.mxu0 0.0
  %1665 = vmatprep.subr.mxu0 0.0
  %1666 = vmatpush1.msra.mxu0 0.0
  %1667 = vmatprep.subr.mxu0 0.0
  %1668 = vmatpush1.msra.mxu0 0.0
  %1669 = vmatprep.subr.mxu0 0.0
  %1670 = vmatpush1.msra.mxu0 0.0
  %1671 = vmatprep.subr.mxu0 0.0
  %1672 = vmatpush1.msra.mxu0 0.0
  %1673 = vmatprep.subr.mxu0 0.0
  %1674 = vmatpush1.msra.mxu0 0.0
  %1675 = vmatprep.subr.mxu0 0.0
  %1676 = vmatpush1.msra.mxu0 0.0
  %1677 = vmatprep.subr.mxu0 0.0
  %1678 = vmatpush1.msra.mxu0 0.0
  %1679 = vmatprep.subr.mxu0 0.0
  %1680 = vmatpush1.msra.mxu0 0.0
  %1681 = vmatprep.subr.mxu0 0.0
  %1682 = vmatpush1.msra.mxu0 0.0
  %1683 = vmatprep.subr.mxu0 0.0
  %1684 = vmatpush1.msra.mxu0 0.0
  %1685 = vmatprep.subr.mxu0 0.0
  %1686 = vmatpush1.msra.mxu0 0.0
  %1687 = vmatprep.mubr.f32.mxu0 0.0
  %1688 = vmatmul.mubr.f32.gmra.mrb[0].mxu0 %v1621
  %v1689 = vpop.f32.mrb[0].mxu0
  %v1690 = vadd.f32 0.0, %v1689
  %v1691 = vpop.f32.mrb[0].mxu0
  %1692 = vdwg.mxu0
  %v1694 = vsel %vm342, %v1453, 0
  %1696 = vmatprep.subr.mxu0 0.0
  %1697 = vmatpush1.msra.mxu0 %v335
  %1698 = vmatprep.subr.mxu0 0.0
  %1699 = vmatpush1.msra.mxu0 0.0
  %1700 = vmatprep.subr.mxu0 0.0
  %1701 = vmatpush1.msra.mxu0 0.0
  %1702 = vmatprep.subr.mxu0 0.0
  %1703 = vmatpush1.msra.mxu0 0.0
  %1704 = vmatprep.subr.mxu0 0.0
  %1705 = vmatpush1.msra.mxu0 0.0
  %1706 = vmatprep.subr.mxu0 0.0
  %1707 = vmatpush1.msra.mxu0 0.0
  %1708 = vmatprep.subr.mxu0 0.0
  %1709 = vmatpush1.msra.mxu0 0.0
  %1710 = vmatprep.subr.mxu0 0.0
  %1711 = vmatpush1.msra.mxu0 0.0
  %1712 = vmatprep.subr.mxu0 0.0
  %1713 = vmatpush1.msra.mxu0 0.0
  %1714 = vmatprep.subr.mxu0 0.0
  %1715 = vmatpush1.msra.mxu0 0.0
  %1716 = vmatprep.subr.mxu0 0.0
  %1717 = vmatpush1.msra.mxu0 0.0
  %1718 = vmatprep.subr.mxu0 0.0
  %1719 = vmatpush1.msra.mxu0 0.0
  %1720 = vmatprep.subr.mxu0 0.0
  %1721 = vmatpush1.msra.mxu0 0.0
  %1722 = vmatprep.subr.mxu0 0.0
  %1723 = vmatpush1.msra.mxu0 0.0
  %1724 = vmatprep.subr.mxu0 0.0
  %1725 = vmatpush1.msra.mxu0 0.0
  %1726 = vmatprep.subr.mxu0 0.0
  %1727 = vmatpush1.msra.mxu0 0.0
  %1728 = vmatprep.subr.mxu0 0.0
  %1729 = vmatpush1.msra.mxu0 0.0
  %1730 = vmatprep.subr.mxu0 0.0
  %1731 = vmatpush1.msra.mxu0 0.0
  %1732 = vmatprep.subr.mxu0 0.0
  %1733 = vmatpush1.msra.mxu0 0.0
  %1734 = vmatprep.subr.mxu0 0.0
  %1735 = vmatpush1.msra.mxu0 0.0
  %1736 = vmatprep.subr.mxu0 0.0
  %1737 = vmatpush1.msra.mxu0 0.0
  %1738 = vmatprep.subr.mxu0 0.0
  %1739 = vmatpush1.msra.mxu0 0.0
  %1740 = vmatprep.subr.mxu0 0.0
  %1741 = vmatpush1.msra.mxu0 0.0
  %1742 = vmatprep.subr.mxu0 0.0
  %1743 = vmatpush1.msra.mxu0 0.0
  %1744 = vmatprep.subr.mxu0 0.0
  %1745 = vmatpush1.msra.mxu0 0.0
  %1746 = vmatprep.subr.mxu0 0.0
  %1747 = vmatpush1.msra.mxu0 0.0
  %1748 = vmatprep.subr.mxu0 0.0
  %1749 = vmatpush1.msra.mxu0 0.0
  %1750 = vmatprep.subr.mxu0 0.0
  %1751 = vmatpush1.msra.mxu0 0.0
  %1752 = vmatprep.subr.mxu0 0.0
  %1753 = vmatpush1.msra.mxu0 0.0
  %1754 = vmatprep.subr.mxu0 0.0
  %1755 = vmatpush1.msra.mxu0 0.0
  %1756 = vmatprep.subr.mxu0 0.0
  %1757 = vmatpush1.msra.mxu0 0.0
  %1758 = vmatprep.subr.mxu0 0.0
  %1759 = vmatpush1.msra.mxu0 0.0
  %1760 = vmatprep.mubr.f32.mxu0 0.0
  %1761 = vmatmul.mubr.f32.gmra.mrb[0].mxu0 %v1694
  %v1762 = vpop.f32.mrb[0].mxu0
  %v1763 = vadd.f32 %v1690, %v1762
  %v1764 = vpop.f32.mrb[0].mxu0
  %1765 = vdwg.mxu0
  %1766 = vrot.lane.b32.xlu0 %v242, 112
  %v1767 = vpop.permute.xlu0 %1766
  %1768 = vrot.lane.b32.xlu0 %v238, 80
  %v1769 = vpop.permute.xlu0 %1768
  %v1770 = vsel %vm342, %v1767, 0
  %v1772 = vsel %vm342, %v1769, 0
  %1774 = vmatprep.subr.mxu0 0.0
  %1775 = vmatpush1.xpose.msra.mxu0 %v1772
  %1776 = vmatprep.subr.mxu0 0.0
  %1777 = vmatpush1.xpose.msra.mxu0 0.0
  %1778 = vmatprep.subr.mxu0 0.0
  %1779 = vmatpush1.xpose.msra.mxu0 0.0
  %1780 = vmatprep.subr.mxu0 0.0
  %1781 = vmatpush1.xpose.msra.mxu0 0.0
  %1782 = vmatprep.subr.mxu0 0.0
  %1783 = vmatpush1.xpose.msra.mxu0 0.0
  %1784 = vmatprep.subr.mxu0 0.0
  %1785 = vmatpush1.xpose.msra.mxu0 0.0
  %1786 = vmatprep.subr.mxu0 0.0
  %1787 = vmatpush1.xpose.msra.mxu0 0.0
  %1788 = vmatprep.subr.mxu0 0.0
  %1789 = vmatpush1.xpose.msra.mxu0 0.0
  %1790 = vmatprep.subr.mxu0 0.0
  %1791 = vmatpush1.xpose.msra.mxu0 0.0
  %1792 = vmatprep.subr.mxu0 0.0
  %1793 = vmatpush1.xpose.msra.mxu0 0.0
  %1794 = vmatprep.subr.mxu0 0.0
  %1795 = vmatpush1.xpose.msra.mxu0 0.0
  %1796 = vmatprep.subr.mxu0 0.0
  %1797 = vmatpush1.xpose.msra.mxu0 0.0
  %1798 = vmatprep.subr.mxu0 0.0
  %1799 = vmatpush1.xpose.msra.mxu0 0.0
  %1800 = vmatprep.subr.mxu0 0.0
  %1801 = vmatpush1.xpose.msra.mxu0 0.0
  %1802 = vmatprep.subr.mxu0 0.0
  %1803 = vmatpush1.xpose.msra.mxu0 0.0
  %1804 = vmatprep.subr.mxu0 0.0
  %1805 = vmatpush1.xpose.msra.mxu0 0.0
  %1806 = vmatprep.subr.mxu0 0.0
  %1807 = vmatpush1.xpose.msra.mxu0 0.0
  %1808 = vmatprep.subr.mxu0 0.0
  %1809 = vmatpush1.xpose.msra.mxu0 0.0
  %1810 = vmatprep.subr.mxu0 0.0
  %1811 = vmatpush1.xpose.msra.mxu0 0.0
  %1812 = vmatprep.subr.mxu0 0.0
  %1813 = vmatpush1.xpose.msra.mxu0 0.0
  %1814 = vmatprep.subr.mxu0 0.0
  %1815 = vmatpush1.xpose.msra.mxu0 0.0
  %1816 = vmatprep.subr.mxu0 0.0
  %1817 = vmatpush1.xpose.msra.mxu0 0.0
  %1818 = vmatprep.subr.mxu0 0.0
  %1819 = vmatpush1.xpose.msra.mxu0 0.0
  %1820 = vmatprep.subr.mxu0 0.0
  %1821 = vmatpush1.xpose.msra.mxu0 0.0
  %1822 = vmatprep.subr.mxu0 0.0
  %1823 = vmatpush1.xpose.msra.mxu0 0.0
  %1824 = vmatprep.subr.mxu0 0.0
  %1825 = vmatpush1.xpose.msra.mxu0 0.0
  %1826 = vmatprep.subr.mxu0 0.0
  %1827 = vmatpush1.xpose.msra.mxu0 0.0
  %1828 = vmatprep.subr.mxu0 0.0
  %1829 = vmatpush1.xpose.msra.mxu0 0.0
  %1830 = vmatprep.subr.mxu0 0.0
  %1831 = vmatpush1.xpose.msra.mxu0 0.0
  %1832 = vmatprep.subr.mxu0 0.0
  %1833 = vmatpush1.xpose.msra.mxu0 0.0
  %1834 = vmatprep.subr.mxu0 0.0
  %1835 = vmatpush1.xpose.msra.mxu0 0.0
  %1836 = vmatprep.subr.mxu0 0.0
  %1837 = vmatpush1.xpose.msra.mxu0 0.0
  %1838 = vmatprep.mubr.f32.mxu0 0.0
  %1839 = vmatmul.mubr.f32.gmra.mrb[0].mxu0 %v1770
  %v1840 = vpop.f32.mrb[0].mxu0
  %v1841 = vadd.f32 0.0, %v1840
  %v1842 = vpop.f32.mrb[0].mxu0
  %1843 = vdwg.mxu0
  %v1844 = vsel %vm342, %v1841, -inf
  %1845 = vmax.xlane.f32.xlu0 %v1844
  %v1846 = vpop.xlane.xlu0 %1845
  %v1847 = vsub.f32 %v1841, %v1846
  %v1848 = vmul.f32 %v1847, 1.442695
  %v1849 = vpow.pop %v1848
  %v1850 = vsel %vm342, %v1849, 0.0
  %1851 = vadd.xlane.f32.xlu0 %v1850
  %v1852 = vpop.xlane.xlu0 %1851
  %1853 = vrot.lane.b32.xlu0 %v332, 112
  %v1854 = vpop.permute.xlu0 %1853
  %v1857 = vsel %vm342, %v1849, 0
  %1859 = vmatprep.subr.mxu0 0.0
  %1860 = vmatpush1.msra.mxu0 %v1854
  %1861 = vmatprep.subr.mxu0 0.0
  %1862 = vmatpush1.msra.mxu0 0.0
  %1863 = vmatprep.subr.mxu0 0.0
  %1864 = vmatpush1.msra.mxu0 0.0
  %1865 = vmatprep.subr.mxu0 0.0
  %1866 = vmatpush1.msra.mxu0 0.0
  %1867 = vmatprep.subr.mxu0 0.0
  %1868 = vmatpush1.msra.mxu0 0.0
  %1869 = vmatprep.subr.mxu0 0.0
  %1870 = vmatpush1.msra.mxu0 0.0
  %1871 = vmatprep.subr.mxu0 0.0
  %1872 = vmatpush1.msra.mxu0 0.0
  %1873 = vmatprep.subr.mxu0 0.0
  %1874 = vmatpush1.msra.mxu0 0.0
  %1875 = vmatprep.subr.mxu0 0.0
  %1876 = vmatpush1.msra.mxu0 0.0
  %1877 = vmatprep.subr.mxu0 0.0
  %1878 = vmatpush1.msra.mxu0 0.0
  %1879 = vmatprep.subr.mxu0 0.0
  %1880 = vmatpush1.msra.mxu0 0.0
  %1881 = vmatprep.subr.mxu0 0.0
  %1882 = vmatpush1.msra.mxu0 0.0
  %1883 = vmatprep.subr.mxu0 0.0
  %1884 = vmatpush1.msra.mxu0 0.0
  %1885 = vmatprep.subr.mxu0 0.0
  %1886 = vmatpush1.msra.mxu0 0.0
  %1887 = vmatprep.subr.mxu0 0.0
  %1888 = vmatpush1.msra.mxu0 0.0
  %1889 = vmatprep.subr.mxu0 0.0
  %1890 = vmatpush1.msra.mxu0 0.0
  %1891 = vmatprep.subr.mxu0 0.0
  %1892 = vmatpush1.msra.mxu0 0.0
  %1893 = vmatprep.subr.mxu0 0.0
  %1894 = vmatpush1.msra.mxu0 0.0
  %1895 = vmatprep.subr.mxu0 0.0
  %1896 = vmatpush1.msra.mxu0 0.0
  %1897 = vmatprep.subr.mxu0 0.0
  %1898 = vmatpush1.msra.mxu0 0.0
  %1899 = vmatprep.subr.mxu0 0.0
  %1900 = vmatpush1.msra.mxu0 0.0
  %1901 = vmatprep.subr.mxu0 0.0
  %1902 = vmatpush1.msra.mxu0 0.0
  %1903 = vmatprep.subr.mxu0 0.0
  %1904 = vmatpush1.msra.mxu0 0.0
  %1905 = vmatprep.subr.mxu0 0.0
  %1906 = vmatpush1.msra.mxu0 0.0
  %1907 = vmatprep.subr.mxu0 0.0
  %1908 = vmatpush1.msra.mxu0 0.0
  %1909 = vmatprep.subr.mxu0 0.0
  %1910 = vmatpush1.msra.mxu0 0.0
  %1911 = vmatprep.subr.mxu0 0.0
  %1912 = vmatpush1.msra.mxu0 0.0
  %1913 = vmatprep.subr.mxu0 0.0
  %1914 = vmatpush1.msra.mxu0 0.0
  %1915 = vmatprep.subr.mxu0 0.0
  %1916 = vmatpush1.msra.mxu0 0.0
  %1917 = vmatprep.subr.mxu0 0.0
  %1918 = vmatpush1.msra.mxu0 0.0
  %1919 = vmatprep.subr.mxu0 0.0
  %1920 = vmatpush1.msra.mxu0 0.0
  %1921 = vmatprep.subr.mxu0 0.0
  %1922 = vmatpush1.msra.mxu0 0.0
  %1923 = vmatprep.mubr.f32.mxu0 0.0
  %1924 = vmatmul.mubr.f32.gmra.mrb[0].mxu0 %v1857
  %v1925 = vpop.f32.mrb[0].mxu0
  %v1926 = vadd.f32 0.0, %v1925
  %v1927 = vpop.f32.mrb[0].mxu0
  %1928 = vdwg.mxu0
  %v1929 = vrcp.pop %v1852
  %v1930 = vmul.f32 %v1926, %v1929
  %v1932 = vsel %vm342, %v1930, 0
  %1934 = vmatprep.subr.mxu0 0.0
  %1935 = vmatpush1.msra.mxu0 %v337
  %1936 = vmatprep.subr.mxu0 0.0
  %1937 = vmatpush1.msra.mxu0 0.0
  %1938 = vmatprep.subr.mxu0 0.0
  %1939 = vmatpush1.msra.mxu0 0.0
  %1940 = vmatprep.subr.mxu0 0.0
  %1941 = vmatpush1.msra.mxu0 0.0
  %1942 = vmatprep.subr.mxu0 0.0
  %1943 = vmatpush1.msra.mxu0 0.0
  %1944 = vmatprep.subr.mxu0 0.0
  %1945 = vmatpush1.msra.mxu0 0.0
  %1946 = vmatprep.subr.mxu0 0.0
  %1947 = vmatpush1.msra.mxu0 0.0
  %1948 = vmatprep.subr.mxu0 0.0
  %1949 = vmatpush1.msra.mxu0 0.0
  %1950 = vmatprep.subr.mxu0 0.0
  %1951 = vmatpush1.msra.mxu0 0.0
  %1952 = vmatprep.subr.mxu0 0.0
  %1953 = vmatpush1.msra.mxu0 0.0
  %1954 = vmatprep.subr.mxu0 0.0
  %1955 = vmatpush1.msra.mxu0 0.0
  %1956 = vmatprep.subr.mxu0 0.0
  %1957 = vmatpush1.msra.mxu0 0.0
  %1958 = vmatprep.subr.mxu0 0.0
  %1959 = vmatpush1.msra.mxu0 0.0
  %1960 = vmatprep.subr.mxu0 0.0
  %1961 = vmatpush1.msra.mxu0 0.0
  %1962 = vmatprep.subr.mxu0 0.0
  %1963 = vmatpush1.msra.mxu0 0.0
  %1964 = vmatprep.subr.mxu0 0.0
  %1965 = vmatpush1.msra.mxu0 0.0
  %1966 = vmatprep.subr.mxu0 0.0
  %1967 = vmatpush1.msra.mxu0 0.0
  %1968 = vmatprep.subr.mxu0 0.0
  %1969 = vmatpush1.msra.mxu0 0.0
  %1970 = vmatprep.subr.mxu0 0.0
  %1971 = vmatpush1.msra.mxu0 0.0
  %1972 = vmatprep.subr.mxu0 0.0
  %1973 = vmatpush1.msra.mxu0 0.0
  %1974 = vmatprep.subr.mxu0 0.0
  %1975 = vmatpush1.msra.mxu0 0.0
  %1976 = vmatprep.subr.mxu0 0.0
  %1977 = vmatpush1.msra.mxu0 0.0
  %1978 = vmatprep.subr.mxu0 0.0
  %1979 = vmatpush1.msra.mxu0 0.0
  %1980 = vmatprep.subr.mxu0 0.0
  %1981 = vmatpush1.msra.mxu0 0.0
  %1982 = vmatprep.subr.mxu0 0.0
  %1983 = vmatpush1.msra.mxu0 0.0
  %1984 = vmatprep.subr.mxu0 0.0
  %1985 = vmatpush1.msra.mxu0 0.0
  %1986 = vmatprep.subr.mxu0 0.0
  %1987 = vmatpush1.msra.mxu0 0.0
  %1988 = vmatprep.subr.mxu0 0.0
  %1989 = vmatpush1.msra.mxu0 0.0
  %1990 = vmatprep.subr.mxu0 0.0
  %1991 = vmatpush1.msra.mxu0 0.0
  %1992 = vmatprep.subr.mxu0 0.0
  %1993 = vmatpush1.msra.mxu0 0.0
  %1994 = vmatprep.subr.mxu0 0.0
  %1995 = vmatpush1.msra.mxu0 0.0
  %1996 = vmatprep.subr.mxu0 0.0
  %1997 = vmatpush1.msra.mxu0 0.0
  %1998 = vmatprep.mubr.f32.mxu0 0.0
  %1999 = vmatmul.mubr.f32.gmra.mrb[0].mxu0 %v1932
  %v2000 = vpop.f32.mrb[0].mxu0
  %v2001 = vadd.f32 0.0, %v2000
  %v2002 = vpop.f32.mrb[0].mxu0
  %2003 = vdwg.mxu0
  %v2004 = vadd.f32 %v1763, %v2001
  %2005 = vrot.lane.b32.xlu0 %v242, 104
  %v2006 = vpop.permute.xlu0 %2005
  %2007 = vrot.lane.b32.xlu0 %v238, 72
  %v2008 = vpop.permute.xlu0 %2007
  %v2009 = vsel %vm342, %v2006, 0
  %v2011 = vsel %vm342, %v2008, 0
  %2013 = vmatprep.subr.mxu0 0.0
  %2014 = vmatpush1.xpose.msra.mxu0 %v2011
  %2015 = vmatprep.subr.mxu0 0.0
  %2016 = vmatpush1.xpose.msra.mxu0 0.0
  %2017 = vmatprep.subr.mxu0 0.0
  %2018 = vmatpush1.xpose.msra.mxu0 0.0
  %2019 = vmatprep.subr.mxu0 0.0
  %2020 = vmatpush1.xpose.msra.mxu0 0.0
  %2021 = vmatprep.subr.mxu0 0.0
  %2022 = vmatpush1.xpose.msra.mxu0 0.0
  %2023 = vmatprep.subr.mxu0 0.0
  %2024 = vmatpush1.xpose.msra.mxu0 0.0
  %2025 = vmatprep.subr.mxu0 0.0
  %2026 = vmatpush1.xpose.msra.mxu0 0.0
  %2027 = vmatprep.subr.mxu0 0.0
  %2028 = vmatpush1.xpose.msra.mxu0 0.0
  %2029 = vmatprep.subr.mxu0 0.0
  %2030 = vmatpush1.xpose.msra.mxu0 0.0
  %2031 = vmatprep.subr.mxu0 0.0
  %2032 = vmatpush1.xpose.msra.mxu0 0.0
  %2033 = vmatprep.subr.mxu0 0.0
  %2034 = vmatpush1.xpose.msra.mxu0 0.0
  %2035 = vmatprep.subr.mxu0 0.0
  %2036 = vmatpush1.xpose.msra.mxu0 0.0
  %2037 = vmatprep.subr.mxu0 0.0
  %2038 = vmatpush1.xpose.msra.mxu0 0.0
  %2039 = vmatprep.subr.mxu0 0.0
  %2040 = vmatpush1.xpose.msra.mxu0 0.0
  %2041 = vmatprep.subr.mxu0 0.0
  %2042 = vmatpush1.xpose.msra.mxu0 0.0
  %2043 = vmatprep.subr.mxu0 0.0
  %2044 = vmatpush1.xpose.msra.mxu0 0.0
  %2045 = vmatprep.subr.mxu0 0.0
  %2046 = vmatpush1.xpose.msra.mxu0 0.0
  %2047 = vmatprep.subr.mxu0 0.0
  %2048 = vmatpush1.xpose.msra.mxu0 0.0
  %2049 = vmatprep.subr.mxu0 0.0
  %2050 = vmatpush1.xpose.msra.mxu0 0.0
  %2051 = vmatprep.subr.mxu0 0.0
  %2052 = vmatpush1.xpose.msra.mxu0 0.0
  %2053 = vmatprep.subr.mxu0 0.0
  %2054 = vmatpush1.xpose.msra.mxu0 0.0
  %2055 = vmatprep.subr.mxu0 0.0
  %2056 = vmatpush1.xpose.msra.mxu0 0.0
  %2057 = vmatprep.subr.mxu0 0.0
  %2058 = vmatpush1.xpose.msra.mxu0 0.0
  %2059 = vmatprep.subr.mxu0 0.0
  %2060 = vmatpush1.xpose.msra.mxu0 0.0
  %2061 = vmatprep.subr.mxu0 0.0
  %2062 = vmatpush1.xpose.msra.mxu0 0.0
  %2063 = vmatprep.subr.mxu0 0.0
  %2064 = vmatpush1.xpose.msra.mxu0 0.0
  %2065 = vmatprep.subr.mxu0 0.0
  %2066 = vmatpush1.xpose.msra.mxu0 0.0
  %2067 = vmatprep.subr.mxu0 0.0
  %2068 = vmatpush1.xpose.msra.mxu0 0.0
  %2069 = vmatprep.subr.mxu0 0.0
  %2070 = vmatpush1.xpose.msra.mxu0 0.0
  %2071 = vmatprep.subr.mxu0 0.0
  %2072 = vmatpush1.xpose.msra.mxu0 0.0
  %2073 = vmatprep.subr.mxu0 0.0
  %2074 = vmatpush1.xpose.msra.mxu0 0.0
  %2075 = vmatprep.subr.mxu0 0.0
  %2076 = vmatpush1.xpose.msra.mxu0 0.0
  %2077 = vmatprep.mubr.f32.mxu0 0.0
  %2078 = vmatmul.mubr.f32.gmra.mrb[0].mxu0 %v2009
  %v2079 = vpop.f32.mrb[0].mxu0
  %v2080 = vadd.f32 0.0, %v2079
  %v2081 = vpop.f32.mrb[0].mxu0
  %2082 = vdwg.mxu0
  %v2083 = vsel %vm342, %v2080, -inf
  %2084 = vmax.xlane.f32.xlu0 %v2083
  %v2085 = vpop.xlane.xlu0 %2084
  %v2086 = vsub.f32 %v2080, %v2085
  %v2087 = vmul.f32 %v2086, 1.442695
  %v2088 = vpow.pop %v2087
  %v2089 = vsel %vm342, %v2088, 0.0
  %2090 = vadd.xlane.f32.xlu0 %v2089
  %v2091 = vpop.xlane.xlu0 %2090
  %2092 = vrot.lane.b32.xlu0 %v332, 104
  %v2093 = vpop.permute.xlu0 %2092
  %v2096 = vsel %vm342, %v2088, 0
  %2098 = vmatprep.subr.mxu0 0.0
  %2099 = vmatpush1.msra.mxu0 %v2093
  %2100 = vmatprep.subr.mxu0 0.0
  %2101 = vmatpush1.msra.mxu0 0.0
  %2102 = vmatprep.subr.mxu0 0.0
  %2103 = vmatpush1.msra.mxu0 0.0
  %2104 = vmatprep.subr.mxu0 0.0
  %2105 = vmatpush1.msra.mxu0 0.0
  %2106 = vmatprep.subr.mxu0 0.0
  %2107 = vmatpush1.msra.mxu0 0.0
  %2108 = vmatprep.subr.mxu0 0.0
  %2109 = vmatpush1.msra.mxu0 0.0
  %2110 = vmatprep.subr.mxu0 0.0
  %2111 = vmatpush1.msra.mxu0 0.0
  %2112 = vmatprep.subr.mxu0 0.0
  %2113 = vmatpush1.msra.mxu0 0.0
  %2114 = vmatprep.subr.mxu0 0.0
  %2115 = vmatpush1.msra.mxu0 0.0
  %2116 = vmatprep.subr.mxu0 0.0
  %2117 = vmatpush1.msra.mxu0 0.0
  %2118 = vmatprep.subr.mxu0 0.0
  %2119 = vmatpush1.msra.mxu0 0.0
  %2120 = vmatprep.subr.mxu0 0.0
  %2121 = vmatpush1.msra.mxu0 0.0
  %2122 = vmatprep.subr.mxu0 0.0
  %2123 = vmatpush1.msra.mxu0 0.0
  %2124 = vmatprep.subr.mxu0 0.0
  %2125 = vmatpush1.msra.mxu0 0.0
  %2126 = vmatprep.subr.mxu0 0.0
  %2127 = vmatpush1.msra.mxu0 0.0
  %2128 = vmatprep.subr.mxu0 0.0
  %2129 = vmatpush1.msra.mxu0 0.0
  %2130 = vmatprep.subr.mxu0 0.0
  %2131 = vmatpush1.msra.mxu0 0.0
  %2132 = vmatprep.subr.mxu0 0.0
  %2133 = vmatpush1.msra.mxu0 0.0
  %2134 = vmatprep.subr.mxu0 0.0
  %2135 = vmatpush1.msra.mxu0 0.0
  %2136 = vmatprep.subr.mxu0 0.0
  %2137 = vmatpush1.msra.mxu0 0.0
  %2138 = vmatprep.subr.mxu0 0.0
  %2139 = vmatpush1.msra.mxu0 0.0
  %2140 = vmatprep.subr.mxu0 0.0
  %2141 = vmatpush1.msra.mxu0 0.0
  %2142 = vmatprep.subr.mxu0 0.0
  %2143 = vmatpush1.msra.mxu0 0.0
  %2144 = vmatprep.subr.mxu0 0.0
  %2145 = vmatpush1.msra.mxu0 0.0
  %2146 = vmatprep.subr.mxu0 0.0
  %2147 = vmatpush1.msra.mxu0 0.0
  %2148 = vmatprep.subr.mxu0 0.0
  %2149 = vmatpush1.msra.mxu0 0.0
  %2150 = vmatprep.subr.mxu0 0.0
  %2151 = vmatpush1.msra.mxu0 0.0
  %2152 = vmatprep.subr.mxu0 0.0
  %2153 = vmatpush1.msra.mxu0 0.0
  %2154 = vmatprep.subr.mxu0 0.0
  %2155 = vmatpush1.msra.mxu0 0.0
  %2156 = vmatprep.subr.mxu0 0.0
  %2157 = vmatpush1.msra.mxu0 0.0
  %2158 = vmatprep.subr.mxu0 0.0
  %2159 = vmatpush1.msra.mxu0 0.0
  %2160 = vmatprep.subr.mxu0 0.0
  %2161 = vmatpush1.msra.mxu0 0.0
  %2162 = vmatprep.mubr.f32.mxu0 0.0
  %2163 = vmatmul.mubr.f32.gmra.mrb[0].mxu0 %v2096
  %v2164 = vpop.f32.mrb[0].mxu0
  %v2165 = vadd.f32 0.0, %v2164
  %v2166 = vpop.f32.mrb[0].mxu0
  %2167 = vdwg.mxu0
  %v2168 = vrcp.pop %v2091
  %v2169 = vmul.f32 %v2165, %v2168
  %v2171 = vsel %vm342, %v2169, 0
  %2173 = vmatprep.subr.mxu0 0.0
  %2174 = vmatpush1.msra.mxu0 %v338
  %2175 = vmatprep.subr.mxu0 0.0
  %2176 = vmatpush1.msra.mxu0 0.0
  %2177 = vmatprep.subr.mxu0 0.0
  %2178 = vmatpush1.msra.mxu0 0.0
  %2179 = vmatprep.subr.mxu0 0.0
  %2180 = vmatpush1.msra.mxu0 0.0
  %2181 = vmatprep.subr.mxu0 0.0
  %2182 = vmatpush1.msra.mxu0 0.0
  %2183 = vmatprep.subr.mxu0 0.0
  %2184 = vmatpush1.msra.mxu0 0.0
  %2185 = vmatprep.subr.mxu0 0.0
  %2186 = vmatpush1.msra.mxu0 0.0
  %2187 = vmatprep.subr.mxu0 0.0
  %2188 = vmatpush1.msra.mxu0 0.0
  %2189 = vmatprep.subr.mxu0 0.0
  %2190 = vmatpush1.msra.mxu0 0.0
  %2191 = vmatprep.subr.mxu0 0.0
  %2192 = vmatpush1.msra.mxu0 0.0
  %2193 = vmatprep.subr.mxu0 0.0
  %2194 = vmatpush1.msra.mxu0 0.0
  %2195 = vmatprep.subr.mxu0 0.0
  %2196 = vmatpush1.msra.mxu0 0.0
  %2197 = vmatprep.subr.mxu0 0.0
  %2198 = vmatpush1.msra.mxu0 0.0
  %2199 = vmatprep.subr.mxu0 0.0
  %2200 = vmatpush1.msra.mxu0 0.0
  %2201 = vmatprep.subr.mxu0 0.0
  %2202 = vmatpush1.msra.mxu0 0.0
  %2203 = vmatprep.subr.mxu0 0.0
  %2204 = vmatpush1.msra.mxu0 0.0
  %2205 = vmatprep.subr.mxu0 0.0
  %2206 = vmatpush1.msra.mxu0 0.0
  %2207 = vmatprep.subr.mxu0 0.0
  %2208 = vmatpush1.msra.mxu0 0.0
  %2209 = vmatprep.subr.mxu0 0.0
  %2210 = vmatpush1.msra.mxu0 0.0
  %2211 = vmatprep.subr.mxu0 0.0
  %2212 = vmatpush1.msra.mxu0 0.0
  %2213 = vmatprep.subr.mxu0 0.0
  %2214 = vmatpush1.msra.mxu0 0.0
  %2215 = vmatprep.subr.mxu0 0.0
  %2216 = vmatpush1.msra.mxu0 0.0
  %2217 = vmatprep.subr.mxu0 0.0
  %2218 = vmatpush1.msra.mxu0 0.0
  %2219 = vmatprep.subr.mxu0 0.0
  %2220 = vmatpush1.msra.mxu0 0.0
  %2221 = vmatprep.subr.mxu0 0.0
  %2222 = vmatpush1.msra.mxu0 0.0
  %2223 = vmatprep.subr.mxu0 0.0
  %2224 = vmatpush1.msra.mxu0 0.0
  %2225 = vmatprep.subr.mxu0 0.0
  %2226 = vmatpush1.msra.mxu0 0.0
  %2227 = vmatprep.subr.mxu0 0.0
  %2228 = vmatpush1.msra.mxu0 0.0
  %2229 = vmatprep.subr.mxu0 0.0
  %2230 = vmatpush1.msra.mxu0 0.0
  %2231 = vmatprep.subr.mxu0 0.0
  %2232 = vmatpush1.msra.mxu0 0.0
  %2233 = vmatprep.subr.mxu0 0.0
  %2234 = vmatpush1.msra.mxu0 0.0
  %2235 = vmatprep.subr.mxu0 0.0
  %2236 = vmatpush1.msra.mxu0 0.0
  %2237 = vmatprep.mubr.f32.mxu0 0.0
  %2238 = vmatmul.mubr.f32.gmra.mrb[0].mxu0 %v2171
  %v2239 = vpop.f32.mrb[0].mxu0
  %v2240 = vadd.f32 0.0, %v2239
  %v2241 = vpop.f32.mrb[0].mxu0
  %2242 = vdwg.mxu0
  %v2243 = vadd.f32 %v2004, %v2240
  %v2244 = vld [vmem:[%s15] sm:$0x1]
  %v2246 = vlaneseq
  %v2247 = vshrl.u32 %v2246, 7
  %v2248 = vsub.s32 0, %v2247
  %v2249 = vrot.slane %v2244, %v2248
  %v2251 = vadd.f32 %v1291, %v2249
  %v2252 = vadd.f32 %v2243, %v2249
  %v2253 = vadd.f32 %v89, %v2251
  %v2254 = vadd.f32 %v90, %v2252
  %v2255 = vsel %vm101, %v2253, 0.0
  %2256 = vadd.xlane.f32.xlu0 %v2255
  %v2257 = vpop.xlane.xlu0 %2256
  %v2258 = vsel %vm101, %v2254, 0.0
  %2259 = vadd.xlane.f32.xlu0 %v2258
  %v2260 = vpop.xlane.xlu0 %2259
  %v2261 = vmul.f32 %v2257, %v108
  %v2262 = vmul.f32 %v2260, %v108
  %v2263 = vsub.f32 %v2253, %v2261
  %v2264 = vsub.f32 %v2254, %v2262
  %v2265 = vmul.f32 %v2263, %v2263
  %v2266 = vmul.f32 %v2264, %v2264
  %v2267 = vsel %vm101, %v2265, 0.0
  %2268 = vadd.xlane.f32.xlu0 %v2267
  %v2269 = vpop.xlane.xlu0 %2268
  %v2270 = vsel %vm101, %v2266, 0.0
  %2271 = vadd.xlane.f32.xlu0 %v2270
  %v2272 = vpop.xlane.xlu0 %2271
  %v2273 = vmul.f32 %v2269, %v108
  %v2274 = vmul.f32 %v2272, %v108
  %v2275 = vadd.f32 %v2273, 1e-05
  %v2276 = vadd.f32 %v2274, 1e-05
  %v2277 = vrsqrt.pop %v2275
  %v2278 = vrsqrt.pop %v2276
  %v2279 = vmul.f32 %v2263, %v2277
  %v2280 = vmul.f32 %v2264, %v2278
  %v2281 = vld [vmem:[%s6] sm:$0x1]
  %v2283 = vlaneseq
  %v2284 = vshrl.u32 %v2283, 7
  %v2285 = vsub.s32 0, %v2284
  %v2286 = vrot.slane %v2281, %v2285
  %v2288 = vmul.f32 %v2279, %v2286
  %v2289 = vmul.f32 %v2280, %v2286
  %v2290 = vld [vmem:[%s7] sm:$0x1]
  %v2292 = vlaneseq
  %v2293 = vshrl.u32 %v2292, 7
  %v2294 = vsub.s32 0, %v2293
  %v2295 = vrot.slane %v2290, %v2294
  %v2297 = vadd.f32 %v2288, %v2295
  %v2298 = vadd.f32 %v2289, %v2295
  %v2299 = vadd.f32 %v2297, %v91
  %v2300 = vadd.f32 %v2298, %v92
  %v2301 = vld [vmem:[%s16] sm:$0xff]
  %v2302 = vld [vmem:[%s16 + $0x8] sm:$0xff]
  %v2303 = vld [vmem:[%s16 + $0x10] sm:$0xff]
  %v2304 = vld [vmem:[%s16 + $0x18] sm:$0xff]
  %v2305 = vld [vmem:[%s17] sm:$0x1]
  %v2307 = vlaneseq
  %v2308 = vshrl.u32 %v2307, 7
  %v2309 = vsub.s32 0, %v2308
  %v2310 = vrot.slane %v2305, %v2309
  %v2313 = vsel %vm101, %v2299, 0
  %v2316 = vsel %vm101, %v2300, 0
  %2318 = vmatprep.subr.mxu0 0.0
  %2319 = vmatpush1.msra.mxu0 %v2301
  %2320 = vmatprep.subr.mxu0 0.0
  %2321 = vmatpush1.msra.mxu0 %v2302
  %2322 = vmatprep.subr.mxu0 0.0
  %2323 = vmatpush1.msra.mxu0 %v2303
  %2324 = vmatprep.subr.mxu0 0.0
  %2325 = vmatpush1.msra.mxu0 %v2304
  %2326 = vmatprep.subr.mxu0 0.0
  %2327 = vmatpush1.msra.mxu0 0.0
  %2328 = vmatprep.subr.mxu0 0.0
  %2329 = vmatpush1.msra.mxu0 0.0
  %2330 = vmatprep.subr.mxu0 0.0
  %2331 = vmatpush1.msra.mxu0 0.0
  %2332 = vmatprep.subr.mxu0 0.0
  %2333 = vmatpush1.msra.mxu0 0.0
  %2334 = vmatprep.subr.mxu0 0.0
  %2335 = vmatpush1.msra.mxu0 0.0
  %2336 = vmatprep.subr.mxu0 0.0
  %2337 = vmatpush1.msra.mxu0 0.0
  %2338 = vmatprep.subr.mxu0 0.0
  %2339 = vmatpush1.msra.mxu0 0.0
  %2340 = vmatprep.subr.mxu0 0.0
  %2341 = vmatpush1.msra.mxu0 0.0
  %2342 = vmatprep.subr.mxu0 0.0
  %2343 = vmatpush1.msra.mxu0 0.0
  %2344 = vmatprep.subr.mxu0 0.0
  %2345 = vmatpush1.msra.mxu0 0.0
  %2346 = vmatprep.subr.mxu0 0.0
  %2347 = vmatpush1.msra.mxu0 0.0
  %2348 = vmatprep.subr.mxu0 0.0
  %2349 = vmatpush1.msra.mxu0 0.0
  %2350 = vmatprep.subr.mxu0 0.0
  %2351 = vmatpush1.msra.mxu0 0.0
  %2352 = vmatprep.subr.mxu0 0.0
  %2353 = vmatpush1.msra.mxu0 0.0
  %2354 = vmatprep.subr.mxu0 0.0
  %2355 = vmatpush1.msra.mxu0 0.0
  %2356 = vmatprep.subr.mxu0 0.0
  %2357 = vmatpush1.msra.mxu0 0.0
  %2358 = vmatprep.subr.mxu0 0.0
  %2359 = vmatpush1.msra.mxu0 0.0
  %2360 = vmatprep.subr.mxu0 0.0
  %2361 = vmatpush1.msra.mxu0 0.0
  %2362 = vmatprep.subr.mxu0 0.0
  %2363 = vmatpush1.msra.mxu0 0.0
  %2364 = vmatprep.subr.mxu0 0.0
  %2365 = vmatpush1.msra.mxu0 0.0
  %2366 = vmatprep.subr.mxu0 0.0
  %2367 = vmatpush1.msra.mxu0 0.0
  %2368 = vmatprep.subr.mxu0 0.0
  %2369 = vmatpush1.msra.mxu0 0.0
  %2370 = vmatprep.subr.mxu0 0.0
  %2371 = vmatpush1.msra.mxu0 0.0
  %2372 = vmatprep.subr.mxu0 0.0
  %2373 = vmatpush1.msra.mxu0 0.0
  %2374 = vmatprep.subr.mxu0 0.0
  %2375 = vmatpush1.msra.mxu0 0.0
  %2376 = vmatprep.subr.mxu0 0.0
  %2377 = vmatpush1.msra.mxu0 0.0
  %2378 = vmatprep.subr.mxu0 0.0
  %2379 = vmatpush1.msra.mxu0 0.0
  %2380 = vmatprep.subr.mxu0 0.0
  %2381 = vmatpush1.msra.mxu0 0.0
  %2382 = vmatprep.mubr.f32.mxu0 0.0
  %2383 = vmatmul.mubr.f32.gmra.mrb[0].mxu0 %v2313
  %v2384 = vpop.f32.mrb[0].mxu0
  %v2385 = vadd.f32 %v2310, %v2384
  %v2386 = vpop.f32.mrb[0].mxu0
  %2387 = vmatprep.mubr.f32.mxu0 0.0
  %2388 = vmatmul.mubr.f32.gmra.mrb[0].mxu0 %v2316
  %v2389 = vpop.f32.mrb[0].mxu0
  %v2390 = vadd.f32 %v2310, %v2389
  %v2391 = vpop.f32.mrb[0].mxu0
  %2392 = vdwg.mxu0
  %v2393 = vmul.f32 %v2385, 0.35355338
  %v2394 = vmul.f32 %v2390, 0.35355338
  %v2395 = vadd.f32 %v93, %v97
  %v2396 = vadd.f32 %v94, %v98
  %v2397 = vadd.f32 %v95, %v99
  %v2398 = vadd.f32 %v96, %v100
  %v2399 = vld [vmem:[%s18] sm:$0xff]
  %v2400 = vld [vmem:[%s18 + $0x8] sm:$0xff]
  %v2401 = vld [vmem:[%s18 + $0x10] sm:$0xff]
  %v2402 = vld [vmem:[%s18 + $0x18] sm:$0xff]
  %v2403 = vld [vmem:[%s19] sm:$0x1]
  %v2405 = vlaneseq
  %v2406 = vshrl.u32 %v2405, 7
  %v2407 = vsub.s32 0, %v2406
  %v2408 = vrot.slane %v2403, %v2407
  %v2411 = vsel %vm101, %v2395, 0
  %v2414 = vsel %vm101, %v2396, 0
  %v2417 = vsel %vm101, %v2397, 0
  %v2420 = vsel %vm101, %v2398, 0
  %2422 = vmatprep.subr.mxu0 0.0
  %2423 = vmatpush1.msra.mxu0 %v2399
  %2424 = vmatprep.subr.mxu0 0.0
  %2425 = vmatpush1.msra.mxu0 %v2400
  %2426 = vmatprep.subr.mxu0 0.0
  %2427 = vmatpush1.msra.mxu0 %v2401
  %2428 = vmatprep.subr.mxu0 0.0
  %2429 = vmatpush1.msra.mxu0 %v2402
  %2430 = vmatprep.subr.mxu0 0.0
  %2431 = vmatpush1.msra.mxu0 0.0
  %2432 = vmatprep.subr.mxu0 0.0
  %2433 = vmatpush1.msra.mxu0 0.0
  %2434 = vmatprep.subr.mxu0 0.0
  %2435 = vmatpush1.msra.mxu0 0.0
  %2436 = vmatprep.subr.mxu0 0.0
  %2437 = vmatpush1.msra.mxu0 0.0
  %2438 = vmatprep.subr.mxu0 0.0
  %2439 = vmatpush1.msra.mxu0 0.0
  %2440 = vmatprep.subr.mxu0 0.0
  %2441 = vmatpush1.msra.mxu0 0.0
  %2442 = vmatprep.subr.mxu0 0.0
  %2443 = vmatpush1.msra.mxu0 0.0
  %2444 = vmatprep.subr.mxu0 0.0
  %2445 = vmatpush1.msra.mxu0 0.0
  %2446 = vmatprep.subr.mxu0 0.0
  %2447 = vmatpush1.msra.mxu0 0.0
  %2448 = vmatprep.subr.mxu0 0.0
  %2449 = vmatpush1.msra.mxu0 0.0
  %2450 = vmatprep.subr.mxu0 0.0
  %2451 = vmatpush1.msra.mxu0 0.0
  %2452 = vmatprep.subr.mxu0 0.0
  %2453 = vmatpush1.msra.mxu0 0.0
  %2454 = vmatprep.subr.mxu0 0.0
  %2455 = vmatpush1.msra.mxu0 0.0
  %2456 = vmatprep.subr.mxu0 0.0
  %2457 = vmatpush1.msra.mxu0 0.0
  %2458 = vmatprep.subr.mxu0 0.0
  %2459 = vmatpush1.msra.mxu0 0.0
  %2460 = vmatprep.subr.mxu0 0.0
  %2461 = vmatpush1.msra.mxu0 0.0
  %2462 = vmatprep.subr.mxu0 0.0
  %2463 = vmatpush1.msra.mxu0 0.0
  %2464 = vmatprep.subr.mxu0 0.0
  %2465 = vmatpush1.msra.mxu0 0.0
  %2466 = vmatprep.subr.mxu0 0.0
  %2467 = vmatpush1.msra.mxu0 0.0
  %2468 = vmatprep.subr.mxu0 0.0
  %2469 = vmatpush1.msra.mxu0 0.0
  %2470 = vmatprep.subr.mxu0 0.0
  %2471 = vmatpush1.msra.mxu0 0.0
  %2472 = vmatprep.subr.mxu0 0.0
  %2473 = vmatpush1.msra.mxu0 0.0
  %2474 = vmatprep.subr.mxu0 0.0
  %2475 = vmatpush1.msra.mxu0 0.0
  %2476 = vmatprep.subr.mxu0 0.0
  %2477 = vmatpush1.msra.mxu0 0.0
  %2478 = vmatprep.subr.mxu0 0.0
  %2479 = vmatpush1.msra.mxu0 0.0
  %2480 = vmatprep.subr.mxu0 0.0
  %2481 = vmatpush1.msra.mxu0 0.0
  %2482 = vmatprep.subr.mxu0 0.0
  %2483 = vmatpush1.msra.mxu0 0.0
  %2484 = vmatprep.subr.mxu0 0.0
  %2485 = vmatpush1.msra.mxu0 0.0
  %2486 = vmatprep.mubr.f32.mxu0 0.0
  %2487 = vmatmul.mubr.f32.gmra.mrb[0].mxu0 %v2411
  %v2488 = vpop.f32.mrb[0].mxu0
  %v2489 = vadd.f32 %v2408, %v2488
  %v2490 = vpop.f32.mrb[0].mxu0
  %2491 = vmatprep.mubr.f32.mxu0 0.0
  %2492 = vmatmul.mubr.f32.gmra.mrb[0].mxu0 %v2414
  %v2493 = vpop.f32.mrb[0].mxu0
  %v2494 = vadd.f32 %v2408, %v2493
  %v2495 = vpop.f32.mrb[0].mxu0
  %2496 = vmatprep.mubr.f32.mxu0 0.0
  %2497 = vmatmul.mubr.f32.gmra.mrb[0].mxu0 %v2417
  %v2498 = vpop.f32.mrb[0].mxu0
  %v2499 = vadd.f32 %v2408, %v2498
  %v2500 = vpop.f32.mrb[0].mxu0
  %2501 = vmatprep.mubr.f32.mxu0 0.0
  %2502 = vmatmul.mubr.f32.gmra.mrb[0].mxu0 %v2420
  %v2503 = vpop.f32.mrb[0].mxu0
  %v2504 = vadd.f32 %v2408, %v2503
  %v2505 = vpop.f32.mrb[0].mxu0
  %2506 = vdwg.mxu0
  %v2507 = vld [vmem:[%s20] sm:$0xff]
  %v2508 = vld [vmem:[%s20 + $0x8] sm:$0xff]
  %v2509 = vld [vmem:[%s20 + $0x10] sm:$0xff]
  %v2510 = vld [vmem:[%s20 + $0x18] sm:$0xff]
  %v2511 = vld [vmem:[%s21] sm:$0x1]
  %v2513 = vlaneseq
  %v2514 = vshrl.u32 %v2513, 7
  %v2515 = vsub.s32 0, %v2514
  %v2516 = vrot.slane %v2511, %v2515
  %v2519 = vsel %vm101, %v93, 0
  %v2522 = vsel %vm101, %v94, 0
  %v2525 = vsel %vm101, %v95, 0
  %v2528 = vsel %vm101, %v96, 0
  %2530 = vmatprep.subr.mxu0 0.0
  %2531 = vmatpush1.msra.mxu0 %v2507
  %2532 = vmatprep.subr.mxu0 0.0
  %2533 = vmatpush1.msra.mxu0 %v2508
  %2534 = vmatprep.subr.mxu0 0.0
  %2535 = vmatpush1.msra.mxu0 %v2509
  %2536 = vmatprep.subr.mxu0 0.0
  %2537 = vmatpush1.msra.mxu0 %v2510
  %2538 = vmatprep.subr.mxu0 0.0
  %2539 = vmatpush1.msra.mxu0 0.0
  %2540 = vmatprep.subr.mxu0 0.0
  %2541 = vmatpush1.msra.mxu0 0.0
  %2542 = vmatprep.subr.mxu0 0.0
  %2543 = vmatpush1.msra.mxu0 0.0
  %2544 = vmatprep.subr.mxu0 0.0
  %2545 = vmatpush1.msra.mxu0 0.0
  %2546 = vmatprep.subr.mxu0 0.0
  %2547 = vmatpush1.msra.mxu0 0.0
  %2548 = vmatprep.subr.mxu0 0.0
  %2549 = vmatpush1.msra.mxu0 0.0
  %2550 = vmatprep.subr.mxu0 0.0
  %2551 = vmatpush1.msra.mxu0 0.0
  %2552 = vmatprep.subr.mxu0 0.0
  %2553 = vmatpush1.msra.mxu0 0.0
  %2554 = vmatprep.subr.mxu0 0.0
  %2555 = vmatpush1.msra.mxu0 0.0
  %2556 = vmatprep.subr.mxu0 0.0
  %2557 = vmatpush1.msra.mxu0 0.0
  %2558 = vmatprep.subr.mxu0 0.0
  %2559 = vmatpush1.msra.mxu0 0.0
  %2560 = vmatprep.subr.mxu0 0.0
  %2561 = vmatpush1.msra.mxu0 0.0
  %2562 = vmatprep.subr.mxu0 0.0
  %2563 = vmatpush1.msra.mxu0 0.0
  %2564 = vmatprep.subr.mxu0 0.0
  %2565 = vmatpush1.msra.mxu0 0.0
  %2566 = vmatprep.subr.mxu0 0.0
  %2567 = vmatpush1.msra.mxu0 0.0
  %2568 = vmatprep.subr.mxu0 0.0
  %2569 = vmatpush1.msra.mxu0 0.0
  %2570 = vmatprep.subr.mxu0 0.0
  %2571 = vmatpush1.msra.mxu0 0.0
  %2572 = vmatprep.subr.mxu0 0.0
  %2573 = vmatpush1.msra.mxu0 0.0
  %2574 = vmatprep.subr.mxu0 0.0
  %2575 = vmatpush1.msra.mxu0 0.0
  %2576 = vmatprep.subr.mxu0 0.0
  %2577 = vmatpush1.msra.mxu0 0.0
  %2578 = vmatprep.subr.mxu0 0.0
  %2579 = vmatpush1.msra.mxu0 0.0
  %2580 = vmatprep.subr.mxu0 0.0
  %2581 = vmatpush1.msra.mxu0 0.0
  %2582 = vmatprep.subr.mxu0 0.0
  %2583 = vmatpush1.msra.mxu0 0.0
  %2584 = vmatprep.subr.mxu0 0.0
  %2585 = vmatpush1.msra.mxu0 0.0
  %2586 = vmatprep.subr.mxu0 0.0
  %2587 = vmatpush1.msra.mxu0 0.0
  %2588 = vmatprep.subr.mxu0 0.0
  %2589 = vmatpush1.msra.mxu0 0.0
  %2590 = vmatprep.subr.mxu0 0.0
  %2591 = vmatpush1.msra.mxu0 0.0
  %2592 = vmatprep.subr.mxu0 0.0
  %2593 = vmatpush1.msra.mxu0 0.0
  %2594 = vmatprep.mubr.f32.mxu0 0.0
  %2595 = vmatmul.mubr.f32.gmra.mrb[0].mxu0 %v2519
  %v2596 = vpop.f32.mrb[0].mxu0
  %v2597 = vadd.f32 %v2516, %v2596
  %v2598 = vpop.f32.mrb[0].mxu0
  %2599 = vmatprep.mubr.f32.mxu0 0.0
  %2600 = vmatmul.mubr.f32.gmra.mrb[0].mxu0 %v2522
  %v2601 = vpop.f32.mrb[0].mxu0
  %v2602 = vadd.f32 %v2516, %v2601
  %v2603 = vpop.f32.mrb[0].mxu0
  %2604 = vmatprep.mubr.f32.mxu0 0.0
  %2605 = vmatmul.mubr.f32.gmra.mrb[0].mxu0 %v2525
  %v2606 = vpop.f32.mrb[0].mxu0
  %v2607 = vadd.f32 %v2516, %v2606
  %v2608 = vpop.f32.mrb[0].mxu0
  %2609 = vmatprep.mubr.f32.mxu0 0.0
  %2610 = vmatmul.mubr.f32.gmra.mrb[0].mxu0 %v2528
  %v2611 = vpop.f32.mrb[0].mxu0
  %v2612 = vadd.f32 %v2516, %v2611
  %v2613 = vpop.f32.mrb[0].mxu0
  %2614 = vdwg.mxu0
  %v2615 = vld [vmem:[%s22] sm:$0xff]
  %v2616 = vld [vmem:[%s22 + $0x8] sm:$0xff]
  %v2617 = vld [vmem:[%s22 + $0x10] sm:$0xff]
  %v2618 = vld [vmem:[%s22 + $0x18] sm:$0xff]
  %v2620 = vsel %vm342, %v2393, 0
  %v2623 = vsel %vm342, %v2489, 0
  %v2626 = vsel %vm342, %v2494, 0
  %2628 = vmatprep.subr.mxu0 0.0
  %2629 = vmatpush1.xpose.msra.mxu0 %v2623
  %2630 = vmatprep.subr.mxu0 0.0
  %2631 = vmatpush1.xpose.msra.mxu0 %v2626
  %2632 = vmatprep.subr.mxu0 0.0
  %2633 = vmatpush1.xpose.msra.mxu0 0.0
  %2634 = vmatprep.subr.mxu0 0.0
  %2635 = vmatpush1.xpose.msra.mxu0 0.0
  %2636 = vmatprep.subr.mxu0 0.0
  %2637 = vmatpush1.xpose.msra.mxu0 0.0
  %2638 = vmatprep.subr.mxu0 0.0
  %2639 = vmatpush1.xpose.msra.mxu0 0.0
  %2640 = vmatprep.subr.mxu0 0.0
  %2641 = vmatpush1.xpose.msra.mxu0 0.0
  %2642 = vmatprep.subr.mxu0 0.0
  %2643 = vmatpush1.xpose.msra.mxu0 0.0
  %2644 = vmatprep.subr.mxu0 0.0
  %2645 = vmatpush1.xpose.msra.mxu0 0.0
  %2646 = vmatprep.subr.mxu0 0.0
  %2647 = vmatpush1.xpose.msra.mxu0 0.0
  %2648 = vmatprep.subr.mxu0 0.0
  %2649 = vmatpush1.xpose.msra.mxu0 0.0
  %2650 = vmatprep.subr.mxu0 0.0
  %2651 = vmatpush1.xpose.msra.mxu0 0.0
  %2652 = vmatprep.subr.mxu0 0.0
  %2653 = vmatpush1.xpose.msra.mxu0 0.0
  %2654 = vmatprep.subr.mxu0 0.0
  %2655 = vmatpush1.xpose.msra.mxu0 0.0
  %2656 = vmatprep.subr.mxu0 0.0
  %2657 = vmatpush1.xpose.msra.mxu0 0.0
  %2658 = vmatprep.subr.mxu0 0.0
  %2659 = vmatpush1.xpose.msra.mxu0 0.0
  %2660 = vmatprep.subr.mxu0 0.0
  %2661 = vmatpush1.xpose.msra.mxu0 0.0
  %2662 = vmatprep.subr.mxu0 0.0
  %2663 = vmatpush1.xpose.msra.mxu0 0.0
  %2664 = vmatprep.subr.mxu0 0.0
  %2665 = vmatpush1.xpose.msra.mxu0 0.0
  %2666 = vmatprep.subr.mxu0 0.0
  %2667 = vmatpush1.xpose.msra.mxu0 0.0
  %2668 = vmatprep.subr.mxu0 0.0
  %2669 = vmatpush1.xpose.msra.mxu0 0.0
  %2670 = vmatprep.subr.mxu0 0.0
  %2671 = vmatpush1.xpose.msra.mxu0 0.0
  %2672 = vmatprep.subr.mxu0 0.0
  %2673 = vmatpush1.xpose.msra.mxu0 0.0
  %2674 = vmatprep.subr.mxu0 0.0
  %2675 = vmatpush1.xpose.msra.mxu0 0.0
  %2676 = vmatprep.subr.mxu0 0.0
  %2677 = vmatpush1.xpose.msra.mxu0 0.0
  %2678 = vmatprep.subr.mxu0 0.0
  %2679 = vmatpush1.xpose.msra.mxu0 0.0
  %2680 = vmatprep.subr.mxu0 0.0
  %2681 = vmatpush1.xpose.msra.mxu0 0.0
  %2682 = vmatprep.subr.mxu0 0.0
  %2683 = vmatpush1.xpose.msra.mxu0 0.0
  %2684 = vmatprep.subr.mxu0 0.0
  %2685 = vmatpush1.xpose.msra.mxu0 0.0
  %2686 = vmatprep.subr.mxu0 0.0
  %2687 = vmatpush1.xpose.msra.mxu0 0.0
  %2688 = vmatprep.subr.mxu0 0.0
  %2689 = vmatpush1.xpose.msra.mxu0 0.0
  %2690 = vmatprep.subr.mxu0 0.0
  %2691 = vmatpush1.xpose.msra.mxu0 0.0
  %2692 = vmatprep.mubr.f32.mxu0 0.0
  %2693 = vmatmul.mubr.f32.gmra.mrb[0].mxu0 %v2620
  %v2694 = vpop.f32.mrb[0].mxu0
  %v2695 = vadd.f32 0.0, %v2694
  %v2696 = vpop.f32.mrb[0].mxu0
  %2697 = vdwg.mxu0
  %vm2698 = vcmask 130048
  %v2699 = vsel %vm2698, %v2695, -inf
  %2700 = vmax.xlane.f32.xlu0 %v2699
  %v2701 = vpop.xlane.xlu0 %2700
  %v2702 = vsub.f32 %v2695, %v2701
  %v2703 = vmul.f32 %v2702, 1.442695
  %v2704 = vpow.pop %v2703
  %v2705 = vsel %vm2698, %v2704, 0.0
  %2706 = vadd.xlane.f32.xlu0 %v2705
  %v2707 = vpop.xlane.xlu0 %2706
  %v2709 = vsel %vm2698, %v2704, 0
  %2711 = vmatprep.subr.mxu0 0.0
  %2712 = vmatpush1.msra.mxu0 %v2597
  %2713 = vmatprep.subr.mxu0 0.0
  %2714 = vmatpush1.msra.mxu0 %v2602
  %2715 = vmatprep.subr.mxu0 0.0
  %2716 = vmatpush1.msra.mxu0 0.0
  %2717 = vmatprep.subr.mxu0 0.0
  %2718 = vmatpush1.msra.mxu0 0.0
  %2719 = vmatprep.subr.mxu0 0.0
  %2720 = vmatpush1.msra.mxu0 0.0
  %2721 = vmatprep.subr.mxu0 0.0
  %2722 = vmatpush1.msra.mxu0 0.0
  %2723 = vmatprep.subr.mxu0 0.0
  %2724 = vmatpush1.msra.mxu0 0.0
  %2725 = vmatprep.subr.mxu0 0.0
  %2726 = vmatpush1.msra.mxu0 0.0
  %2727 = vmatprep.subr.mxu0 0.0
  %2728 = vmatpush1.msra.mxu0 0.0
  %2729 = vmatprep.subr.mxu0 0.0
  %2730 = vmatpush1.msra.mxu0 0.0
  %2731 = vmatprep.subr.mxu0 0.0
  %2732 = vmatpush1.msra.mxu0 0.0
  %2733 = vmatprep.subr.mxu0 0.0
  %2734 = vmatpush1.msra.mxu0 0.0
  %2735 = vmatprep.subr.mxu0 0.0
  %2736 = vmatpush1.msra.mxu0 0.0
  %2737 = vmatprep.subr.mxu0 0.0
  %2738 = vmatpush1.msra.mxu0 0.0
  %2739 = vmatprep.subr.mxu0 0.0
  %2740 = vmatpush1.msra.mxu0 0.0
  %2741 = vmatprep.subr.mxu0 0.0
  %2742 = vmatpush1.msra.mxu0 0.0
  %2743 = vmatprep.subr.mxu0 0.0
  %2744 = vmatpush1.msra.mxu0 0.0
  %2745 = vmatprep.subr.mxu0 0.0
  %2746 = vmatpush1.msra.mxu0 0.0
  %2747 = vmatprep.subr.mxu0 0.0
  %2748 = vmatpush1.msra.mxu0 0.0
  %2749 = vmatprep.subr.mxu0 0.0
  %2750 = vmatpush1.msra.mxu0 0.0
  %2751 = vmatprep.subr.mxu0 0.0
  %2752 = vmatpush1.msra.mxu0 0.0
  %2753 = vmatprep.subr.mxu0 0.0
  %2754 = vmatpush1.msra.mxu0 0.0
  %2755 = vmatprep.subr.mxu0 0.0
  %2756 = vmatpush1.msra.mxu0 0.0
  %2757 = vmatprep.subr.mxu0 0.0
  %2758 = vmatpush1.msra.mxu0 0.0
  %2759 = vmatprep.subr.mxu0 0.0
  %2760 = vmatpush1.msra.mxu0 0.0
  %2761 = vmatprep.subr.mxu0 0.0
  %2762 = vmatpush1.msra.mxu0 0.0
  %2763 = vmatprep.subr.mxu0 0.0
  %2764 = vmatpush1.msra.mxu0 0.0
  %2765 = vmatprep.subr.mxu0 0.0
  %2766 = vmatpush1.msra.mxu0 0.0
  %2767 = vmatprep.subr.mxu0 0.0
  %2768 = vmatpush1.msra.mxu0 0.0
  %2769 = vmatprep.subr.mxu0 0.0
  %2770 = vmatpush1.msra.mxu0 0.0
  %2771 = vmatprep.subr.mxu0 0.0
  %2772 = vmatpush1.msra.mxu0 0.0
  %2773 = vmatprep.subr.mxu0 0.0
  %2774 = vmatpush1.msra.mxu0 0.0
  %2775 = vmatprep.mubr.f32.mxu0 0.0
  %2776 = vmatmul.mubr.f32.gmra.mrb[0].mxu0 %v2709
  %v2777 = vpop.f32.mrb[0].mxu0
  %v2778 = vadd.f32 0.0, %v2777
  %v2779 = vpop.f32.mrb[0].mxu0
  %2780 = vdwg.mxu0
  %v2781 = vrcp.pop %v2707
  %v2782 = vmul.f32 %v2778, %v2781
  %2783 = vrot.lane.b32.xlu0 %v2393, 120
  %v2784 = vpop.permute.xlu0 %2783
  %2785 = vrot.lane.b32.xlu0 %v2489, 120
  %v2786 = vpop.permute.xlu0 %2785
  %2787 = vrot.lane.b32.xlu0 %v2494, 120
  %v2788 = vpop.permute.xlu0 %2787
  %v2789 = vsel %vm342, %v2784, 0
  %v2791 = vsel %vm342, %v2786, 0
  %v2793 = vsel %vm342, %v2788, 0
  %2795 = vmatprep.subr.mxu0 0.0
  %2796 = vmatpush1.xpose.msra.mxu0 %v2791
  %2797 = vmatprep.subr.mxu0 0.0
  %2798 = vmatpush1.xpose.msra.mxu0 %v2793
  %2799 = vmatprep.subr.mxu0 0.0
  %2800 = vmatpush1.xpose.msra.mxu0 0.0
  %2801 = vmatprep.subr.mxu0 0.0
  %2802 = vmatpush1.xpose.msra.mxu0 0.0
  %2803 = vmatprep.subr.mxu0 0.0
  %2804 = vmatpush1.xpose.msra.mxu0 0.0
  %2805 = vmatprep.subr.mxu0 0.0
  %2806 = vmatpush1.xpose.msra.mxu0 0.0
  %2807 = vmatprep.subr.mxu0 0.0
  %2808 = vmatpush1.xpose.msra.mxu0 0.0
  %2809 = vmatprep.subr.mxu0 0.0
  %2810 = vmatpush1.xpose.msra.mxu0 0.0
  %2811 = vmatprep.subr.mxu0 0.0
  %2812 = vmatpush1.xpose.msra.mxu0 0.0
  %2813 = vmatprep.subr.mxu0 0.0
  %2814 = vmatpush1.xpose.msra.mxu0 0.0
  %2815 = vmatprep.subr.mxu0 0.0
  %2816 = vmatpush1.xpose.msra.mxu0 0.0
  %2817 = vmatprep.subr.mxu0 0.0
  %2818 = vmatpush1.xpose.msra.mxu0 0.0
  %2819 = vmatprep.subr.mxu0 0.0
  %2820 = vmatpush1.xpose.msra.mxu0 0.0
  %2821 = vmatprep.subr.mxu0 0.0
  %2822 = vmatpush1.xpose.msra.mxu0 0.0
  %2823 = vmatprep.subr.mxu0 0.0
  %2824 = vmatpush1.xpose.msra.mxu0 0.0
  %2825 = vmatprep.subr.mxu0 0.0
  %2826 = vmatpush1.xpose.msra.mxu0 0.0
  %2827 = vmatprep.subr.mxu0 0.0
  %2828 = vmatpush1.xpose.msra.mxu0 0.0
  %2829 = vmatprep.subr.mxu0 0.0
  %2830 = vmatpush1.xpose.msra.mxu0 0.0
  %2831 = vmatprep.subr.mxu0 0.0
  %2832 = vmatpush1.xpose.msra.mxu0 0.0
  %2833 = vmatprep.subr.mxu0 0.0
  %2834 = vmatpush1.xpose.msra.mxu0 0.0
  %2835 = vmatprep.subr.mxu0 0.0
  %2836 = vmatpush1.xpose.msra.mxu0 0.0
  %2837 = vmatprep.subr.mxu0 0.0
  %2838 = vmatpush1.xpose.msra.mxu0 0.0
  %2839 = vmatprep.subr.mxu0 0.0
  %2840 = vmatpush1.xpose.msra.mxu0 0.0
  %2841 = vmatprep.subr.mxu0 0.0
  %2842 = vmatpush1.xpose.msra.mxu0 0.0
  %2843 = vmatprep.subr.mxu0 0.0
  %2844 = vmatpush1.xpose.msra.mxu0 0.0
  %2845 = vmatprep.subr.mxu0 0.0
  %2846 = vmatpush1.xpose.msra.mxu0 0.0
  %2847 = vmatprep.subr.mxu0 0.0
  %2848 = vmatpush1.xpose.msra.mxu0 0.0
  %2849 = vmatprep.subr.mxu0 0.0
  %2850 = vmatpush1.xpose.msra.mxu0 0.0
  %2851 = vmatprep.subr.mxu0 0.0
  %2852 = vmatpush1.xpose.msra.mxu0 0.0
  %2853 = vmatprep.subr.mxu0 0.0
  %2854 = vmatpush1.xpose.msra.mxu0 0.0
  %2855 = vmatprep.subr.mxu0 0.0
  %2856 = vmatpush1.xpose.msra.mxu0 0.0
  %2857 = vmatprep.subr.mxu0 0.0
  %2858 = vmatpush1.xpose.msra.mxu0 0.0
  %2859 = vmatprep.mubr.f32.mxu0 0.0
  %2860 = vmatmul.mubr.f32.gmra.mrb[0].mxu0 %v2789
  %v2861 = vpop.f32.mrb[0].mxu0
  %v2862 = vadd.f32 0.0, %v2861
  %v2863 = vpop.f32.mrb[0].mxu0
  %2864 = vdwg.mxu0
  %v2865 = vsel %vm2698, %v2862, -inf
  %2866 = vmax.xlane.f32.xlu0 %v2865
  %v2867 = vpop.xlane.xlu0 %2866
  %v2868 = vsub.f32 %v2862, %v2867
  %v2869 = vmul.f32 %v2868, 1.442695
  %v2870 = vpow.pop %v2869
  %v2871 = vsel %vm2698, %v2870, 0.0
  %2872 = vadd.xlane.f32.xlu0 %v2871
  %v2873 = vpop.xlane.xlu0 %2872
  %2876 = vrot.lane.b32.xlu0 %v2597, 120
  %v2877 = vpop.permute.xlu0 %2876
  %2878 = vrot.lane.b32.xlu0 %v2602, 120
  %v2879 = vpop.permute.xlu0 %2878
  %v2883 = vsel %vm2698, %v2870, 0
  %2885 = vmatprep.subr.mxu0 0.0
  %2886 = vmatpush1.msra.mxu0 %v2877
  %2887 = vmatprep.subr.mxu0 0.0
  %2888 = vmatpush1.msra.mxu0 %v2879
  %2889 = vmatprep.subr.mxu0 0.0
  %2890 = vmatpush1.msra.mxu0 0.0
  %2891 = vmatprep.subr.mxu0 0.0
  %2892 = vmatpush1.msra.mxu0 0.0
  %2893 = vmatprep.subr.mxu0 0.0
  %2894 = vmatpush1.msra.mxu0 0.0
  %2895 = vmatprep.subr.mxu0 0.0
  %2896 = vmatpush1.msra.mxu0 0.0
  %2897 = vmatprep.subr.mxu0 0.0
  %2898 = vmatpush1.msra.mxu0 0.0
  %2899 = vmatprep.subr.mxu0 0.0
  %2900 = vmatpush1.msra.mxu0 0.0
  %2901 = vmatprep.subr.mxu0 0.0
  %2902 = vmatpush1.msra.mxu0 0.0
  %2903 = vmatprep.subr.mxu0 0.0
  %2904 = vmatpush1.msra.mxu0 0.0
  %2905 = vmatprep.subr.mxu0 0.0
  %2906 = vmatpush1.msra.mxu0 0.0
  %2907 = vmatprep.subr.mxu0 0.0
  %2908 = vmatpush1.msra.mxu0 0.0
  %2909 = vmatprep.subr.mxu0 0.0
  %2910 = vmatpush1.msra.mxu0 0.0
  %2911 = vmatprep.subr.mxu0 0.0
  %2912 = vmatpush1.msra.mxu0 0.0
  %2913 = vmatprep.subr.mxu0 0.0
  %2914 = vmatpush1.msra.mxu0 0.0
  %2915 = vmatprep.subr.mxu0 0.0
  %2916 = vmatpush1.msra.mxu0 0.0
  %2917 = vmatprep.subr.mxu0 0.0
  %2918 = vmatpush1.msra.mxu0 0.0
  %2919 = vmatprep.subr.mxu0 0.0
  %2920 = vmatpush1.msra.mxu0 0.0
  %2921 = vmatprep.subr.mxu0 0.0
  %2922 = vmatpush1.msra.mxu0 0.0
  %2923 = vmatprep.subr.mxu0 0.0
  %2924 = vmatpush1.msra.mxu0 0.0
  %2925 = vmatprep.subr.mxu0 0.0
  %2926 = vmatpush1.msra.mxu0 0.0
  %2927 = vmatprep.subr.mxu0 0.0
  %2928 = vmatpush1.msra.mxu0 0.0
  %2929 = vmatprep.subr.mxu0 0.0
  %2930 = vmatpush1.msra.mxu0 0.0
  %2931 = vmatprep.subr.mxu0 0.0
  %2932 = vmatpush1.msra.mxu0 0.0
  %2933 = vmatprep.subr.mxu0 0.0
  %2934 = vmatpush1.msra.mxu0 0.0
  %2935 = vmatprep.subr.mxu0 0.0
  %2936 = vmatpush1.msra.mxu0 0.0
  %2937 = vmatprep.subr.mxu0 0.0
  %2938 = vmatpush1.msra.mxu0 0.0
  %2939 = vmatprep.subr.mxu0 0.0
  %2940 = vmatpush1.msra.mxu0 0.0
  %2941 = vmatprep.subr.mxu0 0.0
  %2942 = vmatpush1.msra.mxu0 0.0
  %2943 = vmatprep.subr.mxu0 0.0
  %2944 = vmatpush1.msra.mxu0 0.0
  %2945 = vmatprep.subr.mxu0 0.0
  %2946 = vmatpush1.msra.mxu0 0.0
  %2947 = vmatprep.subr.mxu0 0.0
  %2948 = vmatpush1.msra.mxu0 0.0
  %2949 = vmatprep.mubr.f32.mxu0 0.0
  %2950 = vmatmul.mubr.f32.gmra.mrb[0].mxu0 %v2883
  %v2951 = vpop.f32.mrb[0].mxu0
  %v2952 = vadd.f32 0.0, %v2951
  %v2953 = vpop.f32.mrb[0].mxu0
  %2954 = vdwg.mxu0
  %v2955 = vrcp.pop %v2873
  %v2956 = vmul.f32 %v2952, %v2955
  %v2958 = vsel %vm342, %v2956, 0
  %2960 = vmatprep.subr.mxu0 0.0
  %2961 = vmatpush1.msra.mxu0 %v2616
  %2962 = vmatprep.subr.mxu0 0.0
  %2963 = vmatpush1.msra.mxu0 0.0
  %2964 = vmatprep.subr.mxu0 0.0
  %2965 = vmatpush1.msra.mxu0 0.0
  %2966 = vmatprep.subr.mxu0 0.0
  %2967 = vmatpush1.msra.mxu0 0.0
  %2968 = vmatprep.subr.mxu0 0.0
  %2969 = vmatpush1.msra.mxu0 0.0
  %2970 = vmatprep.subr.mxu0 0.0
  %2971 = vmatpush1.msra.mxu0 0.0
  %2972 = vmatprep.subr.mxu0 0.0
  %2973 = vmatpush1.msra.mxu0 0.0
  %2974 = vmatprep.subr.mxu0 0.0
  %2975 = vmatpush1.msra.mxu0 0.0
  %2976 = vmatprep.subr.mxu0 0.0
  %2977 = vmatpush1.msra.mxu0 0.0
  %2978 = vmatprep.subr.mxu0 0.0
  %2979 = vmatpush1.msra.mxu0 0.0
  %2980 = vmatprep.subr.mxu0 0.0
  %2981 = vmatpush1.msra.mxu0 0.0
  %2982 = vmatprep.subr.mxu0 0.0
  %2983 = vmatpush1.msra.mxu0 0.0
  %2984 = vmatprep.subr.mxu0 0.0
  %2985 = vmatpush1.msra.mxu0 0.0
  %2986 = vmatprep.subr.mxu0 0.0
  %2987 = vmatpush1.msra.mxu0 0.0
  %2988 = vmatprep.subr.mxu0 0.0
  %2989 = vmatpush1.msra.mxu0 0.0
  %2990 = vmatprep.subr.mxu0 0.0
  %2991 = vmatpush1.msra.mxu0 0.0
  %2992 = vmatprep.subr.mxu0 0.0
  %2993 = vmatpush1.msra.mxu0 0.0
  %2994 = vmatprep.subr.mxu0 0.0
  %2995 = vmatpush1.msra.mxu0 0.0
  %2996 = vmatprep.subr.mxu0 0.0
  %2997 = vmatpush1.msra.mxu0 0.0
  %2998 = vmatprep.subr.mxu0 0.0
  %2999 = vmatpush1.msra.mxu0 0.0
  %3000 = vmatprep.subr.mxu0 0.0
  %3001 = vmatpush1.msra.mxu0 0.0
  %3002 = vmatprep.subr.mxu0 0.0
  %3003 = vmatpush1.msra.mxu0 0.0
  %3004 = vmatprep.subr.mxu0 0.0
  %3005 = vmatpush1.msra.mxu0 0.0
  %3006 = vmatprep.subr.mxu0 0.0
  %3007 = vmatpush1.msra.mxu0 0.0
  %3008 = vmatprep.subr.mxu0 0.0
  %3009 = vmatpush1.msra.mxu0 0.0
  %3010 = vmatprep.subr.mxu0 0.0
  %3011 = vmatpush1.msra.mxu0 0.0
  %3012 = vmatprep.subr.mxu0 0.0
  %3013 = vmatpush1.msra.mxu0 0.0
  %3014 = vmatprep.subr.mxu0 0.0
  %3015 = vmatpush1.msra.mxu0 0.0
  %3016 = vmatprep.subr.mxu0 0.0
  %3017 = vmatpush1.msra.mxu0 0.0
  %3018 = vmatprep.subr.mxu0 0.0
  %3019 = vmatpush1.msra.mxu0 0.0
  %3020 = vmatprep.subr.mxu0 0.0
  %3021 = vmatpush1.msra.mxu0 0.0
  %3022 = vmatprep.subr.mxu0 0.0
  %3023 = vmatpush1.msra.mxu0 0.0
  %3024 = vmatprep.mubr.f32.mxu0 0.0
  %3025 = vmatmul.mubr.f32.gmra.mrb[0].mxu0 %v2958
  %v3026 = vpop.f32.mrb[0].mxu0
  %v3027 = vadd.f32 0.0, %v3026
  %v3028 = vpop.f32.mrb[0].mxu0
  %3029 = vdwg.mxu0
  %v3031 = vsel %vm342, %v2782, 0
  %3033 = vmatprep.subr.mxu0 0.0
  %3034 = vmatpush1.msra.mxu0 %v2615
  %3035 = vmatprep.subr.mxu0 0.0
  %3036 = vmatpush1.msra.mxu0 0.0
  %3037 = vmatprep.subr.mxu0 0.0
  %3038 = vmatpush1.msra.mxu0 0.0
  %3039 = vmatprep.subr.mxu0 0.0
  %3040 = vmatpush1.msra.mxu0 0.0
  %3041 = vmatprep.subr.mxu0 0.0
  %3042 = vmatpush1.msra.mxu0 0.0
  %3043 = vmatprep.subr.mxu0 0.0
  %3044 = vmatpush1.msra.mxu0 0.0
  %3045 = vmatprep.subr.mxu0 0.0
  %3046 = vmatpush1.msra.mxu0 0.0
  %3047 = vmatprep.subr.mxu0 0.0
  %3048 = vmatpush1.msra.mxu0 0.0
  %3049 = vmatprep.subr.mxu0 0.0
  %3050 = vmatpush1.msra.mxu0 0.0
  %3051 = vmatprep.subr.mxu0 0.0
  %3052 = vmatpush1.msra.mxu0 0.0
  %3053 = vmatprep.subr.mxu0 0.0
  %3054 = vmatpush1.msra.mxu0 0.0
  %3055 = vmatprep.subr.mxu0 0.0
  %3056 = vmatpush1.msra.mxu0 0.0
  %3057 = vmatprep.subr.mxu0 0.0
  %3058 = vmatpush1.msra.mxu0 0.0
  %3059 = vmatprep.subr.mxu0 0.0
  %3060 = vmatpush1.msra.mxu0 0.0
  %3061 = vmatprep.subr.mxu0 0.0
  %3062 = vmatpush1.msra.mxu0 0.0
  %3063 = vmatprep.subr.mxu0 0.0
  %3064 = vmatpush1.msra.mxu0 0.0
  %3065 = vmatprep.subr.mxu0 0.0
  %3066 = vmatpush1.msra.mxu0 0.0
  %3067 = vmatprep.subr.mxu0 0.0
  %3068 = vmatpush1.msra.mxu0 0.0
  %3069 = vmatprep.subr.mxu0 0.0
  %3070 = vmatpush1.msra.mxu0 0.0
  %3071 = vmatprep.subr.mxu0 0.0
  %3072 = vmatpush1.msra.mxu0 0.0
  %3073 = vmatprep.subr.mxu0 0.0
  %3074 = vmatpush1.msra.mxu0 0.0
  %3075 = vmatprep.subr.mxu0 0.0
  %3076 = vmatpush1.msra.mxu0 0.0
  %3077 = vmatprep.subr.mxu0 0.0
  %3078 = vmatpush1.msra.mxu0 0.0
  %3079 = vmatprep.subr.mxu0 0.0
  %3080 = vmatpush1.msra.mxu0 0.0
  %3081 = vmatprep.subr.mxu0 0.0
  %3082 = vmatpush1.msra.mxu0 0.0
  %3083 = vmatprep.subr.mxu0 0.0
  %3084 = vmatpush1.msra.mxu0 0.0
  %3085 = vmatprep.subr.mxu0 0.0
  %3086 = vmatpush1.msra.mxu0 0.0
  %3087 = vmatprep.subr.mxu0 0.0
  %3088 = vmatpush1.msra.mxu0 0.0
  %3089 = vmatprep.subr.mxu0 0.0
  %3090 = vmatpush1.msra.mxu0 0.0
  %3091 = vmatprep.subr.mxu0 0.0
  %3092 = vmatpush1.msra.mxu0 0.0
  %3093 = vmatprep.subr.mxu0 0.0
  %3094 = vmatpush1.msra.mxu0 0.0
  %3095 = vmatprep.subr.mxu0 0.0
  %3096 = vmatpush1.msra.mxu0 0.0
  %3097 = vmatprep.mubr.f32.mxu0 0.0
  %3098 = vmatmul.mubr.f32.gmra.mrb[0].mxu0 %v3031
  %v3099 = vpop.f32.mrb[0].mxu0
  %v3100 = vadd.f32 %v3027, %v3099
  %v3101 = vpop.f32.mrb[0].mxu0
  %3102 = vdwg.mxu0
  %3103 = vrot.lane.b32.xlu0 %v2393, 112
  %v3104 = vpop.permute.xlu0 %3103
  %3105 = vrot.lane.b32.xlu0 %v2489, 112
  %v3106 = vpop.permute.xlu0 %3105
  %3107 = vrot.lane.b32.xlu0 %v2494, 112
  %v3108 = vpop.permute.xlu0 %3107
  %v3109 = vsel %vm342, %v3104, 0
  %v3111 = vsel %vm342, %v3106, 0
  %v3113 = vsel %vm342, %v3108, 0
  %3115 = vmatprep.subr.mxu0 0.0
  %3116 = vmatpush1.xpose.msra.mxu0 %v3111
  %3117 = vmatprep.subr.mxu0 0.0
  %3118 = vmatpush1.xpose.msra.mxu0 %v3113
  %3119 = vmatprep.subr.mxu0 0.0
  %3120 = vmatpush1.xpose.msra.mxu0 0.0
  %3121 = vmatprep.subr.mxu0 0.0
  %3122 = vmatpush1.xpose.msra.mxu0 0.0
  %3123 = vmatprep.subr.mxu0 0.0
  %3124 = vmatpush1.xpose.msra.mxu0 0.0
  %3125 = vmatprep.subr.mxu0 0.0
  %3126 = vmatpush1.xpose.msra.mxu0 0.0
  %3127 = vmatprep.subr.mxu0 0.0
  %3128 = vmatpush1.xpose.msra.mxu0 0.0
  %3129 = vmatprep.subr.mxu0 0.0
  %3130 = vmatpush1.xpose.msra.mxu0 0.0
  %3131 = vmatprep.subr.mxu0 0.0
  %3132 = vmatpush1.xpose.msra.mxu0 0.0
  %3133 = vmatprep.subr.mxu0 0.0
  %3134 = vmatpush1.xpose.msra.mxu0 0.0
  %3135 = vmatprep.subr.mxu0 0.0
  %3136 = vmatpush1.xpose.msra.mxu0 0.0
  %3137 = vmatprep.subr.mxu0 0.0
  %3138 = vmatpush1.xpose.msra.mxu0 0.0
  %3139 = vmatprep.subr.mxu0 0.0
  %3140 = vmatpush1.xpose.msra.mxu0 0.0
  %3141 = vmatprep.subr.mxu0 0.0
  %3142 = vmatpush1.xpose.msra.mxu0 0.0
  %3143 = vmatprep.subr.mxu0 0.0
  %3144 = vmatpush1.xpose.msra.mxu0 0.0
  %3145 = vmatprep.subr.mxu0 0.0
  %3146 = vmatpush1.xpose.msra.mxu0 0.0
  %3147 = vmatprep.subr.mxu0 0.0
  %3148 = vmatpush1.xpose.msra.mxu0 0.0
  %3149 = vmatprep.subr.mxu0 0.0
  %3150 = vmatpush1.xpose.msra.mxu0 0.0
  %3151 = vmatprep.subr.mxu0 0.0
  %3152 = vmatpush1.xpose.msra.mxu0 0.0
  %3153 = vmatprep.subr.mxu0 0.0
  %3154 = vmatpush1.xpose.msra.mxu0 0.0
  %3155 = vmatprep.subr.mxu0 0.0
  %3156 = vmatpush1.xpose.msra.mxu0 0.0
  %3157 = vmatprep.subr.mxu0 0.0
  %3158 = vmatpush1.xpose.msra.mxu0 0.0
  %3159 = vmatprep.subr.mxu0 0.0
  %3160 = vmatpush1.xpose.msra.mxu0 0.0
  %3161 = vmatprep.subr.mxu0 0.0
  %3162 = vmatpush1.xpose.msra.mxu0 0.0
  %3163 = vmatprep.subr.mxu0 0.0
  %3164 = vmatpush1.xpose.msra.mxu0 0.0
  %3165 = vmatprep.subr.mxu0 0.0
  %3166 = vmatpush1.xpose.msra.mxu0 0.0
  %3167 = vmatprep.subr.mxu0 0.0
  %3168 = vmatpush1.xpose.msra.mxu0 0.0
  %3169 = vmatprep.subr.mxu0 0.0
  %3170 = vmatpush1.xpose.msra.mxu0 0.0
  %3171 = vmatprep.subr.mxu0 0.0
  %3172 = vmatpush1.xpose.msra.mxu0 0.0
  %3173 = vmatprep.subr.mxu0 0.0
  %3174 = vmatpush1.xpose.msra.mxu0 0.0
  %3175 = vmatprep.subr.mxu0 0.0
  %3176 = vmatpush1.xpose.msra.mxu0 0.0
  %3177 = vmatprep.subr.mxu0 0.0
  %3178 = vmatpush1.xpose.msra.mxu0 0.0
  %3179 = vmatprep.mubr.f32.mxu0 0.0
  %3180 = vmatmul.mubr.f32.gmra.mrb[0].mxu0 %v3109
  %v3181 = vpop.f32.mrb[0].mxu0
  %v3182 = vadd.f32 0.0, %v3181
  %v3183 = vpop.f32.mrb[0].mxu0
  %3184 = vdwg.mxu0
  %v3185 = vsel %vm2698, %v3182, -inf
  %3186 = vmax.xlane.f32.xlu0 %v3185
  %v3187 = vpop.xlane.xlu0 %3186
  %v3188 = vsub.f32 %v3182, %v3187
  %v3189 = vmul.f32 %v3188, 1.442695
  %v3190 = vpow.pop %v3189
  %v3191 = vsel %vm2698, %v3190, 0.0
  %3192 = vadd.xlane.f32.xlu0 %v3191
  %v3193 = vpop.xlane.xlu0 %3192
  %3194 = vrot.lane.b32.xlu0 %v2597, 112
  %v3195 = vpop.permute.xlu0 %3194
  %3196 = vrot.lane.b32.xlu0 %v2602, 112
  %v3197 = vpop.permute.xlu0 %3196
  %v3201 = vsel %vm2698, %v3190, 0
  %3203 = vmatprep.subr.mxu0 0.0
  %3204 = vmatpush1.msra.mxu0 %v3195
  %3205 = vmatprep.subr.mxu0 0.0
  %3206 = vmatpush1.msra.mxu0 %v3197
  %3207 = vmatprep.subr.mxu0 0.0
  %3208 = vmatpush1.msra.mxu0 0.0
  %3209 = vmatprep.subr.mxu0 0.0
  %3210 = vmatpush1.msra.mxu0 0.0
  %3211 = vmatprep.subr.mxu0 0.0
  %3212 = vmatpush1.msra.mxu0 0.0
  %3213 = vmatprep.subr.mxu0 0.0
  %3214 = vmatpush1.msra.mxu0 0.0
  %3215 = vmatprep.subr.mxu0 0.0
  %3216 = vmatpush1.msra.mxu0 0.0
  %3217 = vmatprep.subr.mxu0 0.0
  %3218 = vmatpush1.msra.mxu0 0.0
  %3219 = vmatprep.subr.mxu0 0.0
  %3220 = vmatpush1.msra.mxu0 0.0
  %3221 = vmatprep.subr.mxu0 0.0
  %3222 = vmatpush1.msra.mxu0 0.0
  %3223 = vmatprep.subr.mxu0 0.0
  %3224 = vmatpush1.msra.mxu0 0.0
  %3225 = vmatprep.subr.mxu0 0.0
  %3226 = vmatpush1.msra.mxu0 0.0
  %3227 = vmatprep.subr.mxu0 0.0
  %3228 = vmatpush1.msra.mxu0 0.0
  %3229 = vmatprep.subr.mxu0 0.0
  %3230 = vmatpush1.msra.mxu0 0.0
  %3231 = vmatprep.subr.mxu0 0.0
  %3232 = vmatpush1.msra.mxu0 0.0
  %3233 = vmatprep.subr.mxu0 0.0
  %3234 = vmatpush1.msra.mxu0 0.0
  %3235 = vmatprep.subr.mxu0 0.0
  %3236 = vmatpush1.msra.mxu0 0.0
  %3237 = vmatprep.subr.mxu0 0.0
  %3238 = vmatpush1.msra.mxu0 0.0
  %3239 = vmatprep.subr.mxu0 0.0
  %3240 = vmatpush1.msra.mxu0 0.0
  %3241 = vmatprep.subr.mxu0 0.0
  %3242 = vmatpush1.msra.mxu0 0.0
  %3243 = vmatprep.subr.mxu0 0.0
  %3244 = vmatpush1.msra.mxu0 0.0
  %3245 = vmatprep.subr.mxu0 0.0
  %3246 = vmatpush1.msra.mxu0 0.0
  %3247 = vmatprep.subr.mxu0 0.0
  %3248 = vmatpush1.msra.mxu0 0.0
  %3249 = vmatprep.subr.mxu0 0.0
  %3250 = vmatpush1.msra.mxu0 0.0
  %3251 = vmatprep.subr.mxu0 0.0
  %3252 = vmatpush1.msra.mxu0 0.0
  %3253 = vmatprep.subr.mxu0 0.0
  %3254 = vmatpush1.msra.mxu0 0.0
  %3255 = vmatprep.subr.mxu0 0.0
  %3256 = vmatpush1.msra.mxu0 0.0
  %3257 = vmatprep.subr.mxu0 0.0
  %3258 = vmatpush1.msra.mxu0 0.0
  %3259 = vmatprep.subr.mxu0 0.0
  %3260 = vmatpush1.msra.mxu0 0.0
  %3261 = vmatprep.subr.mxu0 0.0
  %3262 = vmatpush1.msra.mxu0 0.0
  %3263 = vmatprep.subr.mxu0 0.0
  %3264 = vmatpush1.msra.mxu0 0.0
  %3265 = vmatprep.subr.mxu0 0.0
  %3266 = vmatpush1.msra.mxu0 0.0
  %3267 = vmatprep.mubr.f32.mxu0 0.0
  %3268 = vmatmul.mubr.f32.gmra.mrb[0].mxu0 %v3201
  %v3269 = vpop.f32.mrb[0].mxu0
  %v3270 = vadd.f32 0.0, %v3269
  %v3271 = vpop.f32.mrb[0].mxu0
  %3272 = vdwg.mxu0
  %v3273 = vrcp.pop %v3193
  %v3274 = vmul.f32 %v3270, %v3273
  %v3276 = vsel %vm342, %v3274, 0
  %3278 = vmatprep.subr.mxu0 0.0
  %3279 = vmatpush1.msra.mxu0 %v2617
  %3280 = vmatprep.subr.mxu0 0.0
  %3281 = vmatpush1.msra.mxu0 0.0
  %3282 = vmatprep.subr.mxu0 0.0
  %3283 = vmatpush1.msra.mxu0 0.0
  %3284 = vmatprep.subr.mxu0 0.0
  %3285 = vmatpush1.msra.mxu0 0.0
  %3286 = vmatprep.subr.mxu0 0.0
  %3287 = vmatpush1.msra.mxu0 0.0
  %3288 = vmatprep.subr.mxu0 0.0
  %3289 = vmatpush1.msra.mxu0 0.0
  %3290 = vmatprep.subr.mxu0 0.0
  %3291 = vmatpush1.msra.mxu0 0.0
  %3292 = vmatprep.subr.mxu0 0.0
  %3293 = vmatpush1.msra.mxu0 0.0
  %3294 = vmatprep.subr.mxu0 0.0
  %3295 = vmatpush1.msra.mxu0 0.0
  %3296 = vmatprep.subr.mxu0 0.0
  %3297 = vmatpush1.msra.mxu0 0.0
  %3298 = vmatprep.subr.mxu0 0.0
  %3299 = vmatpush1.msra.mxu0 0.0
  %3300 = vmatprep.subr.mxu0 0.0
  %3301 = vmatpush1.msra.mxu0 0.0
  %3302 = vmatprep.subr.mxu0 0.0
  %3303 = vmatpush1.msra.mxu0 0.0
  %3304 = vmatprep.subr.mxu0 0.0
  %3305 = vmatpush1.msra.mxu0 0.0
  %3306 = vmatprep.subr.mxu0 0.0
  %3307 = vmatpush1.msra.mxu0 0.0
  %3308 = vmatprep.subr.mxu0 0.0
  %3309 = vmatpush1.msra.mxu0 0.0
  %3310 = vmatprep.subr.mxu0 0.0
  %3311 = vmatpush1.msra.mxu0 0.0
  %3312 = vmatprep.subr.mxu0 0.0
  %3313 = vmatpush1.msra.mxu0 0.0
  %3314 = vmatprep.subr.mxu0 0.0
  %3315 = vmatpush1.msra.mxu0 0.0
  %3316 = vmatprep.subr.mxu0 0.0
  %3317 = vmatpush1.msra.mxu0 0.0
  %3318 = vmatprep.subr.mxu0 0.0
  %3319 = vmatpush1.msra.mxu0 0.0
  %3320 = vmatprep.subr.mxu0 0.0
  %3321 = vmatpush1.msra.mxu0 0.0
  %3322 = vmatprep.subr.mxu0 0.0
  %3323 = vmatpush1.msra.mxu0 0.0
  %3324 = vmatprep.subr.mxu0 0.0
  %3325 = vmatpush1.msra.mxu0 0.0
  %3326 = vmatprep.subr.mxu0 0.0
  %3327 = vmatpush1.msra.mxu0 0.0
  %3328 = vmatprep.subr.mxu0 0.0
  %3329 = vmatpush1.msra.mxu0 0.0
  %3330 = vmatprep.subr.mxu0 0.0
  %3331 = vmatpush1.msra.mxu0 0.0
  %3332 = vmatprep.subr.mxu0 0.0
  %3333 = vmatpush1.msra.mxu0 0.0
  %3334 = vmatprep.subr.mxu0 0.0
  %3335 = vmatpush1.msra.mxu0 0.0
  %3336 = vmatprep.subr.mxu0 0.0
  %3337 = vmatpush1.msra.mxu0 0.0
  %3338 = vmatprep.subr.mxu0 0.0
  %3339 = vmatpush1.msra.mxu0 0.0
  %3340 = vmatprep.subr.mxu0 0.0
  %3341 = vmatpush1.msra.mxu0 0.0
  %3342 = vmatprep.mubr.f32.mxu0 0.0
  %3343 = vmatmul.mubr.f32.gmra.mrb[0].mxu0 %v3276
  %v3344 = vpop.f32.mrb[0].mxu0
  %v3345 = vadd.f32 0.0, %v3344
  %v3346 = vpop.f32.mrb[0].mxu0
  %3347 = vdwg.mxu0
  %v3348 = vadd.f32 %v3100, %v3345
  %3349 = vrot.lane.b32.xlu0 %v2393, 104
  %v3350 = vpop.permute.xlu0 %3349
  %3351 = vrot.lane.b32.xlu0 %v2489, 104
  %v3352 = vpop.permute.xlu0 %3351
  %3353 = vrot.lane.b32.xlu0 %v2494, 104
  %v3354 = vpop.permute.xlu0 %3353
  %v3355 = vsel %vm342, %v3350, 0
  %v3357 = vsel %vm342, %v3352, 0
  %v3359 = vsel %vm342, %v3354, 0
  %3361 = vmatprep.subr.mxu0 0.0
  %3362 = vmatpush1.xpose.msra.mxu0 %v3357
  %3363 = vmatprep.subr.mxu0 0.0
  %3364 = vmatpush1.xpose.msra.mxu0 %v3359
  %3365 = vmatprep.subr.mxu0 0.0
  %3366 = vmatpush1.xpose.msra.mxu0 0.0
  %3367 = vmatprep.subr.mxu0 0.0
  %3368 = vmatpush1.xpose.msra.mxu0 0.0
  %3369 = vmatprep.subr.mxu0 0.0
  %3370 = vmatpush1.xpose.msra.mxu0 0.0
  %3371 = vmatprep.subr.mxu0 0.0
  %3372 = vmatpush1.xpose.msra.mxu0 0.0
  %3373 = vmatprep.subr.mxu0 0.0
  %3374 = vmatpush1.xpose.msra.mxu0 0.0
  %3375 = vmatprep.subr.mxu0 0.0
  %3376 = vmatpush1.xpose.msra.mxu0 0.0
  %3377 = vmatprep.subr.mxu0 0.0
  %3378 = vmatpush1.xpose.msra.mxu0 0.0
  %3379 = vmatprep.subr.mxu0 0.0
  %3380 = vmatpush1.xpose.msra.mxu0 0.0
  %3381 = vmatprep.subr.mxu0 0.0
  %3382 = vmatpush1.xpose.msra.mxu0 0.0
  %3383 = vmatprep.subr.mxu0 0.0
  %3384 = vmatpush1.xpose.msra.mxu0 0.0
  %3385 = vmatprep.subr.mxu0 0.0
  %3386 = vmatpush1.xpose.msra.mxu0 0.0
  %3387 = vmatprep.subr.mxu0 0.0
  %3388 = vmatpush1.xpose.msra.mxu0 0.0
  %3389 = vmatprep.subr.mxu0 0.0
  %3390 = vmatpush1.xpose.msra.mxu0 0.0
  %3391 = vmatprep.subr.mxu0 0.0
  %3392 = vmatpush1.xpose.msra.mxu0 0.0
  %3393 = vmatprep.subr.mxu0 0.0
  %3394 = vmatpush1.xpose.msra.mxu0 0.0
  %3395 = vmatprep.subr.mxu0 0.0
  %3396 = vmatpush1.xpose.msra.mxu0 0.0
  %3397 = vmatprep.subr.mxu0 0.0
  %3398 = vmatpush1.xpose.msra.mxu0 0.0
  %3399 = vmatprep.subr.mxu0 0.0
  %3400 = vmatpush1.xpose.msra.mxu0 0.0
  %3401 = vmatprep.subr.mxu0 0.0
  %3402 = vmatpush1.xpose.msra.mxu0 0.0
  %3403 = vmatprep.subr.mxu0 0.0
  %3404 = vmatpush1.xpose.msra.mxu0 0.0
  %3405 = vmatprep.subr.mxu0 0.0
  %3406 = vmatpush1.xpose.msra.mxu0 0.0
  %3407 = vmatprep.subr.mxu0 0.0
  %3408 = vmatpush1.xpose.msra.mxu0 0.0
  %3409 = vmatprep.subr.mxu0 0.0
  %3410 = vmatpush1.xpose.msra.mxu0 0.0
  %3411 = vmatprep.subr.mxu0 0.0
  %3412 = vmatpush1.xpose.msra.mxu0 0.0
  %3413 = vmatprep.subr.mxu0 0.0
  %3414 = vmatpush1.xpose.msra.mxu0 0.0
  %3415 = vmatprep.subr.mxu0 0.0
  %3416 = vmatpush1.xpose.msra.mxu0 0.0
  %3417 = vmatprep.subr.mxu0 0.0
  %3418 = vmatpush1.xpose.msra.mxu0 0.0
  %3419 = vmatprep.subr.mxu0 0.0
  %3420 = vmatpush1.xpose.msra.mxu0 0.0
  %3421 = vmatprep.subr.mxu0 0.0
  %3422 = vmatpush1.xpose.msra.mxu0 0.0
  %3423 = vmatprep.subr.mxu0 0.0
  %3424 = vmatpush1.xpose.msra.mxu0 0.0
  %3425 = vmatprep.mubr.f32.mxu0 0.0
  %3426 = vmatmul.mubr.f32.gmra.mrb[0].mxu0 %v3355
  %v3427 = vpop.f32.mrb[0].mxu0
  %v3428 = vadd.f32 0.0, %v3427
  %v3429 = vpop.f32.mrb[0].mxu0
  %3430 = vdwg.mxu0
  %v3431 = vsel %vm2698, %v3428, -inf
  %3432 = vmax.xlane.f32.xlu0 %v3431
  %v3433 = vpop.xlane.xlu0 %3432
  %v3434 = vsub.f32 %v3428, %v3433
  %v3435 = vmul.f32 %v3434, 1.442695
  %v3436 = vpow.pop %v3435
  %v3437 = vsel %vm2698, %v3436, 0.0
  %3438 = vadd.xlane.f32.xlu0 %v3437
  %v3439 = vpop.xlane.xlu0 %3438
  %3440 = vrot.lane.b32.xlu0 %v2597, 104
  %v3441 = vpop.permute.xlu0 %3440
  %3442 = vrot.lane.b32.xlu0 %v2602, 104
  %v3443 = vpop.permute.xlu0 %3442
  %v3447 = vsel %vm2698, %v3436, 0
  %3449 = vmatprep.subr.mxu0 0.0
  %3450 = vmatpush1.msra.mxu0 %v3441
  %3451 = vmatprep.subr.mxu0 0.0
  %3452 = vmatpush1.msra.mxu0 %v3443
  %3453 = vmatprep.subr.mxu0 0.0
  %3454 = vmatpush1.msra.mxu0 0.0
  %3455 = vmatprep.subr.mxu0 0.0
  %3456 = vmatpush1.msra.mxu0 0.0
  %3457 = vmatprep.subr.mxu0 0.0
  %3458 = vmatpush1.msra.mxu0 0.0
  %3459 = vmatprep.subr.mxu0 0.0
  %3460 = vmatpush1.msra.mxu0 0.0
  %3461 = vmatprep.subr.mxu0 0.0
  %3462 = vmatpush1.msra.mxu0 0.0
  %3463 = vmatprep.subr.mxu0 0.0
  %3464 = vmatpush1.msra.mxu0 0.0
  %3465 = vmatprep.subr.mxu0 0.0
  %3466 = vmatpush1.msra.mxu0 0.0
  %3467 = vmatprep.subr.mxu0 0.0
  %3468 = vmatpush1.msra.mxu0 0.0
  %3469 = vmatprep.subr.mxu0 0.0
  %3470 = vmatpush1.msra.mxu0 0.0
  %3471 = vmatprep.subr.mxu0 0.0
  %3472 = vmatpush1.msra.mxu0 0.0
  %3473 = vmatprep.subr.mxu0 0.0
  %3474 = vmatpush1.msra.mxu0 0.0
  %3475 = vmatprep.subr.mxu0 0.0
  %3476 = vmatpush1.msra.mxu0 0.0
  %3477 = vmatprep.subr.mxu0 0.0
  %3478 = vmatpush1.msra.mxu0 0.0
  %3479 = vmatprep.subr.mxu0 0.0
  %3480 = vmatpush1.msra.mxu0 0.0
  %3481 = vmatprep.subr.mxu0 0.0
  %3482 = vmatpush1.msra.mxu0 0.0
  %3483 = vmatprep.subr.mxu0 0.0
  %3484 = vmatpush1.msra.mxu0 0.0
  %3485 = vmatprep.subr.mxu0 0.0
  %3486 = vmatpush1.msra.mxu0 0.0
  %3487 = vmatprep.subr.mxu0 0.0
  %3488 = vmatpush1.msra.mxu0 0.0
  %3489 = vmatprep.subr.mxu0 0.0
  %3490 = vmatpush1.msra.mxu0 0.0
  %3491 = vmatprep.subr.mxu0 0.0
  %3492 = vmatpush1.msra.mxu0 0.0
  %3493 = vmatprep.subr.mxu0 0.0
  %3494 = vmatpush1.msra.mxu0 0.0
  %3495 = vmatprep.subr.mxu0 0.0
  %3496 = vmatpush1.msra.mxu0 0.0
  %3497 = vmatprep.subr.mxu0 0.0
  %3498 = vmatpush1.msra.mxu0 0.0
  %3499 = vmatprep.subr.mxu0 0.0
  %3500 = vmatpush1.msra.mxu0 0.0
  %3501 = vmatprep.subr.mxu0 0.0
  %3502 = vmatpush1.msra.mxu0 0.0
  %3503 = vmatprep.subr.mxu0 0.0
  %3504 = vmatpush1.msra.mxu0 0.0
  %3505 = vmatprep.subr.mxu0 0.0
  %3506 = vmatpush1.msra.mxu0 0.0
  %3507 = vmatprep.subr.mxu0 0.0
  %3508 = vmatpush1.msra.mxu0 0.0
  %3509 = vmatprep.subr.mxu0 0.0
  %3510 = vmatpush1.msra.mxu0 0.0
  %3511 = vmatprep.subr.mxu0 0.0
  %3512 = vmatpush1.msra.mxu0 0.0
  %3513 = vmatprep.mubr.f32.mxu0 0.0
  %3514 = vmatmul.mubr.f32.gmra.mrb[0].mxu0 %v3447
  %v3515 = vpop.f32.mrb[0].mxu0
  %v3516 = vadd.f32 0.0, %v3515
  %v3517 = vpop.f32.mrb[0].mxu0
  %3518 = vdwg.mxu0
  %v3519 = vrcp.pop %v3439
  %v3520 = vmul.f32 %v3516, %v3519
  %v3522 = vsel %vm342, %v3520, 0
  %3524 = vmatprep.subr.mxu0 0.0
  %3525 = vmatpush1.msra.mxu0 %v2618
  %3526 = vmatprep.subr.mxu0 0.0
  %3527 = vmatpush1.msra.mxu0 0.0
  %3528 = vmatprep.subr.mxu0 0.0
  %3529 = vmatpush1.msra.mxu0 0.0
  %3530 = vmatprep.subr.mxu0 0.0
  %3531 = vmatpush1.msra.mxu0 0.0
  %3532 = vmatprep.subr.mxu0 0.0
  %3533 = vmatpush1.msra.mxu0 0.0
  %3534 = vmatprep.subr.mxu0 0.0
  %3535 = vmatpush1.msra.mxu0 0.0
  %3536 = vmatprep.subr.mxu0 0.0
  %3537 = vmatpush1.msra.mxu0 0.0
  %3538 = vmatprep.subr.mxu0 0.0
  %3539 = vmatpush1.msra.mxu0 0.0
  %3540 = vmatprep.subr.mxu0 0.0
  %3541 = vmatpush1.msra.mxu0 0.0
  %3542 = vmatprep.subr.mxu0 0.0
  %3543 = vmatpush1.msra.mxu0 0.0
  %3544 = vmatprep.subr.mxu0 0.0
  %3545 = vmatpush1.msra.mxu0 0.0
  %3546 = vmatprep.subr.mxu0 0.0
  %3547 = vmatpush1.msra.mxu0 0.0
  %3548 = vmatprep.subr.mxu0 0.0
  %3549 = vmatpush1.msra.mxu0 0.0
  %3550 = vmatprep.subr.mxu0 0.0
  %3551 = vmatpush1.msra.mxu0 0.0
  %3552 = vmatprep.subr.mxu0 0.0
  %3553 = vmatpush1.msra.mxu0 0.0
  %3554 = vmatprep.subr.mxu0 0.0
  %3555 = vmatpush1.msra.mxu0 0.0
  %3556 = vmatprep.subr.mxu0 0.0
  %3557 = vmatpush1.msra.mxu0 0.0
  %3558 = vmatprep.subr.mxu0 0.0
  %3559 = vmatpush1.msra.mxu0 0.0
  %3560 = vmatprep.subr.mxu0 0.0
  %3561 = vmatpush1.msra.mxu0 0.0
  %3562 = vmatprep.subr.mxu0 0.0
  %3563 = vmatpush1.msra.mxu0 0.0
  %3564 = vmatprep.subr.mxu0 0.0
  %3565 = vmatpush1.msra.mxu0 0.0
  %3566 = vmatprep.subr.mxu0 0.0
  %3567 = vmatpush1.msra.mxu0 0.0
  %3568 = vmatprep.subr.mxu0 0.0
  %3569 = vmatpush1.msra.mxu0 0.0
  %3570 = vmatprep.subr.mxu0 0.0
  %3571 = vmatpush1.msra.mxu0 0.0
  %3572 = vmatprep.subr.mxu0 0.0
  %3573 = vmatpush1.msra.mxu0 0.0
  %3574 = vmatprep.subr.mxu0 0.0
  %3575 = vmatpush1.msra.mxu0 0.0
  %3576 = vmatprep.subr.mxu0 0.0
  %3577 = vmatpush1.msra.mxu0 0.0
  %3578 = vmatprep.subr.mxu0 0.0
  %3579 = vmatpush1.msra.mxu0 0.0
  %3580 = vmatprep.subr.mxu0 0.0
  %3581 = vmatpush1.msra.mxu0 0.0
  %3582 = vmatprep.subr.mxu0 0.0
  %3583 = vmatpush1.msra.mxu0 0.0
  %3584 = vmatprep.subr.mxu0 0.0
  %3585 = vmatpush1.msra.mxu0 0.0
  %3586 = vmatprep.subr.mxu0 0.0
  %3587 = vmatpush1.msra.mxu0 0.0
  %3588 = vmatprep.mubr.f32.mxu0 0.0
  %3589 = vmatmul.mubr.f32.gmra.mrb[0].mxu0 %v3522
  %v3590 = vpop.f32.mrb[0].mxu0
  %v3591 = vadd.f32 0.0, %v3590
  %v3592 = vpop.f32.mrb[0].mxu0
  %3593 = vdwg.mxu0
  %v3594 = vadd.f32 %v3348, %v3591
  %v3596 = vsel %vm342, %v2394, 0
  %v3599 = vsel %vm342, %v2499, 0
  %v3602 = vsel %vm342, %v2504, 0
  %3604 = vmatprep.subr.mxu0 0.0
  %3605 = vmatpush1.xpose.msra.mxu0 %v3599
  %3606 = vmatprep.subr.mxu0 0.0
  %3607 = vmatpush1.xpose.msra.mxu0 %v3602
  %3608 = vmatprep.subr.mxu0 0.0
  %3609 = vmatpush1.xpose.msra.mxu0 0.0
  %3610 = vmatprep.subr.mxu0 0.0
  %3611 = vmatpush1.xpose.msra.mxu0 0.0
  %3612 = vmatprep.subr.mxu0 0.0
  %3613 = vmatpush1.xpose.msra.mxu0 0.0
  %3614 = vmatprep.subr.mxu0 0.0
  %3615 = vmatpush1.xpose.msra.mxu0 0.0
  %3616 = vmatprep.subr.mxu0 0.0
  %3617 = vmatpush1.xpose.msra.mxu0 0.0
  %3618 = vmatprep.subr.mxu0 0.0
  %3619 = vmatpush1.xpose.msra.mxu0 0.0
  %3620 = vmatprep.subr.mxu0 0.0
  %3621 = vmatpush1.xpose.msra.mxu0 0.0
  %3622 = vmatprep.subr.mxu0 0.0
  %3623 = vmatpush1.xpose.msra.mxu0 0.0
  %3624 = vmatprep.subr.mxu0 0.0
  %3625 = vmatpush1.xpose.msra.mxu0 0.0
  %3626 = vmatprep.subr.mxu0 0.0
  %3627 = vmatpush1.xpose.msra.mxu0 0.0
  %3628 = vmatprep.subr.mxu0 0.0
  %3629 = vmatpush1.xpose.msra.mxu0 0.0
  %3630 = vmatprep.subr.mxu0 0.0
  %3631 = vmatpush1.xpose.msra.mxu0 0.0
  %3632 = vmatprep.subr.mxu0 0.0
  %3633 = vmatpush1.xpose.msra.mxu0 0.0
  %3634 = vmatprep.subr.mxu0 0.0
  %3635 = vmatpush1.xpose.msra.mxu0 0.0
  %3636 = vmatprep.subr.mxu0 0.0
  %3637 = vmatpush1.xpose.msra.mxu0 0.0
  %3638 = vmatprep.subr.mxu0 0.0
  %3639 = vmatpush1.xpose.msra.mxu0 0.0
  %3640 = vmatprep.subr.mxu0 0.0
  %3641 = vmatpush1.xpose.msra.mxu0 0.0
  %3642 = vmatprep.subr.mxu0 0.0
  %3643 = vmatpush1.xpose.msra.mxu0 0.0
  %3644 = vmatprep.subr.mxu0 0.0
  %3645 = vmatpush1.xpose.msra.mxu0 0.0
  %3646 = vmatprep.subr.mxu0 0.0
  %3647 = vmatpush1.xpose.msra.mxu0 0.0
  %3648 = vmatprep.subr.mxu0 0.0
  %3649 = vmatpush1.xpose.msra.mxu0 0.0
  %3650 = vmatprep.subr.mxu0 0.0
  %3651 = vmatpush1.xpose.msra.mxu0 0.0
  %3652 = vmatprep.subr.mxu0 0.0
  %3653 = vmatpush1.xpose.msra.mxu0 0.0
  %3654 = vmatprep.subr.mxu0 0.0
  %3655 = vmatpush1.xpose.msra.mxu0 0.0
  %3656 = vmatprep.subr.mxu0 0.0
  %3657 = vmatpush1.xpose.msra.mxu0 0.0
  %3658 = vmatprep.subr.mxu0 0.0
  %3659 = vmatpush1.xpose.msra.mxu0 0.0
  %3660 = vmatprep.subr.mxu0 0.0
  %3661 = vmatpush1.xpose.msra.mxu0 0.0
  %3662 = vmatprep.subr.mxu0 0.0
  %3663 = vmatpush1.xpose.msra.mxu0 0.0
  %3664 = vmatprep.subr.mxu0 0.0
  %3665 = vmatpush1.xpose.msra.mxu0 0.0
  %3666 = vmatprep.subr.mxu0 0.0
  %3667 = vmatpush1.xpose.msra.mxu0 0.0
  %3668 = vmatprep.mubr.f32.mxu0 0.0
  %3669 = vmatmul.mubr.f32.gmra.mrb[0].mxu0 %v3596
  %v3670 = vpop.f32.mrb[0].mxu0
  %v3671 = vadd.f32 0.0, %v3670
  %v3672 = vpop.f32.mrb[0].mxu0
  %3673 = vdwg.mxu0
  %v3674 = vsel %vm2698, %v3671, -inf
  %3675 = vmax.xlane.f32.xlu0 %v3674
  %v3676 = vpop.xlane.xlu0 %3675
  %v3677 = vsub.f32 %v3671, %v3676
  %v3678 = vmul.f32 %v3677, 1.442695
  %v3679 = vpow.pop %v3678
  %v3680 = vsel %vm2698, %v3679, 0.0
  %3681 = vadd.xlane.f32.xlu0 %v3680
  %v3682 = vpop.xlane.xlu0 %3681
  %v3684 = vsel %vm2698, %v3679, 0
  %3686 = vmatprep.subr.mxu0 0.0
  %3687 = vmatpush1.msra.mxu0 %v2607
  %3688 = vmatprep.subr.mxu0 0.0
  %3689 = vmatpush1.msra.mxu0 %v2612
  %3690 = vmatprep.subr.mxu0 0.0
  %3691 = vmatpush1.msra.mxu0 0.0
  %3692 = vmatprep.subr.mxu0 0.0
  %3693 = vmatpush1.msra.mxu0 0.0
  %3694 = vmatprep.subr.mxu0 0.0
  %3695 = vmatpush1.msra.mxu0 0.0
  %3696 = vmatprep.subr.mxu0 0.0
  %3697 = vmatpush1.msra.mxu0 0.0
  %3698 = vmatprep.subr.mxu0 0.0
  %3699 = vmatpush1.msra.mxu0 0.0
  %3700 = vmatprep.subr.mxu0 0.0
  %3701 = vmatpush1.msra.mxu0 0.0
  %3702 = vmatprep.subr.mxu0 0.0
  %3703 = vmatpush1.msra.mxu0 0.0
  %3704 = vmatprep.subr.mxu0 0.0
  %3705 = vmatpush1.msra.mxu0 0.0
  %3706 = vmatprep.subr.mxu0 0.0
  %3707 = vmatpush1.msra.mxu0 0.0
  %3708 = vmatprep.subr.mxu0 0.0
  %3709 = vmatpush1.msra.mxu0 0.0
  %3710 = vmatprep.subr.mxu0 0.0
  %3711 = vmatpush1.msra.mxu0 0.0
  %3712 = vmatprep.subr.mxu0 0.0
  %3713 = vmatpush1.msra.mxu0 0.0
  %3714 = vmatprep.subr.mxu0 0.0
  %3715 = vmatpush1.msra.mxu0 0.0
  %3716 = vmatprep.subr.mxu0 0.0
  %3717 = vmatpush1.msra.mxu0 0.0
  %3718 = vmatprep.subr.mxu0 0.0
  %3719 = vmatpush1.msra.mxu0 0.0
  %3720 = vmatprep.subr.mxu0 0.0
  %3721 = vmatpush1.msra.mxu0 0.0
  %3722 = vmatprep.subr.mxu0 0.0
  %3723 = vmatpush1.msra.mxu0 0.0
  %3724 = vmatprep.subr.mxu0 0.0
  %3725 = vmatpush1.msra.mxu0 0.0
  %3726 = vmatprep.subr.mxu0 0.0
  %3727 = vmatpush1.msra.mxu0 0.0
  %3728 = vmatprep.subr.mxu0 0.0
  %3729 = vmatpush1.msra.mxu0 0.0
  %3730 = vmatprep.subr.mxu0 0.0
  %3731 = vmatpush1.msra.mxu0 0.0
  %3732 = vmatprep.subr.mxu0 0.0
  %3733 = vmatpush1.msra.mxu0 0.0
  %3734 = vmatprep.subr.mxu0 0.0
  %3735 = vmatpush1.msra.mxu0 0.0
  %3736 = vmatprep.subr.mxu0 0.0
  %3737 = vmatpush1.msra.mxu0 0.0
  %3738 = vmatprep.subr.mxu0 0.0
  %3739 = vmatpush1.msra.mxu0 0.0
  %3740 = vmatprep.subr.mxu0 0.0
  %3741 = vmatpush1.msra.mxu0 0.0
  %3742 = vmatprep.subr.mxu0 0.0
  %3743 = vmatpush1.msra.mxu0 0.0
  %3744 = vmatprep.subr.mxu0 0.0
  %3745 = vmatpush1.msra.mxu0 0.0
  %3746 = vmatprep.subr.mxu0 0.0
  %3747 = vmatpush1.msra.mxu0 0.0
  %3748 = vmatprep.subr.mxu0 0.0
  %3749 = vmatpush1.msra.mxu0 0.0
  %3750 = vmatprep.mubr.f32.mxu0 0.0
  %3751 = vmatmul.mubr.f32.gmra.mrb[0].mxu0 %v3684
  %v3752 = vpop.f32.mrb[0].mxu0
  %v3753 = vadd.f32 0.0, %v3752
  %v3754 = vpop.f32.mrb[0].mxu0
  %3755 = vdwg.mxu0
  %v3756 = vrcp.pop %v3682
  %v3757 = vmul.f32 %v3753, %v3756
  %3758 = vrot.lane.b32.xlu0 %v2394, 120
  %v3759 = vpop.permute.xlu0 %3758
  %3760 = vrot.lane.b32.xlu0 %v2499, 120
  %v3761 = vpop.permute.xlu0 %3760
  %3762 = vrot.lane.b32.xlu0 %v2504, 120
  %v3763 = vpop.permute.xlu0 %3762
  %v3764 = vsel %vm342, %v3759, 0
  %v3766 = vsel %vm342, %v3761, 0
  %v3768 = vsel %vm342, %v3763, 0
  %3770 = vmatprep.subr.mxu0 0.0
  %3771 = vmatpush1.xpose.msra.mxu0 %v3766
  %3772 = vmatprep.subr.mxu0 0.0
  %3773 = vmatpush1.xpose.msra.mxu0 %v3768
  %3774 = vmatprep.subr.mxu0 0.0
  %3775 = vmatpush1.xpose.msra.mxu0 0.0
  %3776 = vmatprep.subr.mxu0 0.0
  %3777 = vmatpush1.xpose.msra.mxu0 0.0
  %3778 = vmatprep.subr.mxu0 0.0
  %3779 = vmatpush1.xpose.msra.mxu0 0.0
  %3780 = vmatprep.subr.mxu0 0.0
  %3781 = vmatpush1.xpose.msra.mxu0 0.0
  %3782 = vmatprep.subr.mxu0 0.0
  %3783 = vmatpush1.xpose.msra.mxu0 0.0
  %3784 = vmatprep.subr.mxu0 0.0
  %3785 = vmatpush1.xpose.msra.mxu0 0.0
  %3786 = vmatprep.subr.mxu0 0.0
  %3787 = vmatpush1.xpose.msra.mxu0 0.0
  %3788 = vmatprep.subr.mxu0 0.0
  %3789 = vmatpush1.xpose.msra.mxu0 0.0
  %3790 = vmatprep.subr.mxu0 0.0
  %3791 = vmatpush1.xpose.msra.mxu0 0.0
  %3792 = vmatprep.subr.mxu0 0.0
  %3793 = vmatpush1.xpose.msra.mxu0 0.0
  %3794 = vmatprep.subr.mxu0 0.0
  %3795 = vmatpush1.xpose.msra.mxu0 0.0
  %3796 = vmatprep.subr.mxu0 0.0
  %3797 = vmatpush1.xpose.msra.mxu0 0.0
  %3798 = vmatprep.subr.mxu0 0.0
  %3799 = vmatpush1.xpose.msra.mxu0 0.0
  %3800 = vmatprep.subr.mxu0 0.0
  %3801 = vmatpush1.xpose.msra.mxu0 0.0
  %3802 = vmatprep.subr.mxu0 0.0
  %3803 = vmatpush1.xpose.msra.mxu0 0.0
  %3804 = vmatprep.subr.mxu0 0.0
  %3805 = vmatpush1.xpose.msra.mxu0 0.0
  %3806 = vmatprep.subr.mxu0 0.0
  %3807 = vmatpush1.xpose.msra.mxu0 0.0
  %3808 = vmatprep.subr.mxu0 0.0
  %3809 = vmatpush1.xpose.msra.mxu0 0.0
  %3810 = vmatprep.subr.mxu0 0.0
  %3811 = vmatpush1.xpose.msra.mxu0 0.0
  %3812 = vmatprep.subr.mxu0 0.0
  %3813 = vmatpush1.xpose.msra.mxu0 0.0
  %3814 = vmatprep.subr.mxu0 0.0
  %3815 = vmatpush1.xpose.msra.mxu0 0.0
  %3816 = vmatprep.subr.mxu0 0.0
  %3817 = vmatpush1.xpose.msra.mxu0 0.0
  %3818 = vmatprep.subr.mxu0 0.0
  %3819 = vmatpush1.xpose.msra.mxu0 0.0
  %3820 = vmatprep.subr.mxu0 0.0
  %3821 = vmatpush1.xpose.msra.mxu0 0.0
  %3822 = vmatprep.subr.mxu0 0.0
  %3823 = vmatpush1.xpose.msra.mxu0 0.0
  %3824 = vmatprep.subr.mxu0 0.0
  %3825 = vmatpush1.xpose.msra.mxu0 0.0
  %3826 = vmatprep.subr.mxu0 0.0
  %3827 = vmatpush1.xpose.msra.mxu0 0.0
  %3828 = vmatprep.subr.mxu0 0.0
  %3829 = vmatpush1.xpose.msra.mxu0 0.0
  %3830 = vmatprep.subr.mxu0 0.0
  %3831 = vmatpush1.xpose.msra.mxu0 0.0
  %3832 = vmatprep.subr.mxu0 0.0
  %3833 = vmatpush1.xpose.msra.mxu0 0.0
  %3834 = vmatprep.mubr.f32.mxu0 0.0
  %3835 = vmatmul.mubr.f32.gmra.mrb[0].mxu0 %v3764
  %v3836 = vpop.f32.mrb[0].mxu0
  %v3837 = vadd.f32 0.0, %v3836
  %v3838 = vpop.f32.mrb[0].mxu0
  %3839 = vdwg.mxu0
  %v3840 = vsel %vm2698, %v3837, -inf
  %3841 = vmax.xlane.f32.xlu0 %v3840
  %v3842 = vpop.xlane.xlu0 %3841
  %v3843 = vsub.f32 %v3837, %v3842
  %v3844 = vmul.f32 %v3843, 1.442695
  %v3845 = vpow.pop %v3844
  %v3846 = vsel %vm2698, %v3845, 0.0
  %3847 = vadd.xlane.f32.xlu0 %v3846
  %v3848 = vpop.xlane.xlu0 %3847
  %3851 = vrot.lane.b32.xlu0 %v2607, 120
  %v3852 = vpop.permute.xlu0 %3851
  %3853 = vrot.lane.b32.xlu0 %v2612, 120
  %v3854 = vpop.permute.xlu0 %3853
  %v3858 = vsel %vm2698, %v3845, 0
  %3860 = vmatprep.subr.mxu0 0.0
  %3861 = vmatpush1.msra.mxu0 %v3852
  %3862 = vmatprep.subr.mxu0 0.0
  %3863 = vmatpush1.msra.mxu0 %v3854
  %3864 = vmatprep.subr.mxu0 0.0
  %3865 = vmatpush1.msra.mxu0 0.0
  %3866 = vmatprep.subr.mxu0 0.0
  %3867 = vmatpush1.msra.mxu0 0.0
  %3868 = vmatprep.subr.mxu0 0.0
  %3869 = vmatpush1.msra.mxu0 0.0
  %3870 = vmatprep.subr.mxu0 0.0
  %3871 = vmatpush1.msra.mxu0 0.0
  %3872 = vmatprep.subr.mxu0 0.0
  %3873 = vmatpush1.msra.mxu0 0.0
  %3874 = vmatprep.subr.mxu0 0.0
  %3875 = vmatpush1.msra.mxu0 0.0
  %3876 = vmatprep.subr.mxu0 0.0
  %3877 = vmatpush1.msra.mxu0 0.0
  %3878 = vmatprep.subr.mxu0 0.0
  %3879 = vmatpush1.msra.mxu0 0.0
  %3880 = vmatprep.subr.mxu0 0.0
  %3881 = vmatpush1.msra.mxu0 0.0
  %3882 = vmatprep.subr.mxu0 0.0
  %3883 = vmatpush1.msra.mxu0 0.0
  %3884 = vmatprep.subr.mxu0 0.0
  %3885 = vmatpush1.msra.mxu0 0.0
  %3886 = vmatprep.subr.mxu0 0.0
  %3887 = vmatpush1.msra.mxu0 0.0
  %3888 = vmatprep.subr.mxu0 0.0
  %3889 = vmatpush1.msra.mxu0 0.0
  %3890 = vmatprep.subr.mxu0 0.0
  %3891 = vmatpush1.msra.mxu0 0.0
  %3892 = vmatprep.subr.mxu0 0.0
  %3893 = vmatpush1.msra.mxu0 0.0
  %3894 = vmatprep.subr.mxu0 0.0
  %3895 = vmatpush1.msra.mxu0 0.0
  %3896 = vmatprep.subr.mxu0 0.0
  %3897 = vmatpush1.msra.mxu0 0.0
  %3898 = vmatprep.subr.mxu0 0.0
  %3899 = vmatpush1.msra.mxu0 0.0
  %3900 = vmatprep.subr.mxu0 0.0
  %3901 = vmatpush1.msra.mxu0 0.0
  %3902 = vmatprep.subr.mxu0 0.0
  %3903 = vmatpush1.msra.mxu0 0.0
  %3904 = vmatprep.subr.mxu0 0.0
  %3905 = vmatpush1.msra.mxu0 0.0
  %3906 = vmatprep.subr.mxu0 0.0
  %3907 = vmatpush1.msra.mxu0 0.0
  %3908 = vmatprep.subr.mxu0 0.0
  %3909 = vmatpush1.msra.mxu0 0.0
  %3910 = vmatprep.subr.mxu0 0.0
  %3911 = vmatpush1.msra.mxu0 0.0
  %3912 = vmatprep.subr.mxu0 0.0
  %3913 = vmatpush1.msra.mxu0 0.0
  %3914 = vmatprep.subr.mxu0 0.0
  %3915 = vmatpush1.msra.mxu0 0.0
  %3916 = vmatprep.subr.mxu0 0.0
  %3917 = vmatpush1.msra.mxu0 0.0
  %3918 = vmatprep.subr.mxu0 0.0
  %3919 = vmatpush1.msra.mxu0 0.0
  %3920 = vmatprep.subr.mxu0 0.0
  %3921 = vmatpush1.msra.mxu0 0.0
  %3922 = vmatprep.subr.mxu0 0.0
  %3923 = vmatpush1.msra.mxu0 0.0
  %3924 = vmatprep.mubr.f32.mxu0 0.0
  %3925 = vmatmul.mubr.f32.gmra.mrb[0].mxu0 %v3858
  %v3926 = vpop.f32.mrb[0].mxu0
  %v3927 = vadd.f32 0.0, %v3926
  %v3928 = vpop.f32.mrb[0].mxu0
  %3929 = vdwg.mxu0
  %v3930 = vrcp.pop %v3848
  %v3931 = vmul.f32 %v3927, %v3930
  %v3933 = vsel %vm342, %v3931, 0
  %3935 = vmatprep.subr.mxu0 0.0
  %3936 = vmatpush1.msra.mxu0 %v2616
  %3937 = vmatprep.subr.mxu0 0.0
  %3938 = vmatpush1.msra.mxu0 0.0
  %3939 = vmatprep.subr.mxu0 0.0
  %3940 = vmatpush1.msra.mxu0 0.0
  %3941 = vmatprep.subr.mxu0 0.0
  %3942 = vmatpush1.msra.mxu0 0.0
  %3943 = vmatprep.subr.mxu0 0.0
  %3944 = vmatpush1.msra.mxu0 0.0
  %3945 = vmatprep.subr.mxu0 0.0
  %3946 = vmatpush1.msra.mxu0 0.0
  %3947 = vmatprep.subr.mxu0 0.0
  %3948 = vmatpush1.msra.mxu0 0.0
  %3949 = vmatprep.subr.mxu0 0.0
  %3950 = vmatpush1.msra.mxu0 0.0
  %3951 = vmatprep.subr.mxu0 0.0
  %3952 = vmatpush1.msra.mxu0 0.0
  %3953 = vmatprep.subr.mxu0 0.0
  %3954 = vmatpush1.msra.mxu0 0.0
  %3955 = vmatprep.subr.mxu0 0.0
  %3956 = vmatpush1.msra.mxu0 0.0
  %3957 = vmatprep.subr.mxu0 0.0
  %3958 = vmatpush1.msra.mxu0 0.0
  %3959 = vmatprep.subr.mxu0 0.0
  %3960 = vmatpush1.msra.mxu0 0.0
  %3961 = vmatprep.subr.mxu0 0.0
  %3962 = vmatpush1.msra.mxu0 0.0
  %3963 = vmatprep.subr.mxu0 0.0
  %3964 = vmatpush1.msra.mxu0 0.0
  %3965 = vmatprep.subr.mxu0 0.0
  %3966 = vmatpush1.msra.mxu0 0.0
  %3967 = vmatprep.subr.mxu0 0.0
  %3968 = vmatpush1.msra.mxu0 0.0
  %3969 = vmatprep.subr.mxu0 0.0
  %3970 = vmatpush1.msra.mxu0 0.0
  %3971 = vmatprep.subr.mxu0 0.0
  %3972 = vmatpush1.msra.mxu0 0.0
  %3973 = vmatprep.subr.mxu0 0.0
  %3974 = vmatpush1.msra.mxu0 0.0
  %3975 = vmatprep.subr.mxu0 0.0
  %3976 = vmatpush1.msra.mxu0 0.0
  %3977 = vmatprep.subr.mxu0 0.0
  %3978 = vmatpush1.msra.mxu0 0.0
  %3979 = vmatprep.subr.mxu0 0.0
  %3980 = vmatpush1.msra.mxu0 0.0
  %3981 = vmatprep.subr.mxu0 0.0
  %3982 = vmatpush1.msra.mxu0 0.0
  %3983 = vmatprep.subr.mxu0 0.0
  %3984 = vmatpush1.msra.mxu0 0.0
  %3985 = vmatprep.subr.mxu0 0.0
  %3986 = vmatpush1.msra.mxu0 0.0
  %3987 = vmatprep.subr.mxu0 0.0
  %3988 = vmatpush1.msra.mxu0 0.0
  %3989 = vmatprep.subr.mxu0 0.0
  %3990 = vmatpush1.msra.mxu0 0.0
  %3991 = vmatprep.subr.mxu0 0.0
  %3992 = vmatpush1.msra.mxu0 0.0
  %3993 = vmatprep.subr.mxu0 0.0
  %3994 = vmatpush1.msra.mxu0 0.0
  %3995 = vmatprep.subr.mxu0 0.0
  %3996 = vmatpush1.msra.mxu0 0.0
  %3997 = vmatprep.subr.mxu0 0.0
  %3998 = vmatpush1.msra.mxu0 0.0
  %3999 = vmatprep.mubr.f32.mxu0 0.0
  %4000 = vmatmul.mubr.f32.gmra.mrb[0].mxu0 %v3933
  %v4001 = vpop.f32.mrb[0].mxu0
  %v4002 = vadd.f32 0.0, %v4001
  %v4003 = vpop.f32.mrb[0].mxu0
  %4004 = vdwg.mxu0
  %v4006 = vsel %vm342, %v3757, 0
  %4008 = vmatprep.subr.mxu0 0.0
  %4009 = vmatpush1.msra.mxu0 %v2615
  %4010 = vmatprep.subr.mxu0 0.0
  %4011 = vmatpush1.msra.mxu0 0.0
  %4012 = vmatprep.subr.mxu0 0.0
  %4013 = vmatpush1.msra.mxu0 0.0
  %4014 = vmatprep.subr.mxu0 0.0
  %4015 = vmatpush1.msra.mxu0 0.0
  %4016 = vmatprep.subr.mxu0 0.0
  %4017 = vmatpush1.msra.mxu0 0.0
  %4018 = vmatprep.subr.mxu0 0.0
  %4019 = vmatpush1.msra.mxu0 0.0
  %4020 = vmatprep.subr.mxu0 0.0
  %4021 = vmatpush1.msra.mxu0 0.0
  %4022 = vmatprep.subr.mxu0 0.0
  %4023 = vmatpush1.msra.mxu0 0.0
  %4024 = vmatprep.subr.mxu0 0.0
  %4025 = vmatpush1.msra.mxu0 0.0
  %4026 = vmatprep.subr.mxu0 0.0
  %4027 = vmatpush1.msra.mxu0 0.0
  %4028 = vmatprep.subr.mxu0 0.0
  %4029 = vmatpush1.msra.mxu0 0.0
  %4030 = vmatprep.subr.mxu0 0.0
  %4031 = vmatpush1.msra.mxu0 0.0
  %4032 = vmatprep.subr.mxu0 0.0
  %4033 = vmatpush1.msra.mxu0 0.0
  %4034 = vmatprep.subr.mxu0 0.0
  %4035 = vmatpush1.msra.mxu0 0.0
  %4036 = vmatprep.subr.mxu0 0.0
  %4037 = vmatpush1.msra.mxu0 0.0
  %4038 = vmatprep.subr.mxu0 0.0
  %4039 = vmatpush1.msra.mxu0 0.0
  %4040 = vmatprep.subr.mxu0 0.0
  %4041 = vmatpush1.msra.mxu0 0.0
  %4042 = vmatprep.subr.mxu0 0.0
  %4043 = vmatpush1.msra.mxu0 0.0
  %4044 = vmatprep.subr.mxu0 0.0
  %4045 = vmatpush1.msra.mxu0 0.0
  %4046 = vmatprep.subr.mxu0 0.0
  %4047 = vmatpush1.msra.mxu0 0.0
  %4048 = vmatprep.subr.mxu0 0.0
  %4049 = vmatpush1.msra.mxu0 0.0
  %4050 = vmatprep.subr.mxu0 0.0
  %4051 = vmatpush1.msra.mxu0 0.0
  %4052 = vmatprep.subr.mxu0 0.0
  %4053 = vmatpush1.msra.mxu0 0.0
  %4054 = vmatprep.subr.mxu0 0.0
  %4055 = vmatpush1.msra.mxu0 0.0
  %4056 = vmatprep.subr.mxu0 0.0
  %4057 = vmatpush1.msra.mxu0 0.0
  %4058 = vmatprep.subr.mxu0 0.0
  %4059 = vmatpush1.msra.mxu0 0.0
  %4060 = vmatprep.subr.mxu0 0.0
  %4061 = vmatpush1.msra.mxu0 0.0
  %4062 = vmatprep.subr.mxu0 0.0
  %4063 = vmatpush1.msra.mxu0 0.0
  %4064 = vmatprep.subr.mxu0 0.0
  %4065 = vmatpush1.msra.mxu0 0.0
  %4066 = vmatprep.subr.mxu0 0.0
  %4067 = vmatpush1.msra.mxu0 0.0
  %4068 = vmatprep.subr.mxu0 0.0
  %4069 = vmatpush1.msra.mxu0 0.0
  %4070 = vmatprep.subr.mxu0 0.0
  %4071 = vmatpush1.msra.mxu0 0.0
  %4072 = vmatprep.mubr.f32.mxu0 0.0
  %4073 = vmatmul.mubr.f32.gmra.mrb[0].mxu0 %v4006
  %v4074 = vpop.f32.mrb[0].mxu0
  %v4075 = vadd.f32 %v4002, %v4074
  %v4076 = vpop.f32.mrb[0].mxu0
  %4077 = vdwg.mxu0
  %4078 = vrot.lane.b32.xlu0 %v2394, 112
  %v4079 = vpop.permute.xlu0 %4078
  %4080 = vrot.lane.b32.xlu0 %v2499, 112
  %v4081 = vpop.permute.xlu0 %4080
  %4082 = vrot.lane.b32.xlu0 %v2504, 112
  %v4083 = vpop.permute.xlu0 %4082
  %v4084 = vsel %vm342, %v4079, 0
  %v4086 = vsel %vm342, %v4081, 0
  %v4088 = vsel %vm342, %v4083, 0
  %4090 = vmatprep.subr.mxu0 0.0
  %4091 = vmatpush1.xpose.msra.mxu0 %v4086
  %4092 = vmatprep.subr.mxu0 0.0
  %4093 = vmatpush1.xpose.msra.mxu0 %v4088
  %4094 = vmatprep.subr.mxu0 0.0
  %4095 = vmatpush1.xpose.msra.mxu0 0.0
  %4096 = vmatprep.subr.mxu0 0.0
  %4097 = vmatpush1.xpose.msra.mxu0 0.0
  %4098 = vmatprep.subr.mxu0 0.0
  %4099 = vmatpush1.xpose.msra.mxu0 0.0
  %4100 = vmatprep.subr.mxu0 0.0
  %4101 = vmatpush1.xpose.msra.mxu0 0.0
  %4102 = vmatprep.subr.mxu0 0.0
  %4103 = vmatpush1.xpose.msra.mxu0 0.0
  %4104 = vmatprep.subr.mxu0 0.0
  %4105 = vmatpush1.xpose.msra.mxu0 0.0
  %4106 = vmatprep.subr.mxu0 0.0
  %4107 = vmatpush1.xpose.msra.mxu0 0.0
  %4108 = vmatprep.subr.mxu0 0.0
  %4109 = vmatpush1.xpose.msra.mxu0 0.0
  %4110 = vmatprep.subr.mxu0 0.0
  %4111 = vmatpush1.xpose.msra.mxu0 0.0
  %4112 = vmatprep.subr.mxu0 0.0
  %4113 = vmatpush1.xpose.msra.mxu0 0.0
  %4114 = vmatprep.subr.mxu0 0.0
  %4115 = vmatpush1.xpose.msra.mxu0 0.0
  %4116 = vmatprep.subr.mxu0 0.0
  %4117 = vmatpush1.xpose.msra.mxu0 0.0
  %4118 = vmatprep.subr.mxu0 0.0
  %4119 = vmatpush1.xpose.msra.mxu0 0.0
  %4120 = vmatprep.subr.mxu0 0.0
  %4121 = vmatpush1.xpose.msra.mxu0 0.0
  %4122 = vmatprep.subr.mxu0 0.0
  %4123 = vmatpush1.xpose.msra.mxu0 0.0
  %4124 = vmatprep.subr.mxu0 0.0
  %4125 = vmatpush1.xpose.msra.mxu0 0.0
  %4126 = vmatprep.subr.mxu0 0.0
  %4127 = vmatpush1.xpose.msra.mxu0 0.0
  %4128 = vmatprep.subr.mxu0 0.0
  %4129 = vmatpush1.xpose.msra.mxu0 0.0
  %4130 = vmatprep.subr.mxu0 0.0
  %4131 = vmatpush1.xpose.msra.mxu0 0.0
  %4132 = vmatprep.subr.mxu0 0.0
  %4133 = vmatpush1.xpose.msra.mxu0 0.0
  %4134 = vmatprep.subr.mxu0 0.0
  %4135 = vmatpush1.xpose.msra.mxu0 0.0
  %4136 = vmatprep.subr.mxu0 0.0
  %4137 = vmatpush1.xpose.msra.mxu0 0.0
  %4138 = vmatprep.subr.mxu0 0.0
  %4139 = vmatpush1.xpose.msra.mxu0 0.0
  %4140 = vmatprep.subr.mxu0 0.0
  %4141 = vmatpush1.xpose.msra.mxu0 0.0
  %4142 = vmatprep.subr.mxu0 0.0
  %4143 = vmatpush1.xpose.msra.mxu0 0.0
  %4144 = vmatprep.subr.mxu0 0.0
  %4145 = vmatpush1.xpose.msra.mxu0 0.0
  %4146 = vmatprep.subr.mxu0 0.0
  %4147 = vmatpush1.xpose.msra.mxu0 0.0
  %4148 = vmatprep.subr.mxu0 0.0
  %4149 = vmatpush1.xpose.msra.mxu0 0.0
  %4150 = vmatprep.subr.mxu0 0.0
  %4151 = vmatpush1.xpose.msra.mxu0 0.0
  %4152 = vmatprep.subr.mxu0 0.0
  %4153 = vmatpush1.xpose.msra.mxu0 0.0
  %4154 = vmatprep.mubr.f32.mxu0 0.0
  %4155 = vmatmul.mubr.f32.gmra.mrb[0].mxu0 %v4084
  %v4156 = vpop.f32.mrb[0].mxu0
  %v4157 = vadd.f32 0.0, %v4156
  %v4158 = vpop.f32.mrb[0].mxu0
  %4159 = vdwg.mxu0
  %v4160 = vsel %vm2698, %v4157, -inf
  %4161 = vmax.xlane.f32.xlu0 %v4160
  %v4162 = vpop.xlane.xlu0 %4161
  %v4163 = vsub.f32 %v4157, %v4162
  %v4164 = vmul.f32 %v4163, 1.442695
  %v4165 = vpow.pop %v4164
  %v4166 = vsel %vm2698, %v4165, 0.0
  %4167 = vadd.xlane.f32.xlu0 %v4166
  %v4168 = vpop.xlane.xlu0 %4167
  %4169 = vrot.lane.b32.xlu0 %v2607, 112
  %v4170 = vpop.permute.xlu0 %4169
  %4171 = vrot.lane.b32.xlu0 %v2612, 112
  %v4172 = vpop.permute.xlu0 %4171
  %v4176 = vsel %vm2698, %v4165, 0
  %4178 = vmatprep.subr.mxu0 0.0
  %4179 = vmatpush1.msra.mxu0 %v4170
  %4180 = vmatprep.subr.mxu0 0.0
  %4181 = vmatpush1.msra.mxu0 %v4172
  %4182 = vmatprep.subr.mxu0 0.0
  %4183 = vmatpush1.msra.mxu0 0.0
  %4184 = vmatprep.subr.mxu0 0.0
  %4185 = vmatpush1.msra.mxu0 0.0
  %4186 = vmatprep.subr.mxu0 0.0
  %4187 = vmatpush1.msra.mxu0 0.0
  %4188 = vmatprep.subr.mxu0 0.0
  %4189 = vmatpush1.msra.mxu0 0.0
  %4190 = vmatprep.subr.mxu0 0.0
  %4191 = vmatpush1.msra.mxu0 0.0
  %4192 = vmatprep.subr.mxu0 0.0
  %4193 = vmatpush1.msra.mxu0 0.0
  %4194 = vmatprep.subr.mxu0 0.0
  %4195 = vmatpush1.msra.mxu0 0.0
  %4196 = vmatprep.subr.mxu0 0.0
  %4197 = vmatpush1.msra.mxu0 0.0
  %4198 = vmatprep.subr.mxu0 0.0
  %4199 = vmatpush1.msra.mxu0 0.0
  %4200 = vmatprep.subr.mxu0 0.0
  %4201 = vmatpush1.msra.mxu0 0.0
  %4202 = vmatprep.subr.mxu0 0.0
  %4203 = vmatpush1.msra.mxu0 0.0
  %4204 = vmatprep.subr.mxu0 0.0
  %4205 = vmatpush1.msra.mxu0 0.0
  %4206 = vmatprep.subr.mxu0 0.0
  %4207 = vmatpush1.msra.mxu0 0.0
  %4208 = vmatprep.subr.mxu0 0.0
  %4209 = vmatpush1.msra.mxu0 0.0
  %4210 = vmatprep.subr.mxu0 0.0
  %4211 = vmatpush1.msra.mxu0 0.0
  %4212 = vmatprep.subr.mxu0 0.0
  %4213 = vmatpush1.msra.mxu0 0.0
  %4214 = vmatprep.subr.mxu0 0.0
  %4215 = vmatpush1.msra.mxu0 0.0
  %4216 = vmatprep.subr.mxu0 0.0
  %4217 = vmatpush1.msra.mxu0 0.0
  %4218 = vmatprep.subr.mxu0 0.0
  %4219 = vmatpush1.msra.mxu0 0.0
  %4220 = vmatprep.subr.mxu0 0.0
  %4221 = vmatpush1.msra.mxu0 0.0
  %4222 = vmatprep.subr.mxu0 0.0
  %4223 = vmatpush1.msra.mxu0 0.0
  %4224 = vmatprep.subr.mxu0 0.0
  %4225 = vmatpush1.msra.mxu0 0.0
  %4226 = vmatprep.subr.mxu0 0.0
  %4227 = vmatpush1.msra.mxu0 0.0
  %4228 = vmatprep.subr.mxu0 0.0
  %4229 = vmatpush1.msra.mxu0 0.0
  %4230 = vmatprep.subr.mxu0 0.0
  %4231 = vmatpush1.msra.mxu0 0.0
  %4232 = vmatprep.subr.mxu0 0.0
  %4233 = vmatpush1.msra.mxu0 0.0
  %4234 = vmatprep.subr.mxu0 0.0
  %4235 = vmatpush1.msra.mxu0 0.0
  %4236 = vmatprep.subr.mxu0 0.0
  %4237 = vmatpush1.msra.mxu0 0.0
  %4238 = vmatprep.subr.mxu0 0.0
  %4239 = vmatpush1.msra.mxu0 0.0
  %4240 = vmatprep.subr.mxu0 0.0
  %4241 = vmatpush1.msra.mxu0 0.0
  %4242 = vmatprep.mubr.f32.mxu0 0.0
  %4243 = vmatmul.mubr.f32.gmra.mrb[0].mxu0 %v4176
  %v4244 = vpop.f32.mrb[0].mxu0
  %v4245 = vadd.f32 0.0, %v4244
  %v4246 = vpop.f32.mrb[0].mxu0
  %4247 = vdwg.mxu0
  %v4248 = vrcp.pop %v4168
  %v4249 = vmul.f32 %v4245, %v4248
  %v4251 = vsel %vm342, %v4249, 0
  %4253 = vmatprep.subr.mxu0 0.0
  %4254 = vmatpush1.msra.mxu0 %v2617
  %4255 = vmatprep.subr.mxu0 0.0
  %4256 = vmatpush1.msra.mxu0 0.0
  %4257 = vmatprep.subr.mxu0 0.0
  %4258 = vmatpush1.msra.mxu0 0.0
  %4259 = vmatprep.subr.mxu0 0.0
  %4260 = vmatpush1.msra.mxu0 0.0
  %4261 = vmatprep.subr.mxu0 0.0
  %4262 = vmatpush1.msra.mxu0 0.0
  %4263 = vmatprep.subr.mxu0 0.0
  %4264 = vmatpush1.msra.mxu0 0.0
  %4265 = vmatprep.subr.mxu0 0.0
  %4266 = vmatpush1.msra.mxu0 0.0
  %4267 = vmatprep.subr.mxu0 0.0
  %4268 = vmatpush1.msra.mxu0 0.0
  %4269 = vmatprep.subr.mxu0 0.0
  %4270 = vmatpush1.msra.mxu0 0.0
  %4271 = vmatprep.subr.mxu0 0.0
  %4272 = vmatpush1.msra.mxu0 0.0
  %4273 = vmatprep.subr.mxu0 0.0
  %4274 = vmatpush1.msra.mxu0 0.0
  %4275 = vmatprep.subr.mxu0 0.0
  %4276 = vmatpush1.msra.mxu0 0.0
  %4277 = vmatprep.subr.mxu0 0.0
  %4278 = vmatpush1.msra.mxu0 0.0
  %4279 = vmatprep.subr.mxu0 0.0
  %4280 = vmatpush1.msra.mxu0 0.0
  %4281 = vmatprep.subr.mxu0 0.0
  %4282 = vmatpush1.msra.mxu0 0.0
  %4283 = vmatprep.subr.mxu0 0.0
  %4284 = vmatpush1.msra.mxu0 0.0
  %4285 = vmatprep.subr.mxu0 0.0
  %4286 = vmatpush1.msra.mxu0 0.0
  %4287 = vmatprep.subr.mxu0 0.0
  %4288 = vmatpush1.msra.mxu0 0.0
  %4289 = vmatprep.subr.mxu0 0.0
  %4290 = vmatpush1.msra.mxu0 0.0
  %4291 = vmatprep.subr.mxu0 0.0
  %4292 = vmatpush1.msra.mxu0 0.0
  %4293 = vmatprep.subr.mxu0 0.0
  %4294 = vmatpush1.msra.mxu0 0.0
  %4295 = vmatprep.subr.mxu0 0.0
  %4296 = vmatpush1.msra.mxu0 0.0
  %4297 = vmatprep.subr.mxu0 0.0
  %4298 = vmatpush1.msra.mxu0 0.0
  %4299 = vmatprep.subr.mxu0 0.0
  %4300 = vmatpush1.msra.mxu0 0.0
  %4301 = vmatprep.subr.mxu0 0.0
  %4302 = vmatpush1.msra.mxu0 0.0
  %4303 = vmatprep.subr.mxu0 0.0
  %4304 = vmatpush1.msra.mxu0 0.0
  %4305 = vmatprep.subr.mxu0 0.0
  %4306 = vmatpush1.msra.mxu0 0.0
  %4307 = vmatprep.subr.mxu0 0.0
  %4308 = vmatpush1.msra.mxu0 0.0
  %4309 = vmatprep.subr.mxu0 0.0
  %4310 = vmatpush1.msra.mxu0 0.0
  %4311 = vmatprep.subr.mxu0 0.0
  %4312 = vmatpush1.msra.mxu0 0.0
  %4313 = vmatprep.subr.mxu0 0.0
  %4314 = vmatpush1.msra.mxu0 0.0
  %4315 = vmatprep.subr.mxu0 0.0
  %4316 = vmatpush1.msra.mxu0 0.0
  %4317 = vmatprep.mubr.f32.mxu0 0.0
  %4318 = vmatmul.mubr.f32.gmra.mrb[0].mxu0 %v4251
  %v4319 = vpop.f32.mrb[0].mxu0
  %v4320 = vadd.f32 0.0, %v4319
  %v4321 = vpop.f32.mrb[0].mxu0
  %4322 = vdwg.mxu0
  %v4323 = vadd.f32 %v4075, %v4320
  %4324 = vrot.lane.b32.xlu0 %v2394, 104
  %v4325 = vpop.permute.xlu0 %4324
  %4326 = vrot.lane.b32.xlu0 %v2499, 104
  %v4327 = vpop.permute.xlu0 %4326
  %4328 = vrot.lane.b32.xlu0 %v2504, 104
  %v4329 = vpop.permute.xlu0 %4328
  %v4330 = vsel %vm342, %v4325, 0
  %v4332 = vsel %vm342, %v4327, 0
  %v4334 = vsel %vm342, %v4329, 0
  %4336 = vmatprep.subr.mxu0 0.0
  %4337 = vmatpush1.xpose.msra.mxu0 %v4332
  %4338 = vmatprep.subr.mxu0 0.0
  %4339 = vmatpush1.xpose.msra.mxu0 %v4334
  %4340 = vmatprep.subr.mxu0 0.0
  %4341 = vmatpush1.xpose.msra.mxu0 0.0
  %4342 = vmatprep.subr.mxu0 0.0
  %4343 = vmatpush1.xpose.msra.mxu0 0.0
  %4344 = vmatprep.subr.mxu0 0.0
  %4345 = vmatpush1.xpose.msra.mxu0 0.0
  %4346 = vmatprep.subr.mxu0 0.0
  %4347 = vmatpush1.xpose.msra.mxu0 0.0
  %4348 = vmatprep.subr.mxu0 0.0
  %4349 = vmatpush1.xpose.msra.mxu0 0.0
  %4350 = vmatprep.subr.mxu0 0.0
  %4351 = vmatpush1.xpose.msra.mxu0 0.0
  %4352 = vmatprep.subr.mxu0 0.0
  %4353 = vmatpush1.xpose.msra.mxu0 0.0
  %4354 = vmatprep.subr.mxu0 0.0
  %4355 = vmatpush1.xpose.msra.mxu0 0.0
  %4356 = vmatprep.subr.mxu0 0.0
  %4357 = vmatpush1.xpose.msra.mxu0 0.0
  %4358 = vmatprep.subr.mxu0 0.0
  %4359 = vmatpush1.xpose.msra.mxu0 0.0
  %4360 = vmatprep.subr.mxu0 0.0
  %4361 = vmatpush1.xpose.msra.mxu0 0.0
  %4362 = vmatprep.subr.mxu0 0.0
  %4363 = vmatpush1.xpose.msra.mxu0 0.0
  %4364 = vmatprep.subr.mxu0 0.0
  %4365 = vmatpush1.xpose.msra.mxu0 0.0
  %4366 = vmatprep.subr.mxu0 0.0
  %4367 = vmatpush1.xpose.msra.mxu0 0.0
  %4368 = vmatprep.subr.mxu0 0.0
  %4369 = vmatpush1.xpose.msra.mxu0 0.0
  %4370 = vmatprep.subr.mxu0 0.0
  %4371 = vmatpush1.xpose.msra.mxu0 0.0
  %4372 = vmatprep.subr.mxu0 0.0
  %4373 = vmatpush1.xpose.msra.mxu0 0.0
  %4374 = vmatprep.subr.mxu0 0.0
  %4375 = vmatpush1.xpose.msra.mxu0 0.0
  %4376 = vmatprep.subr.mxu0 0.0
  %4377 = vmatpush1.xpose.msra.mxu0 0.0
  %4378 = vmatprep.subr.mxu0 0.0
  %4379 = vmatpush1.xpose.msra.mxu0 0.0
  %4380 = vmatprep.subr.mxu0 0.0
  %4381 = vmatpush1.xpose.msra.mxu0 0.0
  %4382 = vmatprep.subr.mxu0 0.0
  %4383 = vmatpush1.xpose.msra.mxu0 0.0
  %4384 = vmatprep.subr.mxu0 0.0
  %4385 = vmatpush1.xpose.msra.mxu0 0.0
  %4386 = vmatprep.subr.mxu0 0.0
  %4387 = vmatpush1.xpose.msra.mxu0 0.0
  %4388 = vmatprep.subr.mxu0 0.0
  %4389 = vmatpush1.xpose.msra.mxu0 0.0
  %4390 = vmatprep.subr.mxu0 0.0
  %4391 = vmatpush1.xpose.msra.mxu0 0.0
  %4392 = vmatprep.subr.mxu0 0.0
  %4393 = vmatpush1.xpose.msra.mxu0 0.0
  %4394 = vmatprep.subr.mxu0 0.0
  %4395 = vmatpush1.xpose.msra.mxu0 0.0
  %4396 = vmatprep.subr.mxu0 0.0
  %4397 = vmatpush1.xpose.msra.mxu0 0.0
  %4398 = vmatprep.subr.mxu0 0.0
  %4399 = vmatpush1.xpose.msra.mxu0 0.0
  %4400 = vmatprep.mubr.f32.mxu0 0.0
  %4401 = vmatmul.mubr.f32.gmra.mrb[0].mxu0 %v4330
  %v4402 = vpop.f32.mrb[0].mxu0
  %v4403 = vadd.f32 0.0, %v4402
  %v4404 = vpop.f32.mrb[0].mxu0
  %4405 = vdwg.mxu0
  %v4406 = vsel %vm2698, %v4403, -inf
  %4407 = vmax.xlane.f32.xlu0 %v4406
  %v4408 = vpop.xlane.xlu0 %4407
  %v4409 = vsub.f32 %v4403, %v4408
  %v4410 = vmul.f32 %v4409, 1.442695
  %v4411 = vpow.pop %v4410
  %v4412 = vsel %vm2698, %v4411, 0.0
  %4413 = vadd.xlane.f32.xlu0 %v4412
  %v4414 = vpop.xlane.xlu0 %4413
  %4415 = vrot.lane.b32.xlu0 %v2607, 104
  %v4416 = vpop.permute.xlu0 %4415
  %4417 = vrot.lane.b32.xlu0 %v2612, 104
  %v4418 = vpop.permute.xlu0 %4417
  %v4422 = vsel %vm2698, %v4411, 0
  %4424 = vmatprep.subr.mxu0 0.0
  %4425 = vmatpush1.msra.mxu0 %v4416
  %4426 = vmatprep.subr.mxu0 0.0
  %4427 = vmatpush1.msra.mxu0 %v4418
  %4428 = vmatprep.subr.mxu0 0.0
  %4429 = vmatpush1.msra.mxu0 0.0
  %4430 = vmatprep.subr.mxu0 0.0
  %4431 = vmatpush1.msra.mxu0 0.0
  %4432 = vmatprep.subr.mxu0 0.0
  %4433 = vmatpush1.msra.mxu0 0.0
  %4434 = vmatprep.subr.mxu0 0.0
  %4435 = vmatpush1.msra.mxu0 0.0
  %4436 = vmatprep.subr.mxu0 0.0
  %4437 = vmatpush1.msra.mxu0 0.0
  %4438 = vmatprep.subr.mxu0 0.0
  %4439 = vmatpush1.msra.mxu0 0.0
  %4440 = vmatprep.subr.mxu0 0.0
  %4441 = vmatpush1.msra.mxu0 0.0
  %4442 = vmatprep.subr.mxu0 0.0
  %4443 = vmatpush1.msra.mxu0 0.0
  %4444 = vmatprep.subr.mxu0 0.0
  %4445 = vmatpush1.msra.mxu0 0.0
  %4446 = vmatprep.subr.mxu0 0.0
  %4447 = vmatpush1.msra.mxu0 0.0
  %4448 = vmatprep.subr.mxu0 0.0
  %4449 = vmatpush1.msra.mxu0 0.0
  %4450 = vmatprep.subr.mxu0 0.0
  %4451 = vmatpush1.msra.mxu0 0.0
  %4452 = vmatprep.subr.mxu0 0.0
  %4453 = vmatpush1.msra.mxu0 0.0
  %4454 = vmatprep.subr.mxu0 0.0
  %4455 = vmatpush1.msra.mxu0 0.0
  %4456 = vmatprep.subr.mxu0 0.0
  %4457 = vmatpush1.msra.mxu0 0.0
  %4458 = vmatprep.subr.mxu0 0.0
  %4459 = vmatpush1.msra.mxu0 0.0
  %4460 = vmatprep.subr.mxu0 0.0
  %4461 = vmatpush1.msra.mxu0 0.0
  %4462 = vmatprep.subr.mxu0 0.0
  %4463 = vmatpush1.msra.mxu0 0.0
  %4464 = vmatprep.subr.mxu0 0.0
  %4465 = vmatpush1.msra.mxu0 0.0
  %4466 = vmatprep.subr.mxu0 0.0
  %4467 = vmatpush1.msra.mxu0 0.0
  %4468 = vmatprep.subr.mxu0 0.0
  %4469 = vmatpush1.msra.mxu0 0.0
  %4470 = vmatprep.subr.mxu0 0.0
  %4471 = vmatpush1.msra.mxu0 0.0
  %4472 = vmatprep.subr.mxu0 0.0
  %4473 = vmatpush1.msra.mxu0 0.0
  %4474 = vmatprep.subr.mxu0 0.0
  %4475 = vmatpush1.msra.mxu0 0.0
  %4476 = vmatprep.subr.mxu0 0.0
  %4477 = vmatpush1.msra.mxu0 0.0
  %4478 = vmatprep.subr.mxu0 0.0
  %4479 = vmatpush1.msra.mxu0 0.0
  %4480 = vmatprep.subr.mxu0 0.0
  %4481 = vmatpush1.msra.mxu0 0.0
  %4482 = vmatprep.subr.mxu0 0.0
  %4483 = vmatpush1.msra.mxu0 0.0
  %4484 = vmatprep.subr.mxu0 0.0
  %4485 = vmatpush1.msra.mxu0 0.0
  %4486 = vmatprep.subr.mxu0 0.0
  %4487 = vmatpush1.msra.mxu0 0.0
  %4488 = vmatprep.mubr.f32.mxu0 0.0
  %4489 = vmatmul.mubr.f32.gmra.mrb[0].mxu0 %v4422
  %v4490 = vpop.f32.mrb[0].mxu0
  %v4491 = vadd.f32 0.0, %v4490
  %v4492 = vpop.f32.mrb[0].mxu0
  %4493 = vdwg.mxu0
  %v4494 = vrcp.pop %v4414
  %v4495 = vmul.f32 %v4491, %v4494
  %v4497 = vsel %vm342, %v4495, 0
  %4499 = vmatprep.subr.mxu0 0.0
  %4500 = vmatpush1.msra.mxu0 %v2618
  %4501 = vmatprep.subr.mxu0 0.0
  %4502 = vmatpush1.msra.mxu0 0.0
  %4503 = vmatprep.subr.mxu0 0.0
  %4504 = vmatpush1.msra.mxu0 0.0
  %4505 = vmatprep.subr.mxu0 0.0
  %4506 = vmatpush1.msra.mxu0 0.0
  %4507 = vmatprep.subr.mxu0 0.0
  %4508 = vmatpush1.msra.mxu0 0.0
  %4509 = vmatprep.subr.mxu0 0.0
  %4510 = vmatpush1.msra.mxu0 0.0
  %4511 = vmatprep.subr.mxu0 0.0
  %4512 = vmatpush1.msra.mxu0 0.0
  %4513 = vmatprep.subr.mxu0 0.0
  %4514 = vmatpush1.msra.mxu0 0.0
  %4515 = vmatprep.subr.mxu0 0.0
  %4516 = vmatpush1.msra.mxu0 0.0
  %4517 = vmatprep.subr.mxu0 0.0
  %4518 = vmatpush1.msra.mxu0 0.0
  %4519 = vmatprep.subr.mxu0 0.0
  %4520 = vmatpush1.msra.mxu0 0.0
  %4521 = vmatprep.subr.mxu0 0.0
  %4522 = vmatpush1.msra.mxu0 0.0
  %4523 = vmatprep.subr.mxu0 0.0
  %4524 = vmatpush1.msra.mxu0 0.0
  %4525 = vmatprep.subr.mxu0 0.0
  %4526 = vmatpush1.msra.mxu0 0.0
  %4527 = vmatprep.subr.mxu0 0.0
  %4528 = vmatpush1.msra.mxu0 0.0
  %4529 = vmatprep.subr.mxu0 0.0
  %4530 = vmatpush1.msra.mxu0 0.0
  %4531 = vmatprep.subr.mxu0 0.0
  %4532 = vmatpush1.msra.mxu0 0.0
  %4533 = vmatprep.subr.mxu0 0.0
  %4534 = vmatpush1.msra.mxu0 0.0
  %4535 = vmatprep.subr.mxu0 0.0
  %4536 = vmatpush1.msra.mxu0 0.0
  %4537 = vmatprep.subr.mxu0 0.0
  %4538 = vmatpush1.msra.mxu0 0.0
  %4539 = vmatprep.subr.mxu0 0.0
  %4540 = vmatpush1.msra.mxu0 0.0
  %4541 = vmatprep.subr.mxu0 0.0
  %4542 = vmatpush1.msra.mxu0 0.0
  %4543 = vmatprep.subr.mxu0 0.0
  %4544 = vmatpush1.msra.mxu0 0.0
  %4545 = vmatprep.subr.mxu0 0.0
  %4546 = vmatpush1.msra.mxu0 0.0
  %4547 = vmatprep.subr.mxu0 0.0
  %4548 = vmatpush1.msra.mxu0 0.0
  %4549 = vmatprep.subr.mxu0 0.0
  %4550 = vmatpush1.msra.mxu0 0.0
  %4551 = vmatprep.subr.mxu0 0.0
  %4552 = vmatpush1.msra.mxu0 0.0
  %4553 = vmatprep.subr.mxu0 0.0
  %4554 = vmatpush1.msra.mxu0 0.0
  %4555 = vmatprep.subr.mxu0 0.0
  %4556 = vmatpush1.msra.mxu0 0.0
  %4557 = vmatprep.subr.mxu0 0.0
  %4558 = vmatpush1.msra.mxu0 0.0
  %4559 = vmatprep.subr.mxu0 0.0
  %4560 = vmatpush1.msra.mxu0 0.0
  %4561 = vmatprep.subr.mxu0 0.0
  %4562 = vmatpush1.msra.mxu0 0.0
  %4563 = vmatprep.mubr.f32.mxu0 0.0
  %4564 = vmatmul.mubr.f32.gmra.mrb[0].mxu0 %v4497
  %v4565 = vpop.f32.mrb[0].mxu0
  %v4566 = vadd.f32 0.0, %v4565
  %v4567 = vpop.f32.mrb[0].mxu0
  %4568 = vdwg.mxu0
  %v4569 = vadd.f32 %v4323, %v4566
  %v4570 = vld [vmem:[%s23] sm:$0x1]
  %v4572 = vlaneseq
  %v4573 = vshrl.u32 %v4572, 7
  %v4574 = vsub.s32 0, %v4573
  %v4575 = vrot.slane %v4570, %v4574
  %v4577 = vadd.f32 %v3594, %v4575
  %v4578 = vadd.f32 %v4569, %v4575
  %v4579 = vadd.f32 %v2253, %v4577
  %v4580 = vadd.f32 %v2254, %v4578
  %v4581 = vsel %vm101, %v4579, 0.0
  %4582 = vadd.xlane.f32.xlu0 %v4581
  %v4583 = vpop.xlane.xlu0 %4582
  %v4584 = vsel %vm101, %v4580, 0.0
  %4585 = vadd.xlane.f32.xlu0 %v4584
  %v4586 = vpop.xlane.xlu0 %4585
  %v4587 = vmul.f32 %v4583, %v108
  %v4588 = vmul.f32 %v4586, %v108
  %v4589 = vsub.f32 %v4579, %v4587
  %v4590 = vsub.f32 %v4580, %v4588
  %v4591 = vmul.f32 %v4589, %v4589
  %v4592 = vmul.f32 %v4590, %v4590
  %v4593 = vsel %vm101, %v4591, 0.0
  %4594 = vadd.xlane.f32.xlu0 %v4593
  %v4595 = vpop.xlane.xlu0 %4594
  %v4596 = vsel %vm101, %v4592, 0.0
  %4597 = vadd.xlane.f32.xlu0 %v4596
  %v4598 = vpop.xlane.xlu0 %4597
  %v4599 = vmul.f32 %v4595, %v108
  %v4600 = vmul.f32 %v4598, %v108
  %v4601 = vadd.f32 %v4599, 1e-05
  %v4602 = vadd.f32 %v4600, 1e-05
  %v4603 = vrsqrt.pop %v4601
  %v4604 = vrsqrt.pop %v4602
  %v4605 = vmul.f32 %v4589, %v4603
  %v4606 = vmul.f32 %v4590, %v4604
  %v4607 = vld [vmem:[%s8] sm:$0x1]
  %v4609 = vlaneseq
  %v4610 = vshrl.u32 %v4609, 7
  %v4611 = vsub.s32 0, %v4610
  %v4612 = vrot.slane %v4607, %v4611
  %v4614 = vmul.f32 %v4605, %v4612
  %v4615 = vmul.f32 %v4606, %v4612
  %v4616 = vld [vmem:[%s9] sm:$0x1]
  %v4618 = vlaneseq
  %v4619 = vshrl.u32 %v4618, 7
  %v4620 = vsub.s32 0, %v4619
  %v4621 = vrot.slane %v4616, %v4620
  %v4623 = vadd.f32 %v4614, %v4621
  %v4624 = vadd.f32 %v4615, %v4621
  %v4625 = vld [vmem:[%s24] sm:$0xff]
  %v4626 = vld [vmem:[%s24 + $0x8] sm:$0xff]
  %v4627 = vld [vmem:[%s24 + $0x10] sm:$0xff]
  %v4628 = vld [vmem:[%s24 + $0x18] sm:$0xff]
  %v4629 = vld [vmem:[%s25] sm:$0x1]
  %v4631 = vlaneseq
  %v4632 = vshrl.u32 %v4631, 7
  %v4633 = vsub.s32 0, %v4632
  %v4634 = vrot.slane %v4629, %v4633
  %v4637 = vsel %vm101, %v4623, 0
  %v4640 = vsel %vm101, %v4624, 0
  %4642 = vmatprep.subr.mxu0 0.0
  %4643 = vmatpush1.msra.mxu0 %v4625
  %4644 = vmatprep.subr.mxu0 0.0
  %4645 = vmatpush1.msra.mxu0 %v4626
  %4646 = vmatprep.subr.mxu0 0.0
  %4647 = vmatpush1.msra.mxu0 %v4627
  %4648 = vmatprep.subr.mxu0 0.0
  %4649 = vmatpush1.msra.mxu0 %v4628
  %4650 = vmatprep.subr.mxu0 0.0
  %4651 = vmatpush1.msra.mxu0 0.0
  %4652 = vmatprep.subr.mxu0 0.0
  %4653 = vmatpush1.msra.mxu0 0.0
  %4654 = vmatprep.subr.mxu0 0.0
  %4655 = vmatpush1.msra.mxu0 0.0
  %4656 = vmatprep.subr.mxu0 0.0
  %4657 = vmatpush1.msra.mxu0 0.0
  %4658 = vmatprep.subr.mxu0 0.0
  %4659 = vmatpush1.msra.mxu0 0.0
  %4660 = vmatprep.subr.mxu0 0.0
  %4661 = vmatpush1.msra.mxu0 0.0
  %4662 = vmatprep.subr.mxu0 0.0
  %4663 = vmatpush1.msra.mxu0 0.0
  %4664 = vmatprep.subr.mxu0 0.0
  %4665 = vmatpush1.msra.mxu0 0.0
  %4666 = vmatprep.subr.mxu0 0.0
  %4667 = vmatpush1.msra.mxu0 0.0
  %4668 = vmatprep.subr.mxu0 0.0
  %4669 = vmatpush1.msra.mxu0 0.0
  %4670 = vmatprep.subr.mxu0 0.0
  %4671 = vmatpush1.msra.mxu0 0.0
  %4672 = vmatprep.subr.mxu0 0.0
  %4673 = vmatpush1.msra.mxu0 0.0
  %4674 = vmatprep.subr.mxu0 0.0
  %4675 = vmatpush1.msra.mxu0 0.0
  %4676 = vmatprep.subr.mxu0 0.0
  %4677 = vmatpush1.msra.mxu0 0.0
  %4678 = vmatprep.subr.mxu0 0.0
  %4679 = vmatpush1.msra.mxu0 0.0
  %4680 = vmatprep.subr.mxu0 0.0
  %4681 = vmatpush1.msra.mxu0 0.0
  %4682 = vmatprep.subr.mxu0 0.0
  %4683 = vmatpush1.msra.mxu0 0.0
  %4684 = vmatprep.subr.mxu0 0.0
  %4685 = vmatpush1.msra.mxu0 0.0
  %4686 = vmatprep.subr.mxu0 0.0
  %4687 = vmatpush1.msra.mxu0 0.0
  %4688 = vmatprep.subr.mxu0 0.0
  %4689 = vmatpush1.msra.mxu0 0.0
  %4690 = vmatprep.subr.mxu0 0.0
  %4691 = vmatpush1.msra.mxu0 0.0
  %4692 = vmatprep.subr.mxu0 0.0
  %4693 = vmatpush1.msra.mxu0 0.0
  %4694 = vmatprep.subr.mxu0 0.0
  %4695 = vmatpush1.msra.mxu0 0.0
  %4696 = vmatprep.subr.mxu0 0.0
  %4697 = vmatpush1.msra.mxu0 0.0
  %4698 = vmatprep.subr.mxu0 0.0
  %4699 = vmatpush1.msra.mxu0 0.0
  %4700 = vmatprep.subr.mxu0 0.0
  %4701 = vmatpush1.msra.mxu0 0.0
  %4702 = vmatprep.subr.mxu0 0.0
  %4703 = vmatpush1.msra.mxu0 0.0
  %4704 = vmatprep.subr.mxu0 0.0
  %4705 = vmatpush1.msra.mxu0 0.0
  %4706 = vmatprep.mubr.f32.mxu0 0.0
  %4707 = vmatmul.mubr.f32.gmra.mrb[0].mxu0 %v4637
  %v4708 = vpop.f32.mrb[0].mxu0
  %v4709 = vadd.f32 %v4634, %v4708
  %v4710 = vpop.f32.mrb[0].mxu0
  %4711 = vmatprep.mubr.f32.mxu0 0.0
  %4712 = vmatmul.mubr.f32.gmra.mrb[0].mxu0 %v4640
  %v4713 = vpop.f32.mrb[0].mxu0
  %v4714 = vadd.f32 %v4634, %v4713
  %v4715 = vpop.f32.mrb[0].mxu0
  %4716 = vdwg.mxu0
  %v4717 = vmul.f32 %v4709, 0.5
  %v4718 = vmul.f32 %v4714, 0.5
  %v4719 = vmul.f32 %v4709, 0.70710677
  %v4720 = vmul.f32 %v4714, 0.70710677
  %v4721 = verf.f32.pop %v4719
  %v4722 = verf.f32.pop %v4720
  %v4723 = vadd.f32 %v4721, 1.0
  %v4724 = vadd.f32 %v4722, 1.0
  %v4725 = vmul.f32 %v4717, %v4723
  %v4726 = vmul.f32 %v4718, %v4724
  %v4727 = vld [vmem:[%s26] sm:$0xff]
  %v4728 = vld [vmem:[%s26 + $0x8] sm:$0xff]
  %v4729 = vld [vmem:[%s26 + $0x10] sm:$0xff]
  %v4730 = vld [vmem:[%s26 + $0x18] sm:$0xff]
  %v4731 = vld [vmem:[%s26 + $0x20] sm:$0xff]
  %v4732 = vld [vmem:[%s26 + $0x28] sm:$0xff]
  %v4733 = vld [vmem:[%s26 + $0x30] sm:$0xff]
  %v4734 = vld [vmem:[%s26 + $0x38] sm:$0xff]
  %v4735 = vld [vmem:[%s26 + $0x40] sm:$0xff]
  %v4736 = vld [vmem:[%s26 + $0x48] sm:$0xff]
  %v4737 = vld [vmem:[%s26 + $0x50] sm:$0xff]
  %v4738 = vld [vmem:[%s26 + $0x58] sm:$0xff]
  %v4739 = vld [vmem:[%s26 + $0x60] sm:$0xff]
  %v4740 = vld [vmem:[%s26 + $0x68] sm:$0xff]
  %v4741 = vld [vmem:[%s26 + $0x70] sm:$0xff]
  %v4742 = vld [vmem:[%s26 + $0x78] sm:$0xff]
  %v4743 = vld [vmem:[%s27] sm:$0x1]
  %v4745 = vlaneseq
  %v4746 = vshrl.u32 %v4745, 7
  %v4747 = vsub.s32 0, %v4746
  %v4748 = vrot.slane %v4743, %v4747
  %4750 = vmatprep.subr.mxu0 0.0
  %4751 = vmatpush1.msra.mxu0 %v4727
  %4752 = vmatprep.subr.mxu0 0.0
  %4753 = vmatpush1.msra.mxu0 %v4728
  %4754 = vmatprep.subr.mxu0 0.0
  %4755 = vmatpush1.msra.mxu0 %v4729
  %4756 = vmatprep.subr.mxu0 0.0
  %4757 = vmatpush1.msra.mxu0 %v4730
  %4758 = vmatprep.subr.mxu0 0.0
  %4759 = vmatpush1.msra.mxu0 %v4731
  %4760 = vmatprep.subr.mxu0 0.0
  %4761 = vmatpush1.msra.mxu0 %v4732
  %4762 = vmatprep.subr.mxu0 0.0
  %4763 = vmatpush1.msra.mxu0 %v4733
  %4764 = vmatprep.subr.mxu0 0.0
  %4765 = vmatpush1.msra.mxu0 %v4734
  %4766 = vmatprep.subr.mxu0 0.0
  %4767 = vmatpush1.msra.mxu0 %v4735
  %4768 = vmatprep.subr.mxu0 0.0
  %4769 = vmatpush1.msra.mxu0 %v4736
  %4770 = vmatprep.subr.mxu0 0.0
  %4771 = vmatpush1.msra.mxu0 %v4737
  %4772 = vmatprep.subr.mxu0 0.0
  %4773 = vmatpush1.msra.mxu0 %v4738
  %4774 = vmatprep.subr.mxu0 0.0
  %4775 = vmatpush1.msra.mxu0 %v4739
  %4776 = vmatprep.subr.mxu0 0.0
  %4777 = vmatpush1.msra.mxu0 %v4740
  %4778 = vmatprep.subr.mxu0 0.0
  %4779 = vmatpush1.msra.mxu0 %v4741
  %4780 = vmatprep.subr.mxu0 0.0
  %4781 = vmatpush1.msra.mxu0 %v4742
  %4782 = vmatprep.subr.mxu0 0.0
  %4783 = vmatpush1.msra.mxu0 0.0
  %4784 = vmatprep.subr.mxu0 0.0
  %4785 = vmatpush1.msra.mxu0 0.0
  %4786 = vmatprep.subr.mxu0 0.0
  %4787 = vmatpush1.msra.mxu0 0.0
  %4788 = vmatprep.subr.mxu0 0.0
  %4789 = vmatpush1.msra.mxu0 0.0
  %4790 = vmatprep.subr.mxu0 0.0
  %4791 = vmatpush1.msra.mxu0 0.0
  %4792 = vmatprep.subr.mxu0 0.0
  %4793 = vmatpush1.msra.mxu0 0.0
  %4794 = vmatprep.subr.mxu0 0.0
  %4795 = vmatpush1.msra.mxu0 0.0
  %4796 = vmatprep.subr.mxu0 0.0
  %4797 = vmatpush1.msra.mxu0 0.0
  %4798 = vmatprep.subr.mxu0 0.0
  %4799 = vmatpush1.msra.mxu0 0.0
  %4800 = vmatprep.subr.mxu0 0.0
  %4801 = vmatpush1.msra.mxu0 0.0
  %4802 = vmatprep.subr.mxu0 0.0
  %4803 = vmatpush1.msra.mxu0 0.0
  %4804 = vmatprep.subr.mxu0 0.0
  %4805 = vmatpush1.msra.mxu0 0.0
  %4806 = vmatprep.subr.mxu0 0.0
  %4807 = vmatpush1.msra.mxu0 0.0
  %4808 = vmatprep.subr.mxu0 0.0
  %4809 = vmatpush1.msra.mxu0 0.0
  %4810 = vmatprep.subr.mxu0 0.0
  %4811 = vmatpush1.msra.mxu0 0.0
  %4812 = vmatprep.subr.mxu0 0.0
  %4813 = vmatpush1.msra.mxu0 0.0
  %4814 = vmatprep.mubr.f32.mxu0 0.0
  %4815 = vmatmul.mubr.f32.gmra.mrb[0].mxu0 %v4725
  %v4816 = vpop.f32.mrb[0].mxu0
  %v4817 = vadd.f32 %v4748, %v4816
  %v4818 = vpop.f32.mrb[0].mxu0
  %4819 = vmatprep.mubr.f32.mxu0 0.0
  %4820 = vmatmul.mubr.f32.gmra.mrb[0].mxu0 %v4726
  %v4821 = vpop.f32.mrb[0].mxu0
  %v4822 = vadd.f32 %v4748, %v4821
  %v4823 = vpop.f32.mrb[0].mxu0
  %4824 = vdwg.mxu0
  %v4825 = vadd.f32 %v4579, %v4817
  %v4826 = vadd.f32 %v4580, %v4822
  %4827 = vst.msk [vmem:[%s28] sm:$0xff] %vm101, %v4825
  %4828 = vst.msk [vmem:[%s28 + $0x8] sm:$0xff] %vm101, %v4826
  // Predicated region
  $region114: #{decoder_forward.1} parent=0 // pred_check
    _
  $region115: #{decoder_forward.1} parent=0 // pred_check_branch
    %4830 = sbr.rel (0) target = $region117
  $region116: #{decoder_forward.1} parent=0 // pred_region
    _
  $region117: #{decoder_forward.1} parent=0 // pred_fallthru
    _
  // Predicated region
  $region118: #{decoder_forward.1} parent=0 // pred_check
    _
  $region119: #{decoder_forward.1} parent=0 // pred_check_branch
    %4832 = sbr.rel (0) target = $region121
  $region120: #{decoder_forward.1} parent=0 // pred_region
    _
  $region121: #{decoder_forward.1} parent=0 // pred_fallthru
    _

</llo_original>
